<compile_context>
chip_gen: v7x
topology: tpu7x:2x2x1
jax: 0.10.0
libtpu: 0.0.40
codegen_flags: <defaults>
</compile_context>

<pallas_src>
import functools

import jax
import jax.numpy as jnp
import numpy as np
from jax.experimental import pallas as pl
from jax.experimental.pallas import tpu as pltpu


NUM_CLASSES = 6
NC_PAD = 128                 # head output padded to a full 128-lane store, sliced outside
C1, C2 = 128, 128            # synthetic backbone widths (lane-dense)
K1 = 10                      # conv1 contraction: 3x3 window (Cin=1) + bias indicator
_TAPS = [(ki, kj) for ki in range(3) for kj in range(3)]   # conv2 3x3 taps, row-major
VMEM_LIMIT = 32 * 1024 * 1024


# ----------------------------------------------------------------------------
# Fused Pallas kernel: conv1 + conv2 + avg-pool + linear head, per batch block
# ----------------------------------------------------------------------------
def _fused_forward_kernel(p1_ref, w1_ref, w2_ref, b2_ref, wh_ref, bh_ref,
                          o_ref, p2_ref, *, bblk, A, H2, W2):
    """One grid step = `bblk` images, fully resident in VMEM.

    p1_ref : (bblk, 6*A*H2, K1) bf16  plane-ordered conv1 patches (see wrapper)
    w1_ref : (K1, C1)           bf16  conv1 weights (+ bias row, indicator column)
    w2_ref : (9*C1, C2)         bf16  conv2 weights, tap-major (ki, kj, c)
    b2_ref : (1, C2)            f32
    wh_ref : (C2, NC_PAD)       bf16  head weights, pre-scaled by 1/(H2*W2)
    bh_ref : (1, NC_PAD)        f32
    o_ref  : (bblk, 1, NC_PAD)  f32   logits
    p2_ref : (H2*W2, 9*C1)      bf16  VMEM scratch: K-concatenated conv2 patches
    """
    c1 = w1_ref.shape[1]
    m2 = H2 * W2
    rows = []
    for b in range(bblk):
        # conv1 + bias + ReLU: ONE K=10 MXU dot.  Rows belonging to conv2's zero
        # border are all-zero patches (indicator 0) -> stay exactly 0 after ReLU.
        g = jnp.dot(p1_ref[b], w1_ref[...], preferred_element_type=jnp.float32)
        g = jnp.maximum(g, 0.0).astype(jnp.bfloat16)          # (6*A*H2, C1)

        # conv2 patch staging: every 3x3 tap is a CONTIGUOUS row slice of g
        # (rows pre-ordered as (plane=(ki, col-parity), x, y)), written to a
        # lane-aligned 128-column block of the VMEM scratch.  No relayouts.
        for t, (ki, kj) in enumerate(_TAPS):
            plane = ki * 2 + (kj % 2)
            start = (plane * A + kj // 2) * H2                # multiple of H2 (16)
            p2_ref[:, t * c1:(t + 1) * c1] = g[start:start + m2, :]

        # conv2 + bias + ReLU: ONE K=9*C1 dot (K-concat, review item 5).
        f2 = jnp.dot(p2_ref[...], w2_ref[...], preferred_element_type=jnp.float32)
        f2 = jnp.maximum(f2 + b2_ref[...], 0.0)               # (H2*W2, C2) f32

        # AdaptiveAvgPool2d(1) + Flatten + Linear: pool as a SUM (the 1/(H2*W2)
        # mean scale is folded into wh outside), bf16 MXU head dot, f32 bias.
        pooled = jnp.sum(f2, axis=0, keepdims=True).astype(jnp.bfloat16)   # (1, C2)
        rows.append(jnp.dot(pooled, wh_ref[...],
                            preferred_element_type=jnp.float32) + bh_ref[...])

    o_ref[...] = jnp.concatenate(rows, axis=0).reshape(o_ref.shape).astype(o_ref.dtype)


def fused_forward(patches, w1b, w2k, b2, wh, bh, *, A, H2, W2, images_per_step):
    B, M1, k1 = patches.shape
    assert B % images_per_step == 0
    grid = (B // images_per_step,)
    kernel = functools.partial(_fused_forward_kernel, bblk=images_per_step,
                               A=A, H2=H2, W2=W2)
    return pl.pallas_call(
        kernel,
        out_shape=jax.ShapeDtypeStruct((B, 1, NC_PAD), jnp.float32),
        grid_spec=pltpu.PrefetchScalarGridSpec(
            num_scalar_prefetch=0,
            grid=grid,
            in_specs=[
                pl.BlockSpec((images_per_step, M1, k1), lambda i: (i, 0, 0)),
                pl.BlockSpec((k1, C1), lambda i: (0, 0)),
                pl.BlockSpec((9 * C1, C2), lambda i: (0, 0)),
                pl.BlockSpec((1, C2), lambda i: (0, 0)),
                pl.BlockSpec((C2, NC_PAD), lambda i: (0, 0)),
                pl.BlockSpec((1, NC_PAD), lambda i: (0, 0)),
            ],
            out_specs=pl.BlockSpec((images_per_step, 1, NC_PAD), lambda i: (i, 0, 0)),
            scratch_shapes=[pltpu.VMEM((H2 * W2, 9 * C1), jnp.bfloat16)],
        ),
        compiler_params=pltpu.CompilerParams(
            dimension_semantics=("parallel",),
            vmem_limit_bytes=VMEM_LIMIT),
    )(patches, w1b, w2k, b2, wh, bh)


# ----------------------------------------------------------------------------
# Glue (plain JAX, tiny tensors): input reshape, conv1 patch builder, weights
# ----------------------------------------------------------------------------
def reshape_input_nhw(x):
    """Mirror of CustomModel.__reshape_input: (B, H, W, 8) -> (B, 4H, 2W) monotone image."""
    B, H, W, _ = x.shape
    xc = jnp.transpose(x, (0, 3, 1, 2))            # (B, 8, H, W)
    spec = xc[:, 0:4].reshape(B, 4 * H, W)
    eeg = xc[:, 4:8].reshape(B, 4 * H, W)
    return jnp.concatenate([spec, eeg], axis=2)    # (B, 4H, 2W)


def build_conv1_patches(img, dtype=jnp.bfloat16):
    """Plane-ordered (and ~1.6x duplicated) conv1 im2col patches.

    img: (B, Hi, Wi).  Returns (B, 6*A*H2, K1) with A = W2 + 1.
    Row order: (plane p, xq in [0,A), y in [0,H2)) where plane p encodes
    (ki = p // 2, col-parity pj = p % 2).  Row (p, xq, y) is the 3x3 conv1 window
    for conv1-output pixel (i, j) = (2y + ki - 1, 2xq + pj - 1), plus an indicator
    column that is 1 iff (i, j) is a valid conv1 output (bias gets folded onto it);
    out-of-range rows are all-zero -> they become conv2's pad-1 zero border.
    This ordering makes every conv2 tap a contiguous row slice of conv1's output.
    """
    B, Hi, Wi = img.shape
    H1, W1 = Hi // 2, Wi // 2
    H2, W2 = H1 // 2, W1 // 2
    A = W2 + 1
    p = jnp.arange(6)
    ki = (p // 2)[:, None, None]
    pj = (p % 2)[:, None, None]
    xq = jnp.arange(A)[None, :, None]
    y = jnp.arange(H2)[None, None, :]
    i = jnp.broadcast_to(2 * y + ki - 1, (6, A, H2))           # conv1 output row
    j = jnp.broadcast_to(2 * xq + pj - 1, (6, A, H2))          # conv1 output col
    valid = (i >= 0) & (i < H1) & (j >= 0) & (j < W1)
    di = jnp.arange(3)[:, None]
    dj = jnp.arange(3)[None, :]
    r = 2 * i[..., None, None] + di - 1                        # image row (pad-1 conv)
    c = 2 * j[..., None, None] + dj - 1                        # image col
    inb = valid[..., None, None] & (r >= 0) & (r < Hi) & (c >= 0) & (c < Wi)
    rc = jnp.clip(r, 0, Hi - 1)
    cc = jnp.clip(c, 0, Wi - 1)
    vals = jnp.where(inb[None], img[:, rc, cc], 0.0)           # (B, 6, A, H2, 3, 3)
    vals = vals.reshape(B, 6, A, H2, 9)
    ind = jnp.broadcast_to(valid[None, ..., None], (B, 6, A, H2, 1)).astype(img.dtype)
    patches = jnp.concatenate([vals, ind], axis=-1)            # (B, 6, A, H2, K1)
    return patches.reshape(B, 6 * A * H2, K1).astype(dtype)


def _pick_images_per_step(B):
    """More images per step amortizes per-step overhead, but keep grid >= 2 for megacore."""
    for blk in (8, 4, 2):
        if B % blk == 0 and B // blk >= 2:
            return blk
    return 1


# ----------------------------------------------------------------------------
# Model: parameters + forward
# ----------------------------------------------------------------------------
def init_params(key):
    k1, k2, k3, k4, k5, k6 = jax.random.split(key, 6)
    return {
        "conv1_w": jax.random.normal(k1, (3, 3, 1, C1), jnp.float32) * 0.1,
        "conv1_b": jax.random.normal(k2, (C1,), jnp.float32) * 0.01,
        "conv2_w": jax.random.normal(k3, (3, 3, C1, C2), jnp.float32) * 0.05,
        "conv2_b": jax.random.normal(k4, (C2,), jnp.float32) * 0.01,
        "head_w": jax.random.normal(k5, (C2, NUM_CLASSES), jnp.float32) * 0.05,
        "head_b": jax.random.normal(k6, (NUM_CLASSES,), jnp.float32) * 0.01,
    }


def custom_diff_model_forward(params, x):
    """x: (B, H, W, 8) float32 -> logits (B, NUM_CLASSES)."""
    B = x.shape[0]
    img = reshape_input_nhw(x)                                 # (B, Hi, Wi)
    Hi, Wi = img.shape[1], img.shape[2]
    # 3x3/s2/p1 twice needs even dims at each stage (else PyTorch would emit an
    # extra output row/col this path does not cover).
    assert Hi % 4 == 0 and Wi % 4 == 0, "monotone image dims must be multiples of 4"
    H2, W2 = Hi // 4, Wi // 4
    A = W2 + 1

    patches = build_conv1_patches(img)                         # (B, 6*A*H2, K1) bf16
    w1b = jnp.concatenate([params["conv1_w"].reshape(9, C1),
                           params["conv1_b"].reshape(1, C1)], axis=0).astype(jnp.bfloat16)
    w2k = params["conv2_w"].reshape(9 * C1, C2).astype(jnp.bfloat16)   # tap-major (ki,kj,c)
    b2 = params["conv2_b"].reshape(1, C2)
    wh = jnp.pad(params["head_w"], ((0, 0), (0, NC_PAD - NUM_CLASSES)))
    wh = (wh / float(H2 * W2)).astype(jnp.bfloat16)            # fold mean-pool scale in
    bh = jnp.pad(params["head_b"], (0, NC_PAD - NUM_CLASSES)).reshape(1, NC_PAD)

    out = fused_forward(patches, w1b, w2k, b2, wh, bh,
                        A=A, H2=H2, W2=W2,
                        images_per_step=_pick_images_per_step(B))
    return out.reshape(B, NC_PAD)[:, :NUM_CLASSES]


def reference_forward(params, x):
    """Pure-JAX f32 reference (same semantics, no Pallas) for tolerance checking."""
    img = reshape_input_nhw(x)[..., None]                      # (B, Hi, Wi, 1)
    dn = ("NHWC", "HWIO", "NHWC")
    f1 = jax.lax.conv_general_dilated(img, params["conv1_w"], (2, 2),
                                      ((1, 1), (1, 1)), dimension_numbers=dn)
    f1 = jnp.maximum(f1 + params["conv1_b"], 0.0)
    f2 = jax.lax.conv_general_dilated(f1, params["conv2_w"], (2, 2),
                                      ((1, 1), (1, 1)), dimension_numbers=dn)
    f2 = jnp.maximum(f2 + params["conv2_b"], 0.0)
    pooled = jnp.mean(f2, axis=(1, 2))                         # AdaptiveAvgPool2d(1)+Flatten
    return pooled @ params["head_w"] + params["head_b"]


if __name__ == "__main__":
    key = jax.random.PRNGKey(0)
    pkey, xkey = jax.random.split(key)
    params = init_params(pkey)

    # (B=2, H=16, W=32, 8) spectrogram stack -> (2, 64, 64) monotone image.
    x = jax.random.normal(xkey, (2, 16, 32, 8), jnp.float32)

    fwd = jax.jit(custom_diff_model_forward)
    out = jax.block_until_ready(fwd(params, x))
    assert out.shape == (2, NUM_CLASSES), out.shape
    assert bool(jnp.all(jnp.isfinite(out)))

    # bf16 MXU path vs f32 reference: expect <~1e-3 absolute deviation on ~0.1-mag logits.
    ref = jax.block_until_ready(reference_forward(params, x))
    np.testing.assert_allclose(np.asarray(out), np.asarray(ref), rtol=2e-2, atol=2e-2)

    print("KERNEL_OK")
</pallas_src>

<mosaic_0001>
module attributes {stable_mosaic.version = 11 : i64} {
  func.func @_fused_forward_kernel(%arg0: i32, %arg1: memref<1x1632x10xbf16, #tpu.memory_space<vmem>>, %arg2: memref<10x128xbf16, #tpu.memory_space<vmem>>, %arg3: memref<1152x128xbf16, #tpu.memory_space<vmem>>, %arg4: memref<1x128xf32, #tpu.memory_space<vmem>>, %arg5: memref<128x128xbf16, #tpu.memory_space<vmem>>, %arg6: memref<1x128xf32, #tpu.memory_space<vmem>>, %arg7: memref<1x1x128xf32, #tpu.memory_space<vmem>>, %arg8: memref<256x1152xbf16, #tpu.memory_space<vmem>>) attributes {dimension_semantics = [#tpu.dimension_semantics<parallel>], iteration_bounds = array<i64: 2>, scalar_prefetch = 0 : i64, scratch_operands = 1 : i64, tpu.core_type = #tpu.core_type<tc>, window_params = [{transform_indices = @transform_0, window_bounds = array<i64: 1, 1632, 10>}, {pipeline_mode = #tpu.pipeline_mode<synchronous>, transform_indices = @transform_1, window_bounds = array<i64: 10, 128>}, {pipeline_mode = #tpu.pipeline_mode<synchronous>, transform_indices = @transform_2, window_bounds = array<i64: 1152, 128>}, {pipeline_mode = #tpu.pipeline_mode<synchronous>, transform_indices = @transform_3, window_bounds = array<i64: 1, 128>}, {pipeline_mode = #tpu.pipeline_mode<synchronous>, transform_indices = @transform_4, window_bounds = array<i64: 128, 128>}, {pipeline_mode = #tpu.pipeline_mode<synchronous>, transform_indices = @transform_5, window_bounds = array<i64: 1, 128>}, {transform_indices = @transform_6, window_bounds = array<i64: 1, 1, 128>}]} {
    %c0 = arith.constant 0 : index
    %c0_0 = arith.constant 0 : index
    %c0_1 = arith.constant 0 : index
    %0 = vector.load %arg1[%c0, %c0_0, %c0_1] : memref<1x1632x10xbf16, #tpu.memory_space<vmem>>, vector<1x1632x10xbf16>
    %1 = vector.shape_cast %0 : vector<1x1632x10xbf16> to vector<1632x10xbf16>
    %c0_2 = arith.constant 0 : index
    %c0_3 = arith.constant 0 : index
    %2 = vector.load %arg2[%c0_2, %c0_3] : memref<10x128xbf16, #tpu.memory_space<vmem>>, vector<10x128xbf16>
    %cst = arith.constant dense<0.000000e+00> : vector<1632x128xf32>
    %3 = tpu.matmul %1, %2, %cst {dimension_numbers = #tpu.dot_dimension_numbers<[1], [0], [0], [1], [0, 0, 1, 1], [], []>} : vector<1632x10xbf16>, vector<10x128xbf16>, vector<1632x128xf32> -> vector<1632x128xf32>
    %cst_4 = arith.constant 0.000000e+00 : f32
    %4 = vector.broadcast %cst_4 : f32 to vector<1632x128xf32>
    %5 = arith.maximumf %3, %4 : vector<1632x128xf32>
    %6 = arith.truncf %5 : vector<1632x128xf32> to vector<1632x128xbf16>
    %7 = vector.extract_strided_slice %6 {offsets = [0, 0], sizes = [256, 128], strides = [1, 1]} : vector<1632x128xbf16> to vector<256x128xbf16>
    %c0_5 = arith.constant 0 : index
    %c0_6 = arith.constant 0 : index
    %8 = vector.load %arg8[%c0_5, %c0_6] : memref<256x1152xbf16, #tpu.memory_space<vmem>>, vector<256x128xbf16>
    tpu.vector_store %arg8[%c0_5, %c0_6], %7 {strides = array<i32>} : memref<256x1152xbf16, #tpu.memory_space<vmem>>, vector<256x128xbf16>,
    %9 = vector.extract_strided_slice %6 {offsets = [272, 0], sizes = [256, 128], strides = [1, 1]} : vector<1632x128xbf16> to vector<256x128xbf16>
    %c0_7 = arith.constant 0 : index
    %c128 = arith.constant 128 : index
    %10 = vector.load %arg8[%c0_7, %c128] : memref<256x1152xbf16, #tpu.memory_space<vmem>>, vector<256x128xbf16>
    tpu.vector_store %arg8[%c0_7, %c128], %9 {strides = array<i32>} : memref<256x1152xbf16, #tpu.memory_space<vmem>>, vector<256x128xbf16>,
    %11 = vector.extract_strided_slice %6 {offsets = [16, 0], sizes = [256, 128], strides = [1, 1]} : vector<1632x128xbf16> to vector<256x128xbf16>
    %c0_8 = arith.constant 0 : index
    %c256 = arith.constant 256 : index
    %12 = vector.load %arg8[%c0_8, %c256] : memref<256x1152xbf16, #tpu.memory_space<vmem>>, vector<256x128xbf16>
    tpu.vector_store %arg8[%c0_8, %c256], %11 {strides = array<i32>} : memref<256x1152xbf16, #tpu.memory_space<vmem>>, vector<256x128xbf16>,
    %13 = vector.extract_strided_slice %6 {offsets = [544, 0], sizes = [256, 128], strides = [1, 1]} : vector<1632x128xbf16> to vector<256x128xbf16>
    %c0_9 = arith.constant 0 : index
    %c384 = arith.constant 384 : index
    %14 = vector.load %arg8[%c0_9, %c384] : memref<256x1152xbf16, #tpu.memory_space<vmem>>, vector<256x128xbf16>
    tpu.vector_store %arg8[%c0_9, %c384], %13 {strides = array<i32>} : memref<256x1152xbf16, #tpu.memory_space<vmem>>, vector<256x128xbf16>,
    %15 = vector.extract_strided_slice %6 {offsets = [816, 0], sizes = [256, 128], strides = [1, 1]} : vector<1632x128xbf16> to vector<256x128xbf16>
    %c0_10 = arith.constant 0 : index
    %c512 = arith.constant 512 : index
    %16 = vector.load %arg8[%c0_10, %c512] : memref<256x1152xbf16, #tpu.memory_space<vmem>>, vector<256x128xbf16>
    tpu.vector_store %arg8[%c0_10, %c512], %15 {strides = array<i32>} : memref<256x1152xbf16, #tpu.memory_space<vmem>>, vector<256x128xbf16>,
    %17 = vector.extract_strided_slice %6 {offsets = [560, 0], sizes = [256, 128], strides = [1, 1]} : vector<1632x128xbf16> to vector<256x128xbf16>
    %c0_11 = arith.constant 0 : index
    %c640 = arith.constant 640 : index
    %18 = vector.load %arg8[%c0_11, %c640] : memref<256x1152xbf16, #tpu.memory_space<vmem>>, vector<256x128xbf16>
    tpu.vector_store %arg8[%c0_11, %c640], %17 {strides = array<i32>} : memref<256x1152xbf16, #tpu.memory_space<vmem>>, vector<256x128xbf16>,
    %19 = vector.extract_strided_slice %6 {offsets = [1088, 0], sizes = [256, 128], strides = [1, 1]} : vector<1632x128xbf16> to vector<256x128xbf16>
    %c0_12 = arith.constant 0 : index
    %c768 = arith.constant 768 : index
    %20 = vector.load %arg8[%c0_12, %c768] : memref<256x1152xbf16, #tpu.memory_space<vmem>>, vector<256x128xbf16>
    tpu.vector_store %arg8[%c0_12, %c768], %19 {strides = array<i32>} : memref<256x1152xbf16, #tpu.memory_space<vmem>>, vector<256x128xbf16>,
    %21 = vector.extract_strided_slice %6 {offsets = [1360, 0], sizes = [256, 128], strides = [1, 1]} : vector<1632x128xbf16> to vector<256x128xbf16>
    %c0_13 = arith.constant 0 : index
    %c896 = arith.constant 896 : index
    %22 = vector.load %arg8[%c0_13, %c896] : memref<256x1152xbf16, #tpu.memory_space<vmem>>, vector<256x128xbf16>
    tpu.vector_store %arg8[%c0_13, %c896], %21 {strides = array<i32>} : memref<256x1152xbf16, #tpu.memory_space<vmem>>, vector<256x128xbf16>,
    %23 = vector.extract_strided_slice %6 {offsets = [1104, 0], sizes = [256, 128], strides = [1, 1]} : vector<1632x128xbf16> to vector<256x128xbf16>
    %c0_14 = arith.constant 0 : index
    %c1024 = arith.constant 1024 : index
    %24 = vector.load %arg8[%c0_14, %c1024] : memref<256x1152xbf16, #tpu.memory_space<vmem>>, vector<256x128xbf16>
    tpu.vector_store %arg8[%c0_14, %c1024], %23 {strides = array<i32>} : memref<256x1152xbf16, #tpu.memory_space<vmem>>, vector<256x128xbf16>,
    %c0_15 = arith.constant 0 : index
    %c0_16 = arith.constant 0 : index
    %25 = vector.load %arg8[%c0_15, %c0_16] : memref<256x1152xbf16, #tpu.memory_space<vmem>>, vector<256x1152xbf16>
    %c0_17 = arith.constant 0 : index
    %c0_18 = arith.constant 0 : index
    %26 = vector.load %arg3[%c0_17, %c0_18] : memref<1152x128xbf16, #tpu.memory_space<vmem>>, vector<1152x128xbf16>
    %cst_19 = arith.constant dense<0.000000e+00> : vector<256x128xf32>
    %27 = tpu.matmul %25, %26, %cst_19 {dimension_numbers = #tpu.dot_dimension_numbers<[1], [0], [0], [1], [0, 0, 1, 1], [], []>} : vector<256x1152xbf16>, vector<1152x128xbf16>, vector<256x128xf32> -> vector<256x128xf32>
    %c0_20 = arith.constant 0 : index
    %c0_21 = arith.constant 0 : index
    %28 = vector.load %arg4[%c0_20, %c0_21] : memref<1x128xf32, #tpu.memory_space<vmem>>, vector<1x128xf32>
    %29 = vector.broadcast %28 : vector<1x128xf32> to vector<256x128xf32>
    %30 = arith.addf %27, %29 : vector<256x128xf32>
    %cst_22 = arith.constant 0.000000e+00 : f32
    %31 = vector.broadcast %cst_22 : f32 to vector<256x128xf32>
    %32 = arith.maximumf %30, %31 : vector<256x128xf32>
    %cst_23 = arith.constant dense<0.000000e+00> : vector<128xf32>
    %33 = vector.multi_reduction <add>, %32, %cst_23 [0] : vector<256x128xf32> to vector<128xf32>
    %34 = vector.shape_cast %33 : vector<128xf32> to vector<1x128xf32>
    %35 = arith.truncf %34 : vector<1x128xf32> to vector<1x128xbf16>
    %c0_24 = arith.constant 0 : index
    %c0_25 = arith.constant 0 : index
    %36 = vector.load %arg5[%c0_24, %c0_25] : memref<128x128xbf16, #tpu.memory_space<vmem>>, vector<128x128xbf16>
    %cst_26 = arith.constant dense<0.000000e+00> : vector<1x128xf32>
    %37 = tpu.matmul %35, %36, %cst_26 {dimension_numbers = #tpu.dot_dimension_numbers<[1], [0], [0], [1], [0, 0, 1, 1], [], []>} : vector<1x128xbf16>, vector<128x128xbf16>, vector<1x128xf32> -> vector<1x128xf32>
    %c0_27 = arith.constant 0 : index
    %c0_28 = arith.constant 0 : index
    %38 = vector.load %arg6[%c0_27, %c0_28] : memref<1x128xf32, #tpu.memory_space<vmem>>, vector<1x128xf32>
    %39 = arith.addf %37, %38 : vector<1x128xf32>
    %40 = vector.shape_cast %39 : vector<1x128xf32> to vector<1x1x128xf32>
    %c0_29 = arith.constant 0 : index
    %c0_30 = arith.constant 0 : index
    %c0_31 = arith.constant 0 : index
    %41 = vector.load %arg7[%c0_29, %c0_30, %c0_31] : memref<1x1x128xf32, #tpu.memory_space<vmem>>, vector<1x1x128xf32>
    tpu.vector_store %arg7[%c0_29, %c0_30, %c0_31], %40 {strides = array<i32>} : memref<1x1x128xf32, #tpu.memory_space<vmem>>, vector<1x1x128xf32>,
    return
  }
  func.func @transform_0(%arg0: i32) -> (i32, i32, i32) {
    %c0_i32 = arith.constant 0 : i32
    %c0_i32_0 = arith.constant 0 : i32
    %c0_i32_1 = arith.constant 0 : i32
    return %arg0, %c0_i32, %c0_i32_0 : i32, i32, i32
  }
  func.func @transform_1(%arg0: i32) -> (i32, i32) {
    %c0_i32 = arith.constant 0 : i32
    %c0_i32_0 = arith.constant 0 : i32
    %c0_i32_1 = arith.constant 0 : i32
    return %c0_i32, %c0_i32_0 : i32, i32
  }
  func.func @transform_2(%arg0: i32) -> (i32, i32) {
    %c0_i32 = arith.constant 0 : i32
    %c0_i32_0 = arith.constant 0 : i32
    %c0_i32_1 = arith.constant 0 : i32
    return %c0_i32, %c0_i32_0 : i32, i32
  }
  func.func @transform_3(%arg0: i32) -> (i32, i32) {
    %c0_i32 = arith.constant 0 : i32
    %c0_i32_0 = arith.constant 0 : i32
    %c0_i32_1 = arith.constant 0 : i32
    return %c0_i32, %c0_i32_0 : i32, i32
  }
  func.func @transform_4(%arg0: i32) -> (i32, i32) {
    %c0_i32 = arith.constant 0 : i32
    %c0_i32_0 = arith.constant 0 : i32
    %c0_i32_1 = arith.constant 0 : i32
    return %c0_i32, %c0_i32_0 : i32, i32
  }
  func.func @transform_5(%arg0: i32) -> (i32, i32) {
    %c0_i32 = arith.constant 0 : i32
    %c0_i32_0 = arith.constant 0 : i32
    %c0_i32_1 = arith.constant 0 : i32
    return %c0_i32, %c0_i32_0 : i32, i32
  }
  func.func @transform_6(%arg0: i32) -> (i32, i32, i32) {
    %c0_i32 = arith.constant 0 : i32
    %c0_i32_0 = arith.constant 0 : i32
    %c0_i32_1 = arith.constant 0 : i32
    return %arg0, %c0_i32, %c0_i32_0 : i32, i32, i32
  }
}

</mosaic_0001>

<llo_original>
// kernel: custom_diff_model_forward.1
$region0: #{custom_diff_model_forward.1}
  #allocation0 [shape = 'u32[]', space=smem, size = 0x4, offset = 0x4, fixed_abs, tag = 'smem constant byte address 0x4 - core index']
  #allocation1 [shape = 'u32[144,128]{1,0:T(1,128)}', space=vmem, size = 0x12000, scoped, tag = 'internal scratch']
  #allocation2 [shape = 'bf16[256,1152]{1,0:T(16,128)(2,1)}', space=vmem, size = 0x90000, scoped, tag = 'scratch operand']
  %s0 = inlined_call_operand.vmem [shape: bf16[2,1632,10], index: 0, kind: input, shape index: {}]
  %s1 = inlined_call_operand.vmem [shape: bf16[10,128], index: 1, kind: input, shape index: {}]
  %s2 = inlined_call_operand.vmem [shape: bf16[1152,128], index: 2, kind: input, shape index: {}]
  %s3 = inlined_call_operand.vmem [shape: f32[1,128], index: 3, kind: input, shape index: {}]
  %s4 = inlined_call_operand.vmem [shape: bf16[128,128], index: 4, kind: input, shape index: {}]
  %s5 = inlined_call_operand.vmem [shape: f32[1,128], index: 5, kind: input, shape index: {}]
  %s6 = inlined_call_operand.hbm [shape: f32[2,1,128], index: 6, kind: output, shape index: {}]
  %s7 = sld [smem:[#allocation0]]
  $region57: #{custom_diff_model_forward.1} parent=0
    _
  %s9 = ssub.s32 1, %s7
  %s10 = scalar_select 0, %s9, %s7
  $region1: #{custom_diff_model_forward.1} parent=0
    #allocation3 [shape = 'u8[1024]{0}', space=vmem, size = 0x400, scoped, tag = 'output window, operand 0']
    #allocation4 [shape = 's32[2]{0}', space=sflag, size = 0x8, scoped, tag = 'scoped memory for custom_diff_model_forward.1']
    %11 = vsyncpa [#allocation4], 0
    %s12 = scalar_lea.sflag [#allocation4], 1
    %13 = vsyncpa %s12, 0
    loop: start=0, step=1, limit=4
    $region2: #{custom_diff_model_forward.1} parent=1 // loop_pre_header
      _
    $region3: #{custom_diff_model_forward.1} parent=1 // loop_header
      %s15 = sphi 0, %s19
      %p16 = scmp.ge.s32.totalorder %s15, 4
      %s25 = sphi 0, %s27
      %s28 = sphi 0, %s25
      %s29 = sphi 0, %s28
      %s45 = sphi 0, %s29
      %s49 = sphi 0, %s49
      %s51 = sphi 0, %s49
      %s52 = sphi 0, %s51
      %s66 = sphi 0, %s52
      %s70 = sphi 0, %s70
      %s72 = sphi 0, %s70
      %s73 = sphi 0, %s72
      %s87 = sphi 0, %s73
      %s91 = sphi 0, %s91
      %s93 = sphi 0, %s91
      %s94 = sphi 0, %s93
      %s108 = sphi 0, %s94
      %s112 = sphi 0, %s112
      %s114 = sphi 0, %s112
      %s115 = sphi 0, %s114
      %s129 = sphi 0, %s115
      %s133 = sphi 0, %s133
      %s135 = sphi 0, %s133
      %s136 = sphi 0, %s135
      %s150 = sphi 0, %s136
      %s156 = sphi 0, %s158
      %s159 = sphi 0, %s156
      %s160 = sphi 0, %s159
      %s176 = sphi 0, %s160
    $region4: #{custom_diff_model_forward.1} parent=1 // loop_header_branch
      %18 = sbr.rel (%p16) target = $region8
    $region5: #{custom_diff_model_forward.1} parent=1 // loop_body
      %s20 = ssub.s32 %s15, 1
      %s21 = ssub.s32 %s15, 2
      %s22 = sadd.s32 %s15, 1
      %s23 = ssub.s32 %s15, %s22
      %p24 = scmp.eq.s32.totalorder %s23, 0
      %s26 = sadd.s32 %s25, 1
      %s27 = scalar_select %p24, %s25, %s26
      %p30 = pneg %p24
      %p31 = scmp.eq.s32.totalorder %s15, 1
      %p32 = por %p30, %p31
      %p33 = scmp.ne.s32.totalorder %s25, %s28
      %p34 = scmp.eq.s32.totalorder %s15, 0
      %p35 = por %p33, %p34
      %p36 = scmp.ne.s32.totalorder %s25, %s28
      %p37 = scmp.eq.s32.totalorder %s20, 1
      %p38 = por %p36, %p37
      %p39 = scmp.ne.s32.totalorder %s28, %s29
      %p40 = scmp.eq.s32.totalorder %s20, 0
      %p41 = por %p39, %p40
      %p42 = scmp.ne.s32.totalorder %s28, %s29
      %p43 = scmp.eq.s32.totalorder %s21, 1
      %p44 = por %p42, %p43
      %p46 = scmp.ne.s32.totalorder %s29, %s45
      %p47 = scmp.eq.s32.totalorder %s21, 0
      %p48 = por %p46, %p47
      %s50 = sadd.s32 %s49, 1
      %p53 = scmp.eq.s32.totalorder %s15, 1
      %p54 = scmp.ne.s32.totalorder %s49, %s51
      %p55 = scmp.eq.s32.totalorder %s15, 0
      %p56 = por %p54, %p55
      %p57 = scmp.ne.s32.totalorder %s49, %s51
      %p58 = scmp.eq.s32.totalorder %s20, 1
      %p59 = por %p57, %p58
      %p60 = scmp.ne.s32.totalorder %s51, %s52
      %p61 = scmp.eq.s32.totalorder %s20, 0
      %p62 = por %p60, %p61
      %p63 = scmp.ne.s32.totalorder %s51, %s52
      %p64 = scmp.eq.s32.totalorder %s21, 1
      %p65 = por %p63, %p64
      %p67 = scmp.ne.s32.totalorder %s52, %s66
      %p68 = scmp.eq.s32.totalorder %s21, 0
      %p69 = por %p67, %p68
      %s71 = sadd.s32 %s70, 1
      %p74 = scmp.eq.s32.totalorder %s15, 1
      %p75 = scmp.ne.s32.totalorder %s70, %s72
      %p76 = scmp.eq.s32.totalorder %s15, 0
      %p77 = por %p75, %p76
      %p78 = scmp.ne.s32.totalorder %s70, %s72
      %p79 = scmp.eq.s32.totalorder %s20, 1
      %p80 = por %p78, %p79
      %p81 = scmp.ne.s32.totalorder %s72, %s73
      %p82 = scmp.eq.s32.totalorder %s20, 0
      %p83 = por %p81, %p82
      %p84 = scmp.ne.s32.totalorder %s72, %s73
      %p85 = scmp.eq.s32.totalorder %s21, 1
      %p86 = por %p84, %p85
      %p88 = scmp.ne.s32.totalorder %s73, %s87
      %p89 = scmp.eq.s32.totalorder %s21, 0
      %p90 = por %p88, %p89
      %s92 = sadd.s32 %s91, 1
      %p95 = scmp.eq.s32.totalorder %s15, 1
      %p96 = scmp.ne.s32.totalorder %s91, %s93
      %p97 = scmp.eq.s32.totalorder %s15, 0
      %p98 = por %p96, %p97
      %p99 = scmp.ne.s32.totalorder %s91, %s93
      %p100 = scmp.eq.s32.totalorder %s20, 1
      %p101 = por %p99, %p100
      %p102 = scmp.ne.s32.totalorder %s93, %s94
      %p103 = scmp.eq.s32.totalorder %s20, 0
      %p104 = por %p102, %p103
      %p105 = scmp.ne.s32.totalorder %s93, %s94
      %p106 = scmp.eq.s32.totalorder %s21, 1
      %p107 = por %p105, %p106
      %p109 = scmp.ne.s32.totalorder %s94, %s108
      %p110 = scmp.eq.s32.totalorder %s21, 0
      %p111 = por %p109, %p110
      %s113 = sadd.s32 %s112, 1
      %p116 = scmp.eq.s32.totalorder %s15, 1
      %p117 = scmp.ne.s32.totalorder %s112, %s114
      %p118 = scmp.eq.s32.totalorder %s15, 0
      %p119 = por %p117, %p118
      %p120 = scmp.ne.s32.totalorder %s112, %s114
      %p121 = scmp.eq.s32.totalorder %s20, 1
      %p122 = por %p120, %p121
      %p123 = scmp.ne.s32.totalorder %s114, %s115
      %p124 = scmp.eq.s32.totalorder %s20, 0
      %p125 = por %p123, %p124
      %p126 = scmp.ne.s32.totalorder %s114, %s115
      %p127 = scmp.eq.s32.totalorder %s21, 1
      %p128 = por %p126, %p127
      %p130 = scmp.ne.s32.totalorder %s115, %s129
      %p131 = scmp.eq.s32.totalorder %s21, 0
      %p132 = por %p130, %p131
      %s134 = sadd.s32 %s133, 1
      %p137 = scmp.eq.s32.totalorder %s15, 1
      %p138 = scmp.ne.s32.totalorder %s133, %s135
      %p139 = scmp.eq.s32.totalorder %s15, 0
      %p140 = por %p138, %p139
      %p141 = scmp.ne.s32.totalorder %s133, %s135
      %p142 = scmp.eq.s32.totalorder %s20, 1
      %p143 = por %p141, %p142
      %p144 = scmp.ne.s32.totalorder %s135, %s136
      %p145 = scmp.eq.s32.totalorder %s20, 0
      %p146 = por %p144, %p145
      %p147 = scmp.ne.s32.totalorder %s135, %s136
      %p148 = scmp.eq.s32.totalorder %s21, 1
      %p149 = por %p147, %p148
      %p151 = scmp.ne.s32.totalorder %s136, %s150
      %p152 = scmp.eq.s32.totalorder %s21, 0
      %p153 = por %p151, %p152
      %s154 = ssub.s32 %s15, %s22
      %p155 = scmp.eq.s32.totalorder %s154, 0
      %s157 = sadd.s32 %s156, 1
      %s158 = scalar_select %p155, %s156, %s157
      %p161 = pneg %p155
      %p162 = scmp.eq.s32.totalorder %s15, 1
      %p163 = por %p161, %p162
      %p164 = scmp.ne.s32.totalorder %s156, %s159
      %p165 = scmp.eq.s32.totalorder %s15, 0
      %p166 = por %p164, %p165
      %p167 = scmp.ne.s32.totalorder %s156, %s159
      %p168 = scmp.eq.s32.totalorder %s20, 1
      %p169 = por %p167, %p168
      %p170 = scmp.ne.s32.totalorder %s159, %s160
      %p171 = scmp.eq.s32.totalorder %s20, 0
      %p172 = por %p170, %p171
      %p173 = scmp.ne.s32.totalorder %s159, %s160
      %p174 = scmp.eq.s32.totalorder %s21, 1
      %p175 = por %p173, %p174
      %p177 = scmp.ne.s32.totalorder %s160, %s176
      %p178 = scmp.eq.s32.totalorder %s21, 0
      %p179 = por %p177, %p178
      %p180 = scmp.le.s32.totalorder 1, %s15
      %p181 = scmp.lt.s32.totalorder %s15, 3
      %p182 = pnand %p180, %p181
      %p183 = pneg %p182
      // Predicated region
      $region9: #{custom_diff_model_forward.1} parent=5 // pred_check
        _
      $region10: #{custom_diff_model_forward.1} parent=5 // pred_check_branch
        %185 = sbr.rel (%p182) target = $region12
      $region11: #{custom_diff_model_forward.1} parent=5 // pred_region
        %s186 = ssub.s32 %s15, 1
        // Predicated region
        $region13: #{custom_diff_model_forward.1} parent=11 // pred_check
          %p187 = pneg %p62
        $region14: #{custom_diff_model_forward.1} parent=11 // pred_check_branch
          %189 = sbr.rel (%p187) target = $region16
        $region15: #{custom_diff_model_forward.1} parent=11 // pred_region
          _
        $region16: #{custom_diff_model_forward.1} parent=11 // pred_fallthru
          _
        // Predicated region
        $region17: #{custom_diff_model_forward.1} parent=11 // pred_check
          %p190 = pneg %p83
        $region18: #{custom_diff_model_forward.1} parent=11 // pred_check_branch
          %192 = sbr.rel (%p190) target = $region20
        $region19: #{custom_diff_model_forward.1} parent=11 // pred_region
          _
        $region20: #{custom_diff_model_forward.1} parent=11 // pred_fallthru
          _
        // Predicated region
        $region21: #{custom_diff_model_forward.1} parent=11 // pred_check
          %p193 = pneg %p104
        $region22: #{custom_diff_model_forward.1} parent=11 // pred_check_branch
          %195 = sbr.rel (%p193) target = $region24
        $region23: #{custom_diff_model_forward.1} parent=11 // pred_region
          _
        $region24: #{custom_diff_model_forward.1} parent=11 // pred_fallthru
          _
        // Predicated region
        $region25: #{custom_diff_model_forward.1} parent=11 // pred_check
          %p196 = pneg %p125
        $region26: #{custom_diff_model_forward.1} parent=11 // pred_check_branch
          %198 = sbr.rel (%p196) target = $region28
        $region27: #{custom_diff_model_forward.1} parent=11 // pred_region
          _
        $region28: #{custom_diff_model_forward.1} parent=11 // pred_fallthru
          _
        // Predicated region
        $region29: #{custom_diff_model_forward.1} parent=11 // pred_check
          %p199 = pneg %p146
        $region30: #{custom_diff_model_forward.1} parent=11 // pred_check_branch
          %201 = sbr.rel (%p199) target = $region32
        $region31: #{custom_diff_model_forward.1} parent=11 // pred_region
          _
        $region32: #{custom_diff_model_forward.1} parent=11 // pred_fallthru
          _
      $region12: #{custom_diff_model_forward.1} parent=5 // pred_fallthru
        _
      %p202 = scmp.lt.s32.totalorder %s15, 2
      // Predicated region
      $region33: #{custom_diff_model_forward.1} parent=5 // pred_check
        %p203 = pneg %p202
      $region34: #{custom_diff_model_forward.1} parent=5 // pred_check_branch
        %205 = sbr.rel (%p203) target = $region36
      $region35: #{custom_diff_model_forward.1} parent=5 // pred_region
        // Predicated region
        $region37: #{custom_diff_model_forward.1} parent=35 // pred_check
          %p206 = pneg %p35
        $region38: #{custom_diff_model_forward.1} parent=35 // pred_check_branch
          %208 = sbr.rel (%p206) target = $region40
        $region39: #{custom_diff_model_forward.1} parent=35 // pred_region
          %p209 = scmp.lt.s32.totalorder %s15, 1
          %s210 = scalar_select %p209, %s15, 1
          %s211 = smul.addr %s210, 204
          %s212 = smul.addr %s211, 4
          %s213 = scalar_lea.vmem %s0, %s212
        $region40: #{custom_diff_model_forward.1} parent=35 // pred_fallthru
          _
      $region36: #{custom_diff_model_forward.1} parent=5 // pred_fallthru
        _
      %p214 = scmp.le.s32.totalorder 1, %s15
      %p215 = scmp.lt.s32.totalorder %s15, 3
      %p216 = pnand %p214, %p215
      %p217 = pneg %p216
      // Predicated region
      $region41: #{custom_diff_model_forward.1} parent=5 // pred_check
        _
      $region42: #{custom_diff_model_forward.1} parent=5 // pred_check_branch
        %219 = sbr.rel (%p216) target = $region44
      $region43: #{custom_diff_model_forward.1} parent=5 // pred_region
        %s220 = ssub.s32 %s15, 1
        %p221 = scmp.lt.s32.totalorder %s20, 1
        %s222 = scalar_select %p221, %s20, 1
        %s223 = smul.addr %s222, 204
        %s224 = smul.addr %s223, 4
        %s225 = scalar_lea.vmem %s0, %s224
        %p226 = pneg %p41
        %p227 = pneg %p38
        %p228 = pneg %p62
        %p229 = pneg %p59
        %p230 = pneg %p83
        %p231 = pneg %p80
        %p232 = pneg %p104
        %p233 = pneg %p101
        %p234 = pneg %p125
        %p235 = pneg %p122
        %p236 = pneg %p146
        %p237 = pneg %p143
        %p238 = pneg %p172
        %p239 = pneg %p169
        %s240 = sand.u32 %s159, 1
        %s241 = scalar_lea.sflag [#allocation4], %s240
        %s242 = sand.u32 %s159, 1
        %s243 = scalar_lea.vmem [#allocation3], %s242
        %p244 = scmp.lt.s32.totalorder %s20, 1
        %s245 = scalar_select %p244, %s20, 1
        %s246 = smul.addr %s245, 204
        %s247 = smul.addr %s246, 4
        %s248 = scalar_lea.vmem %s0, %s247
        %v250 = vld [vmem:[%s248] sm:$0xf]
        %v251 = vld [vmem:[%s248 + $0x4] sm:$0xf]
        %v252 = vld [vmem:[%s248 + $0x8] sm:$0xf]
        %v253 = vld [vmem:[%s248 + $0xc] sm:$0xf]
        %v254 = vld [vmem:[%s248 + $0x10] sm:$0xf]
        %v255 = vld [vmem:[%s248 + $0x14] sm:$0xf]
        %v256 = vld [vmem:[%s248 + $0x18] sm:$0xf]
        %v257 = vld [vmem:[%s248 + $0x1c] sm:$0xf]
        %v258 = vld [vmem:[%s248 + $0x20] sm:$0xf]
        %v259 = vld [vmem:[%s248 + $0x24] sm:$0xf]
        %v260 = vld [vmem:[%s248 + $0x28] sm:$0xf]
        %v261 = vld [vmem:[%s248 + $0x2c] sm:$0xf]
        %v262 = vld [vmem:[%s248 + $0x30] sm:$0xf]
        %v263 = vld [vmem:[%s248 + $0x34] sm:$0xf]
        %v264 = vld [vmem:[%s248 + $0x38] sm:$0xf]
        %v265 = vld [vmem:[%s248 + $0x3c] sm:$0xf]
        %v266 = vld [vmem:[%s248 + $0x40] sm:$0xf]
        %v267 = vld [vmem:[%s248 + $0x44] sm:$0xf]
        %v268 = vld [vmem:[%s248 + $0x48] sm:$0xf]
        %v269 = vld [vmem:[%s248 + $0x4c] sm:$0xf]
        %v270 = vld [vmem:[%s248 + $0x50] sm:$0xf]
        %v271 = vld [vmem:[%s248 + $0x54] sm:$0xf]
        %v272 = vld [vmem:[%s248 + $0x58] sm:$0xf]
        %v273 = vld [vmem:[%s248 + $0x5c] sm:$0xf]
        %v274 = vld [vmem:[%s248 + $0x60] sm:$0xf]
        %v275 = vld [vmem:[%s248 + $0x64] sm:$0xf]
        %v276 = vld [vmem:[%s248 + $0x68] sm:$0xf]
        %v277 = vld [vmem:[%s248 + $0x6c] sm:$0xf]
        %v278 = vld [vmem:[%s248 + $0x70] sm:$0xf]
        %v279 = vld [vmem:[%s248 + $0x74] sm:$0xf]
        %v280 = vld [vmem:[%s248 + $0x78] sm:$0xf]
        %v281 = vld [vmem:[%s248 + $0x7c] sm:$0xf]
        %v282 = vld [vmem:[%s248 + $0x80] sm:$0xf]
        %v283 = vld [vmem:[%s248 + $0x84] sm:$0xf]
        %v284 = vld [vmem:[%s248 + $0x88] sm:$0xf]
        %v285 = vld [vmem:[%s248 + $0x8c] sm:$0xf]
        %v286 = vld [vmem:[%s248 + $0x90] sm:$0xf]
        %v287 = vld [vmem:[%s248 + $0x94] sm:$0xf]
        %v288 = vld [vmem:[%s248 + $0x98] sm:$0xf]
        %v289 = vld [vmem:[%s248 + $0x9c] sm:$0xf]
        %v290 = vld [vmem:[%s248 + $0xa0] sm:$0xf]
        %v291 = vld [vmem:[%s248 + $0xa4] sm:$0xf]
        %v292 = vld [vmem:[%s248 + $0xa8] sm:$0xf]
        %v293 = vld [vmem:[%s248 + $0xac] sm:$0xf]
        %v294 = vld [vmem:[%s248 + $0xb0] sm:$0xf]
        %v295 = vld [vmem:[%s248 + $0xb4] sm:$0xf]
        %v296 = vld [vmem:[%s248 + $0xb8] sm:$0xf]
        %v297 = vld [vmem:[%s248 + $0xbc] sm:$0xf]
        %v298 = vld [vmem:[%s248 + $0xc0] sm:$0xf]
        %v299 = vld [vmem:[%s248 + $0xc4] sm:$0xf]
        %v300 = vld [vmem:[%s248 + $0xc8] sm:$0xf]
        %v301 = vld [vmem:[%s248 + $0xcc] sm:$0xf]
        %v302 = vld [vmem:[%s248 + $0xd0] sm:$0xf]
        %v303 = vld [vmem:[%s248 + $0xd4] sm:$0xf]
        %v304 = vld [vmem:[%s248 + $0xd8] sm:$0xf]
        %v305 = vld [vmem:[%s248 + $0xdc] sm:$0xf]
        %v306 = vld [vmem:[%s248 + $0xe0] sm:$0xf]
        %v307 = vld [vmem:[%s248 + $0xe4] sm:$0xf]
        %v308 = vld [vmem:[%s248 + $0xe8] sm:$0xf]
        %v309 = vld [vmem:[%s248 + $0xec] sm:$0xf]
        %v310 = vld [vmem:[%s248 + $0xf0] sm:$0xf]
        %v311 = vld [vmem:[%s248 + $0xf4] sm:$0xf]
        %v312 = vld [vmem:[%s248 + $0xf8] sm:$0xf]
        %v313 = vld [vmem:[%s248 + $0xfc] sm:$0xf]
        %v314 = vld [vmem:[%s248 + $0x100] sm:$0xf]
        %v315 = vld [vmem:[%s248 + $0x104] sm:$0xf]
        %v316 = vld [vmem:[%s248 + $0x108] sm:$0xf]
        %v317 = vld [vmem:[%s248 + $0x10c] sm:$0xf]
        %v318 = vld [vmem:[%s248 + $0x110] sm:$0xf]
        %v319 = vld [vmem:[%s248 + $0x114] sm:$0xf]
        %v320 = vld [vmem:[%s248 + $0x118] sm:$0xf]
        %v321 = vld [vmem:[%s248 + $0x11c] sm:$0xf]
        %v322 = vld [vmem:[%s248 + $0x120] sm:$0xf]
        %v323 = vld [vmem:[%s248 + $0x124] sm:$0xf]
        %v324 = vld [vmem:[%s248 + $0x128] sm:$0xf]
        %v325 = vld [vmem:[%s248 + $0x12c] sm:$0xf]
        %v326 = vld [vmem:[%s248 + $0x130] sm:$0xf]
        %v327 = vld [vmem:[%s248 + $0x134] sm:$0xf]
        %v328 = vld [vmem:[%s248 + $0x138] sm:$0xf]
        %v329 = vld [vmem:[%s248 + $0x13c] sm:$0xf]
        %v330 = vld [vmem:[%s248 + $0x140] sm:$0xf]
        %v331 = vld [vmem:[%s248 + $0x144] sm:$0xf]
        %v332 = vld [vmem:[%s248 + $0x148] sm:$0xf]
        %v333 = vld [vmem:[%s248 + $0x14c] sm:$0xf]
        %v334 = vld [vmem:[%s248 + $0x150] sm:$0xf]
        %v335 = vld [vmem:[%s248 + $0x154] sm:$0xf]
        %v336 = vld [vmem:[%s248 + $0x158] sm:$0xf]
        %v337 = vld [vmem:[%s248 + $0x15c] sm:$0xf]
        %v338 = vld [vmem:[%s248 + $0x160] sm:$0xf]
        %v339 = vld [vmem:[%s248 + $0x164] sm:$0xf]
        %v340 = vld [vmem:[%s248 + $0x168] sm:$0xf]
        %v341 = vld [vmem:[%s248 + $0x16c] sm:$0xf]
        %v342 = vld [vmem:[%s248 + $0x170] sm:$0xf]
        %v343 = vld [vmem:[%s248 + $0x174] sm:$0xf]
        %v344 = vld [vmem:[%s248 + $0x178] sm:$0xf]
        %v345 = vld [vmem:[%s248 + $0x17c] sm:$0xf]
        %v346 = vld [vmem:[%s248 + $0x180] sm:$0xf]
        %v347 = vld [vmem:[%s248 + $0x184] sm:$0xf]
        %v348 = vld [vmem:[%s248 + $0x188] sm:$0xf]
        %v349 = vld [vmem:[%s248 + $0x18c] sm:$0xf]
        %v350 = vld [vmem:[%s248 + $0x190] sm:$0xf]
        %v351 = vld [vmem:[%s248 + $0x194] sm:$0xf]
        %v352 = vld [vmem:[%s248 + $0x198] sm:$0xf]
        %v353 = vld [vmem:[%s248 + $0x19c] sm:$0xf]
        %v354 = vld [vmem:[%s248 + $0x1a0] sm:$0xf]
        %v355 = vld [vmem:[%s248 + $0x1a4] sm:$0xf]
        %v356 = vld [vmem:[%s248 + $0x1a8] sm:$0xf]
        %v357 = vld [vmem:[%s248 + $0x1ac] sm:$0xf]
        %v358 = vld [vmem:[%s248 + $0x1b0] sm:$0xf]
        %v359 = vld [vmem:[%s248 + $0x1b4] sm:$0xf]
        %v360 = vld [vmem:[%s248 + $0x1b8] sm:$0xf]
        %v361 = vld [vmem:[%s248 + $0x1bc] sm:$0xf]
        %v362 = vld [vmem:[%s248 + $0x1c0] sm:$0xf]
        %v363 = vld [vmem:[%s248 + $0x1c4] sm:$0xf]
        %v364 = vld [vmem:[%s248 + $0x1c8] sm:$0xf]
        %v365 = vld [vmem:[%s248 + $0x1cc] sm:$0xf]
        %v366 = vld [vmem:[%s248 + $0x1d0] sm:$0xf]
        %v367 = vld [vmem:[%s248 + $0x1d4] sm:$0xf]
        %v368 = vld [vmem:[%s248 + $0x1d8] sm:$0xf]
        %v369 = vld [vmem:[%s248 + $0x1dc] sm:$0xf]
        %v370 = vld [vmem:[%s248 + $0x1e0] sm:$0xf]
        %v371 = vld [vmem:[%s248 + $0x1e4] sm:$0xf]
        %v372 = vld [vmem:[%s248 + $0x1e8] sm:$0xf]
        %v373 = vld [vmem:[%s248 + $0x1ec] sm:$0xf]
        %v374 = vld [vmem:[%s248 + $0x1f0] sm:$0xf]
        %v375 = vld [vmem:[%s248 + $0x1f4] sm:$0xf]
        %v376 = vld [vmem:[%s248 + $0x1f8] sm:$0xf]
        %v377 = vld [vmem:[%s248 + $0x1fc] sm:$0xf]
        %v378 = vld [vmem:[%s248 + $0x200] sm:$0xf]
        %v379 = vld [vmem:[%s248 + $0x204] sm:$0xf]
        %v380 = vld [vmem:[%s248 + $0x208] sm:$0xf]
        %v381 = vld [vmem:[%s248 + $0x20c] sm:$0xf]
        %v382 = vld [vmem:[%s248 + $0x210] sm:$0xf]
        %v383 = vld [vmem:[%s248 + $0x214] sm:$0xf]
        %v384 = vld [vmem:[%s248 + $0x218] sm:$0xf]
        %v385 = vld [vmem:[%s248 + $0x21c] sm:$0xf]
        %v386 = vld [vmem:[%s248 + $0x220] sm:$0xf]
        %v387 = vld [vmem:[%s248 + $0x224] sm:$0xf]
        %v388 = vld [vmem:[%s248 + $0x228] sm:$0xf]
        %v389 = vld [vmem:[%s248 + $0x22c] sm:$0xf]
        %v390 = vld [vmem:[%s248 + $0x230] sm:$0xf]
        %v391 = vld [vmem:[%s248 + $0x234] sm:$0xf]
        %v392 = vld [vmem:[%s248 + $0x238] sm:$0xf]
        %v393 = vld [vmem:[%s248 + $0x23c] sm:$0xf]
        %v394 = vld [vmem:[%s248 + $0x240] sm:$0xf]
        %v395 = vld [vmem:[%s248 + $0x244] sm:$0xf]
        %v396 = vld [vmem:[%s248 + $0x248] sm:$0xf]
        %v397 = vld [vmem:[%s248 + $0x24c] sm:$0xf]
        %v398 = vld [vmem:[%s248 + $0x250] sm:$0xf]
        %v399 = vld [vmem:[%s248 + $0x254] sm:$0xf]
        %v400 = vld [vmem:[%s248 + $0x258] sm:$0xf]
        %v401 = vld [vmem:[%s248 + $0x25c] sm:$0xf]
        %v402 = vld [vmem:[%s248 + $0x260] sm:$0xf]
        %v403 = vld [vmem:[%s248 + $0x264] sm:$0xf]
        %v404 = vld [vmem:[%s248 + $0x268] sm:$0xf]
        %v405 = vld [vmem:[%s248 + $0x26c] sm:$0xf]
        %v406 = vld [vmem:[%s248 + $0x270] sm:$0xf]
        %v407 = vld [vmem:[%s248 + $0x274] sm:$0xf]
        %v408 = vld [vmem:[%s248 + $0x278] sm:$0xf]
        %v409 = vld [vmem:[%s248 + $0x27c] sm:$0xf]
        %v410 = vld [vmem:[%s248 + $0x280] sm:$0xf]
        %v411 = vld [vmem:[%s248 + $0x284] sm:$0xf]
        %v412 = vld [vmem:[%s248 + $0x288] sm:$0xf]
        %v413 = vld [vmem:[%s248 + $0x28c] sm:$0xf]
        %v414 = vld [vmem:[%s248 + $0x290] sm:$0xf]
        %v415 = vld [vmem:[%s248 + $0x294] sm:$0xf]
        %v416 = vld [vmem:[%s248 + $0x298] sm:$0xf]
        %v417 = vld [vmem:[%s248 + $0x29c] sm:$0xf]
        %v418 = vld [vmem:[%s248 + $0x2a0] sm:$0xf]
        %v419 = vld [vmem:[%s248 + $0x2a4] sm:$0xf]
        %v420 = vld [vmem:[%s248 + $0x2a8] sm:$0xf]
        %v421 = vld [vmem:[%s248 + $0x2ac] sm:$0xf]
        %v422 = vld [vmem:[%s248 + $0x2b0] sm:$0xf]
        %v423 = vld [vmem:[%s248 + $0x2b4] sm:$0xf]
        %v424 = vld [vmem:[%s248 + $0x2b8] sm:$0xf]
        %v425 = vld [vmem:[%s248 + $0x2bc] sm:$0xf]
        %v426 = vld [vmem:[%s248 + $0x2c0] sm:$0xf]
        %v427 = vld [vmem:[%s248 + $0x2c4] sm:$0xf]
        %v428 = vld [vmem:[%s248 + $0x2c8] sm:$0xf]
        %v429 = vld [vmem:[%s248 + $0x2cc] sm:$0xf]
        %v430 = vld [vmem:[%s248 + $0x2d0] sm:$0xf]
        %v431 = vld [vmem:[%s248 + $0x2d4] sm:$0xf]
        %v432 = vld [vmem:[%s248 + $0x2d8] sm:$0xf]
        %v433 = vld [vmem:[%s248 + $0x2dc] sm:$0xf]
        %v434 = vld [vmem:[%s248 + $0x2e0] sm:$0xf]
        %v435 = vld [vmem:[%s248 + $0x2e4] sm:$0xf]
        %v436 = vld [vmem:[%s248 + $0x2e8] sm:$0xf]
        %v437 = vld [vmem:[%s248 + $0x2ec] sm:$0xf]
        %v438 = vld [vmem:[%s248 + $0x2f0] sm:$0xf]
        %v439 = vld [vmem:[%s248 + $0x2f4] sm:$0xf]
        %v440 = vld [vmem:[%s248 + $0x2f8] sm:$0xf]
        %v441 = vld [vmem:[%s248 + $0x2fc] sm:$0xf]
        %v442 = vld [vmem:[%s248 + $0x300] sm:$0xf]
        %v443 = vld [vmem:[%s248 + $0x304] sm:$0xf]
        %v444 = vld [vmem:[%s248 + $0x308] sm:$0xf]
        %v445 = vld [vmem:[%s248 + $0x30c] sm:$0xf]
        %v446 = vld [vmem:[%s248 + $0x310] sm:$0xf]
        %v447 = vld [vmem:[%s248 + $0x314] sm:$0xf]
        %v448 = vld [vmem:[%s248 + $0x318] sm:$0xf]
        %v449 = vld [vmem:[%s248 + $0x31c] sm:$0xf]
        %v450 = vld [vmem:[%s248 + $0x320] sm:$0xf]
        %v451 = vld [vmem:[%s248 + $0x324] sm:$0xf]
        %v452 = vld [vmem:[%s248 + $0x328] sm:$0xf]
        %v453 = vld [vmem:[%s248 + $0x32c] sm:$0xf]
        %v454 = vld [vmem:[%s1] sm:$0xf]
        %v455 = vld [vmem:[%s1 + $0x4] sm:$0x1]
        %v660 = vunpack.c.l.b16 %v250
        %v661 = vunpack.c.l.b16 %v251
        %v662 = vunpack.c.l.b16 %v252
        %v663 = vunpack.c.l.b16 %v253
        %v664 = vunpack.c.l.b16 %v254
        %v665 = vunpack.c.l.b16 %v255
        %v666 = vunpack.c.l.b16 %v256
        %v667 = vunpack.c.l.b16 %v257
        %v668 = vunpack.c.l.b16 %v258
        %v669 = vunpack.c.l.b16 %v259
        %v670 = vunpack.c.l.b16 %v260
        %v671 = vunpack.c.l.b16 %v261
        %v672 = vunpack.c.l.b16 %v262
        %v673 = vunpack.c.l.b16 %v263
        %v674 = vunpack.c.l.b16 %v264
        %v675 = vunpack.c.l.b16 %v265
        %v676 = vunpack.c.l.b16 %v266
        %v677 = vunpack.c.l.b16 %v267
        %v678 = vunpack.c.l.b16 %v268
        %v679 = vunpack.c.l.b16 %v269
        %v680 = vunpack.c.l.b16 %v270
        %v681 = vunpack.c.l.b16 %v271
        %v682 = vunpack.c.l.b16 %v272
        %v683 = vunpack.c.l.b16 %v273
        %v684 = vunpack.c.l.b16 %v274
        %v685 = vunpack.c.l.b16 %v275
        %v686 = vunpack.c.l.b16 %v276
        %v687 = vunpack.c.l.b16 %v277
        %v688 = vunpack.c.l.b16 %v278
        %v689 = vunpack.c.l.b16 %v279
        %v690 = vunpack.c.l.b16 %v280
        %v691 = vunpack.c.l.b16 %v281
        %v692 = vunpack.c.l.b16 %v282
        %v693 = vunpack.c.l.b16 %v283
        %v694 = vunpack.c.l.b16 %v284
        %v695 = vunpack.c.l.b16 %v285
        %v696 = vunpack.c.l.b16 %v286
        %v697 = vunpack.c.l.b16 %v287
        %v698 = vunpack.c.l.b16 %v288
        %v699 = vunpack.c.l.b16 %v289
        %v700 = vunpack.c.l.b16 %v290
        %v701 = vunpack.c.l.b16 %v291
        %v702 = vunpack.c.l.b16 %v292
        %v703 = vunpack.c.l.b16 %v293
        %v704 = vunpack.c.l.b16 %v294
        %v705 = vunpack.c.l.b16 %v295
        %v706 = vunpack.c.l.b16 %v296
        %v707 = vunpack.c.l.b16 %v297
        %v708 = vunpack.c.l.b16 %v298
        %v709 = vunpack.c.l.b16 %v299
        %v710 = vunpack.c.l.b16 %v300
        %v711 = vunpack.c.l.b16 %v301
        %v712 = vunpack.c.l.b16 %v302
        %v713 = vunpack.c.l.b16 %v303
        %v714 = vunpack.c.l.b16 %v304
        %v715 = vunpack.c.l.b16 %v305
        %v716 = vunpack.c.l.b16 %v306
        %v717 = vunpack.c.l.b16 %v307
        %v718 = vunpack.c.l.b16 %v308
        %v719 = vunpack.c.l.b16 %v309
        %v720 = vunpack.c.l.b16 %v310
        %v721 = vunpack.c.l.b16 %v311
        %v722 = vunpack.c.l.b16 %v312
        %v723 = vunpack.c.l.b16 %v313
        %v724 = vunpack.c.l.b16 %v314
        %v725 = vunpack.c.l.b16 %v315
        %v726 = vunpack.c.l.b16 %v316
        %v727 = vunpack.c.l.b16 %v317
        %v728 = vunpack.c.l.b16 %v318
        %v729 = vunpack.c.l.b16 %v319
        %v730 = vunpack.c.l.b16 %v320
        %v731 = vunpack.c.l.b16 %v321
        %v732 = vunpack.c.l.b16 %v322
        %v733 = vunpack.c.l.b16 %v323
        %v734 = vunpack.c.l.b16 %v324
        %v735 = vunpack.c.l.b16 %v325
        %v736 = vunpack.c.l.b16 %v326
        %v737 = vunpack.c.l.b16 %v327
        %v738 = vunpack.c.l.b16 %v328
        %v739 = vunpack.c.l.b16 %v329
        %v740 = vunpack.c.l.b16 %v330
        %v741 = vunpack.c.l.b16 %v331
        %v742 = vunpack.c.l.b16 %v332
        %v743 = vunpack.c.l.b16 %v333
        %v744 = vunpack.c.l.b16 %v334
        %v745 = vunpack.c.l.b16 %v335
        %v746 = vunpack.c.l.b16 %v336
        %v747 = vunpack.c.l.b16 %v337
        %v748 = vunpack.c.l.b16 %v338
        %v749 = vunpack.c.l.b16 %v339
        %v750 = vunpack.c.l.b16 %v340
        %v751 = vunpack.c.l.b16 %v341
        %v752 = vunpack.c.l.b16 %v342
        %v753 = vunpack.c.l.b16 %v343
        %v754 = vunpack.c.l.b16 %v344
        %v755 = vunpack.c.l.b16 %v345
        %v756 = vunpack.c.l.b16 %v346
        %v757 = vunpack.c.l.b16 %v347
        %v758 = vunpack.c.l.b16 %v348
        %v759 = vunpack.c.l.b16 %v349
        %v760 = vunpack.c.l.b16 %v350
        %v761 = vunpack.c.l.b16 %v351
        %v762 = vunpack.c.l.b16 %v352
        %v763 = vunpack.c.l.b16 %v353
        %v764 = vunpack.c.l.b16 %v354
        %v765 = vunpack.c.l.b16 %v355
        %v766 = vunpack.c.l.b16 %v356
        %v767 = vunpack.c.l.b16 %v357
        %v768 = vunpack.c.l.b16 %v358
        %v769 = vunpack.c.l.b16 %v359
        %v770 = vunpack.c.l.b16 %v360
        %v771 = vunpack.c.l.b16 %v361
        %v772 = vunpack.c.l.b16 %v362
        %v773 = vunpack.c.l.b16 %v363
        %v774 = vunpack.c.l.b16 %v364
        %v775 = vunpack.c.l.b16 %v365
        %v776 = vunpack.c.l.b16 %v366
        %v777 = vunpack.c.l.b16 %v367
        %v778 = vunpack.c.l.b16 %v368
        %v779 = vunpack.c.l.b16 %v369
        %v780 = vunpack.c.l.b16 %v370
        %v781 = vunpack.c.l.b16 %v371
        %v782 = vunpack.c.l.b16 %v372
        %v783 = vunpack.c.l.b16 %v373
        %v784 = vunpack.c.l.b16 %v374
        %v785 = vunpack.c.l.b16 %v375
        %v786 = vunpack.c.l.b16 %v376
        %v787 = vunpack.c.l.b16 %v377
        %v788 = vunpack.c.l.b16 %v378
        %v789 = vunpack.c.l.b16 %v379
        %v790 = vunpack.c.l.b16 %v380
        %v791 = vunpack.c.l.b16 %v381
        %v792 = vunpack.c.l.b16 %v382
        %v793 = vunpack.c.l.b16 %v383
        %v794 = vunpack.c.l.b16 %v384
        %v795 = vunpack.c.l.b16 %v385
        %v796 = vunpack.c.l.b16 %v386
        %v797 = vunpack.c.l.b16 %v387
        %v798 = vunpack.c.l.b16 %v388
        %v799 = vunpack.c.l.b16 %v389
        %v800 = vunpack.c.l.b16 %v390
        %v801 = vunpack.c.l.b16 %v391
        %v802 = vunpack.c.l.b16 %v392
        %v803 = vunpack.c.l.b16 %v393
        %v804 = vunpack.c.l.b16 %v394
        %v805 = vunpack.c.l.b16 %v395
        %v806 = vunpack.c.l.b16 %v396
        %v807 = vunpack.c.l.b16 %v397
        %v808 = vunpack.c.l.b16 %v398
        %v809 = vunpack.c.l.b16 %v399
        %v810 = vunpack.c.l.b16 %v400
        %v811 = vunpack.c.l.b16 %v401
        %v812 = vunpack.c.l.b16 %v402
        %v813 = vunpack.c.l.b16 %v403
        %v814 = vunpack.c.l.b16 %v404
        %v815 = vunpack.c.l.b16 %v405
        %v816 = vunpack.c.l.b16 %v406
        %v817 = vunpack.c.l.b16 %v407
        %v818 = vunpack.c.l.b16 %v408
        %v819 = vunpack.c.l.b16 %v409
        %v820 = vunpack.c.l.b16 %v410
        %v821 = vunpack.c.l.b16 %v411
        %v822 = vunpack.c.l.b16 %v412
        %v823 = vunpack.c.l.b16 %v413
        %v824 = vunpack.c.l.b16 %v414
        %v825 = vunpack.c.l.b16 %v415
        %v826 = vunpack.c.l.b16 %v416
        %v827 = vunpack.c.l.b16 %v417
        %v828 = vunpack.c.l.b16 %v418
        %v829 = vunpack.c.l.b16 %v419
        %v830 = vunpack.c.l.b16 %v420
        %v831 = vunpack.c.l.b16 %v421
        %v832 = vunpack.c.l.b16 %v422
        %v833 = vunpack.c.l.b16 %v423
        %v834 = vunpack.c.l.b16 %v424
        %v835 = vunpack.c.l.b16 %v425
        %v836 = vunpack.c.l.b16 %v426
        %v837 = vunpack.c.l.b16 %v427
        %v838 = vunpack.c.l.b16 %v428
        %v839 = vunpack.c.l.b16 %v429
        %v840 = vunpack.c.l.b16 %v430
        %v841 = vunpack.c.l.b16 %v431
        %v842 = vunpack.c.l.b16 %v432
        %v843 = vunpack.c.l.b16 %v433
        %v844 = vunpack.c.l.b16 %v434
        %v845 = vunpack.c.l.b16 %v435
        %v846 = vunpack.c.l.b16 %v436
        %v847 = vunpack.c.l.b16 %v437
        %v848 = vunpack.c.l.b16 %v438
        %v849 = vunpack.c.l.b16 %v439
        %v850 = vunpack.c.l.b16 %v440
        %v851 = vunpack.c.l.b16 %v441
        %v852 = vunpack.c.l.b16 %v442
        %v853 = vunpack.c.l.b16 %v443
        %v854 = vunpack.c.l.b16 %v444
        %v855 = vunpack.c.l.b16 %v445
        %v856 = vunpack.c.l.b16 %v446
        %v857 = vunpack.c.l.b16 %v447
        %v858 = vunpack.c.l.b16 %v448
        %v859 = vunpack.c.l.b16 %v449
        %v860 = vunpack.c.l.b16 %v450
        %v861 = vunpack.c.l.b16 %v451
        %v862 = vunpack.c.l.b16 %v452
        %v863 = vunpack.c.l.b16 %v453
        %v864 = vpack.c.b16 %v661, %v660
        %v865 = vpack.c.b16 %v663, %v662
        %v866 = vpack.c.b16 %v665, %v664
        %v867 = vpack.c.b16 %v667, %v666
        %v868 = vpack.c.b16 %v669, %v668
        %v869 = vpack.c.b16 %v671, %v670
        %v870 = vpack.c.b16 %v673, %v672
        %v871 = vpack.c.b16 %v675, %v674
        %v872 = vpack.c.b16 %v677, %v676
        %v873 = vpack.c.b16 %v679, %v678
        %v874 = vpack.c.b16 %v681, %v680
        %v875 = vpack.c.b16 %v683, %v682
        %v876 = vpack.c.b16 %v685, %v684
        %v877 = vpack.c.b16 %v687, %v686
        %v878 = vpack.c.b16 %v689, %v688
        %v879 = vpack.c.b16 %v691, %v690
        %v880 = vpack.c.b16 %v693, %v692
        %v881 = vpack.c.b16 %v695, %v694
        %v882 = vpack.c.b16 %v697, %v696
        %v883 = vpack.c.b16 %v699, %v698
        %v884 = vpack.c.b16 %v701, %v700
        %v885 = vpack.c.b16 %v703, %v702
        %v886 = vpack.c.b16 %v705, %v704
        %v887 = vpack.c.b16 %v707, %v706
        %v888 = vpack.c.b16 %v709, %v708
        %v889 = vpack.c.b16 %v711, %v710
        %v890 = vpack.c.b16 %v713, %v712
        %v891 = vpack.c.b16 %v715, %v714
        %v892 = vpack.c.b16 %v717, %v716
        %v893 = vpack.c.b16 %v719, %v718
        %v894 = vpack.c.b16 %v721, %v720
        %v895 = vpack.c.b16 %v723, %v722
        %v896 = vpack.c.b16 %v725, %v724
        %v897 = vpack.c.b16 %v727, %v726
        %v898 = vpack.c.b16 %v729, %v728
        %v899 = vpack.c.b16 %v731, %v730
        %v900 = vpack.c.b16 %v733, %v732
        %v901 = vpack.c.b16 %v735, %v734
        %v902 = vpack.c.b16 %v737, %v736
        %v903 = vpack.c.b16 %v739, %v738
        %v904 = vpack.c.b16 %v741, %v740
        %v905 = vpack.c.b16 %v743, %v742
        %v906 = vpack.c.b16 %v745, %v744
        %v907 = vpack.c.b16 %v747, %v746
        %v908 = vpack.c.b16 %v749, %v748
        %v909 = vpack.c.b16 %v751, %v750
        %v910 = vpack.c.b16 %v753, %v752
        %v911 = vpack.c.b16 %v755, %v754
        %v912 = vpack.c.b16 %v757, %v756
        %v913 = vpack.c.b16 %v759, %v758
        %v914 = vpack.c.b16 %v761, %v760
        %v915 = vpack.c.b16 %v763, %v762
        %v916 = vpack.c.b16 %v765, %v764
        %v917 = vpack.c.b16 %v767, %v766
        %v918 = vpack.c.b16 %v769, %v768
        %v919 = vpack.c.b16 %v771, %v770
        %v920 = vpack.c.b16 %v773, %v772
        %v921 = vpack.c.b16 %v775, %v774
        %v922 = vpack.c.b16 %v777, %v776
        %v923 = vpack.c.b16 %v779, %v778
        %v924 = vpack.c.b16 %v781, %v780
        %v925 = vpack.c.b16 %v783, %v782
        %v926 = vpack.c.b16 %v785, %v784
        %v927 = vpack.c.b16 %v787, %v786
        %v928 = vpack.c.b16 %v789, %v788
        %v929 = vpack.c.b16 %v791, %v790
        %v930 = vpack.c.b16 %v793, %v792
        %v931 = vpack.c.b16 %v795, %v794
        %v932 = vpack.c.b16 %v797, %v796
        %v933 = vpack.c.b16 %v799, %v798
        %v934 = vpack.c.b16 %v801, %v800
        %v935 = vpack.c.b16 %v803, %v802
        %v936 = vpack.c.b16 %v805, %v804
        %v937 = vpack.c.b16 %v807, %v806
        %v938 = vpack.c.b16 %v809, %v808
        %v939 = vpack.c.b16 %v811, %v810
        %v940 = vpack.c.b16 %v813, %v812
        %v941 = vpack.c.b16 %v815, %v814
        %v942 = vpack.c.b16 %v817, %v816
        %v943 = vpack.c.b16 %v819, %v818
        %v944 = vpack.c.b16 %v821, %v820
        %v945 = vpack.c.b16 %v823, %v822
        %v946 = vpack.c.b16 %v825, %v824
        %v947 = vpack.c.b16 %v827, %v826
        %v948 = vpack.c.b16 %v829, %v828
        %v949 = vpack.c.b16 %v831, %v830
        %v950 = vpack.c.b16 %v833, %v832
        %v951 = vpack.c.b16 %v835, %v834
        %v952 = vpack.c.b16 %v837, %v836
        %v953 = vpack.c.b16 %v839, %v838
        %v954 = vpack.c.b16 %v841, %v840
        %v955 = vpack.c.b16 %v843, %v842
        %v956 = vpack.c.b16 %v845, %v844
        %v957 = vpack.c.b16 %v847, %v846
        %v958 = vpack.c.b16 %v849, %v848
        %v959 = vpack.c.b16 %v851, %v850
        %v960 = vpack.c.b16 %v853, %v852
        %v961 = vpack.c.b16 %v855, %v854
        %v962 = vpack.c.b16 %v857, %v856
        %v963 = vpack.c.b16 %v859, %v858
        %v964 = vpack.c.b16 %v861, %v860
        %v965 = vpack.c.b16 %v863, %v862
        %v968 = vunpack.c.l.b16 %v454
        %v969 = vunpack.c.l.b16 %v455
        %v970 = vpack.c.b16 %v969, %v968
        %vm971 = vcmask 80896
        %v973 = vsel %vm971, %v864, 0
        %v976 = vsel %vm971, %v865, 0
        %v979 = vsel %vm971, %v866, 0
        %v982 = vsel %vm971, %v867, 0
        %v985 = vsel %vm971, %v868, 0
        %v988 = vsel %vm971, %v869, 0
        %v991 = vsel %vm971, %v870, 0
        %v994 = vsel %vm971, %v871, 0
        %v997 = vsel %vm971, %v872, 0
        %v1000 = vsel %vm971, %v873, 0
        %v1003 = vsel %vm971, %v874, 0
        %v1006 = vsel %vm971, %v875, 0
        %v1009 = vsel %vm971, %v876, 0
        %v1012 = vsel %vm971, %v877, 0
        %v1015 = vsel %vm971, %v878, 0
        %v1018 = vsel %vm971, %v879, 0
        %v1021 = vsel %vm971, %v880, 0
        %v1024 = vsel %vm971, %v881, 0
        %v1027 = vsel %vm971, %v882, 0
        %v1030 = vsel %vm971, %v883, 0
        %v1033 = vsel %vm971, %v884, 0
        %v1036 = vsel %vm971, %v885, 0
        %v1039 = vsel %vm971, %v886, 0
        %v1042 = vsel %vm971, %v887, 0
        %v1045 = vsel %vm971, %v888, 0
        %v1048 = vsel %vm971, %v889, 0
        %v1051 = vsel %vm971, %v890, 0
        %v1054 = vsel %vm971, %v891, 0
        %v1057 = vsel %vm971, %v892, 0
        %v1060 = vsel %vm971, %v893, 0
        %v1063 = vsel %vm971, %v894, 0
        %v1066 = vsel %vm971, %v895, 0
        %v1069 = vsel %vm971, %v896, 0
        %v1072 = vsel %vm971, %v897, 0
        %v1075 = vsel %vm971, %v898, 0
        %v1078 = vsel %vm971, %v899, 0
        %v1081 = vsel %vm971, %v900, 0
        %v1084 = vsel %vm971, %v901, 0
        %v1087 = vsel %vm971, %v902, 0
        %v1090 = vsel %vm971, %v903, 0
        %v1093 = vsel %vm971, %v904, 0
        %v1096 = vsel %vm971, %v905, 0
        %v1099 = vsel %vm971, %v906, 0
        %v1102 = vsel %vm971, %v907, 0
        %v1105 = vsel %vm971, %v908, 0
        %v1108 = vsel %vm971, %v909, 0
        %v1111 = vsel %vm971, %v910, 0
        %v1114 = vsel %vm971, %v911, 0
        %v1117 = vsel %vm971, %v912, 0
        %v1120 = vsel %vm971, %v913, 0
        %v1123 = vsel %vm971, %v914, 0
        %v1126 = vsel %vm971, %v915, 0
        %v1129 = vsel %vm971, %v916, 0
        %v1132 = vsel %vm971, %v917, 0
        %v1135 = vsel %vm971, %v918, 0
        %v1138 = vsel %vm971, %v919, 0
        %v1141 = vsel %vm971, %v920, 0
        %v1144 = vsel %vm971, %v921, 0
        %v1147 = vsel %vm971, %v922, 0
        %v1150 = vsel %vm971, %v923, 0
        %v1153 = vsel %vm971, %v924, 0
        %v1156 = vsel %vm971, %v925, 0
        %v1159 = vsel %vm971, %v926, 0
        %v1162 = vsel %vm971, %v927, 0
        %v1165 = vsel %vm971, %v928, 0
        %v1168 = vsel %vm971, %v929, 0
        %v1171 = vsel %vm971, %v930, 0
        %v1174 = vsel %vm971, %v931, 0
        %v1177 = vsel %vm971, %v932, 0
        %v1180 = vsel %vm971, %v933, 0
        %v1183 = vsel %vm971, %v934, 0
        %v1186 = vsel %vm971, %v935, 0
        %v1189 = vsel %vm971, %v936, 0
        %v1192 = vsel %vm971, %v937, 0
        %v1195 = vsel %vm971, %v938, 0
        %v1198 = vsel %vm971, %v939, 0
        %v1201 = vsel %vm971, %v940, 0
        %v1204 = vsel %vm971, %v941, 0
        %v1207 = vsel %vm971, %v942, 0
        %v1210 = vsel %vm971, %v943, 0
        %v1213 = vsel %vm971, %v944, 0
        %v1216 = vsel %vm971, %v945, 0
        %v1219 = vsel %vm971, %v946, 0
        %v1222 = vsel %vm971, %v947, 0
        %v1225 = vsel %vm971, %v948, 0
        %v1228 = vsel %vm971, %v949, 0
        %v1231 = vsel %vm971, %v950, 0
        %v1234 = vsel %vm971, %v951, 0
        %v1237 = vsel %vm971, %v952, 0
        %v1240 = vsel %vm971, %v953, 0
        %v1243 = vsel %vm971, %v954, 0
        %v1246 = vsel %vm971, %v955, 0
        %v1249 = vsel %vm971, %v956, 0
        %v1252 = vsel %vm971, %v957, 0
        %v1255 = vsel %vm971, %v958, 0
        %v1258 = vsel %vm971, %v959, 0
        %v1261 = vsel %vm971, %v960, 0
        %v1264 = vsel %vm971, %v961, 0
        %v1267 = vsel %vm971, %v962, 0
        %v1270 = vsel %vm971, %v963, 0
        %v1273 = vsel %vm971, %v964, 0
        %v1276 = vsel %vm971, %v965, 0
        %vm1278 = vcmask 1044480
        %v1280 = vsel %vm1278, %v970, 0
        %1282 = vmatprep.subr.bf16.mxu0 0
        %1283 = vmatpush1.bf16.msra.mxu0 %v1280
        %1284 = vmatprep.subr.bf16.mxu0 0
        %1285 = vmatpush1.bf16.msra.mxu0 0
        %1286 = vmatprep.subr.bf16.mxu0 0
        %1287 = vmatpush1.bf16.msra.mxu0 0
        %1288 = vmatprep.subr.bf16.mxu0 0
        %1289 = vmatpush1.bf16.msra.mxu0 0
        %1290 = vmatprep.subr.bf16.mxu0 0
        %1291 = vmatpush1.bf16.msra.mxu0 0
        %1292 = vmatprep.subr.bf16.mxu0 0
        %1293 = vmatpush1.bf16.msra.mxu0 0
        %1294 = vmatprep.subr.bf16.mxu0 0
        %1295 = vmatpush1.bf16.msra.mxu0 0
        %1296 = vmatprep.subr.bf16.mxu0 0
        %1297 = vmatpush1.bf16.msra.mxu0 0
        %1298 = vmatprep.subr.bf16.mxu0 0
        %1299 = vmatpush1.bf16.msra.mxu0 0
        %1300 = vmatprep.subr.bf16.mxu0 0
        %1301 = vmatpush1.bf16.msra.mxu0 0
        %1302 = vmatprep.subr.bf16.mxu0 0
        %1303 = vmatpush1.bf16.msra.mxu0 0
        %1304 = vmatprep.subr.bf16.mxu0 0
        %1305 = vmatpush1.bf16.msra.mxu0 0
        %1306 = vmatprep.subr.bf16.mxu0 0
        %1307 = vmatpush1.bf16.msra.mxu0 0
        %1308 = vmatprep.subr.bf16.mxu0 0
        %1309 = vmatpush1.bf16.msra.mxu0 0
        %1310 = vmatprep.subr.bf16.mxu0 0
        %1311 = vmatpush1.bf16.msra.mxu0 0
        %1312 = vmatprep.subr.bf16.mxu0 0
        %1313 = vmatpush1.bf16.msra.mxu0 0
        %1314 = vmatprep.mubr.bf16.mxu0 0
        %1315 = vmatmul.mubr.bf16.gmra.mrb[0].mxu0 %v973
        %v1316 = vpop.f32.mrb[0].mxu0
        %v1317 = vadd.f32 0.0, %v1316
        %v1318 = vpop.f32.mrb[0].mxu0
        %v1319 = vpop.f32.mrb[0].mxu0
        %v1320 = vadd.f32 0.0, %v1319
        %v1321 = vpop.f32.mrb[0].mxu0
        %1322 = vmatprep.mubr.bf16.mxu0 0
        %1323 = vmatmul.mubr.bf16.gmra.mrb[0].mxu0 %v976
        %v1324 = vpop.f32.mrb[0].mxu0
        %v1325 = vadd.f32 0.0, %v1324
        %v1326 = vpop.f32.mrb[0].mxu0
        %v1327 = vpop.f32.mrb[0].mxu0
        %v1328 = vadd.f32 0.0, %v1327
        %v1329 = vpop.f32.mrb[0].mxu0
        %1330 = vmatprep.mubr.bf16.mxu0 0
        %1331 = vmatmul.mubr.bf16.gmra.mrb[0].mxu0 %v979
        %v1332 = vpop.f32.mrb[0].mxu0
        %v1333 = vadd.f32 0.0, %v1332
        %v1334 = vpop.f32.mrb[0].mxu0
        %v1335 = vpop.f32.mrb[0].mxu0
        %v1336 = vadd.f32 0.0, %v1335
        %v1337 = vpop.f32.mrb[0].mxu0
        %1338 = vmatprep.mubr.bf16.mxu0 0
        %1339 = vmatmul.mubr.bf16.gmra.mrb[0].mxu0 %v982
        %v1340 = vpop.f32.mrb[0].mxu0
        %v1341 = vadd.f32 0.0, %v1340
        %v1342 = vpop.f32.mrb[0].mxu0
        %v1343 = vpop.f32.mrb[0].mxu0
        %v1344 = vadd.f32 0.0, %v1343
        %v1345 = vpop.f32.mrb[0].mxu0
        %1346 = vmatprep.mubr.bf16.mxu0 0
        %1347 = vmatmul.mubr.bf16.gmra.mrb[0].mxu0 %v985
        %v1348 = vpop.f32.mrb[0].mxu0
        %v1349 = vadd.f32 0.0, %v1348
        %v1350 = vpop.f32.mrb[0].mxu0
        %v1351 = vpop.f32.mrb[0].mxu0
        %v1352 = vadd.f32 0.0, %v1351
        %v1353 = vpop.f32.mrb[0].mxu0
        %1354 = vmatprep.mubr.bf16.mxu0 0
        %1355 = vmatmul.mubr.bf16.gmra.mrb[0].mxu0 %v988
        %v1356 = vpop.f32.mrb[0].mxu0
        %v1357 = vadd.f32 0.0, %v1356
        %v1358 = vpop.f32.mrb[0].mxu0
        %v1359 = vpop.f32.mrb[0].mxu0
        %v1360 = vadd.f32 0.0, %v1359
        %v1361 = vpop.f32.mrb[0].mxu0
        %1362 = vmatprep.mubr.bf16.mxu0 0
        %1363 = vmatmul.mubr.bf16.gmra.mrb[0].mxu0 %v991
        %v1364 = vpop.f32.mrb[0].mxu0
        %v1365 = vadd.f32 0.0, %v1364
        %v1366 = vpop.f32.mrb[0].mxu0
        %v1367 = vpop.f32.mrb[0].mxu0
        %v1368 = vadd.f32 0.0, %v1367
        %v1369 = vpop.f32.mrb[0].mxu0
        %1370 = vmatprep.mubr.bf16.mxu0 0
        %1371 = vmatmul.mubr.bf16.gmra.mrb[0].mxu0 %v994
        %v1372 = vpop.f32.mrb[0].mxu0
        %v1373 = vadd.f32 0.0, %v1372
        %v1374 = vpop.f32.mrb[0].mxu0
        %v1375 = vpop.f32.mrb[0].mxu0
        %v1376 = vadd.f32 0.0, %v1375
        %v1377 = vpop.f32.mrb[0].mxu0
        %1378 = vmatprep.mubr.bf16.mxu0 0
        %1379 = vmatmul.mubr.bf16.gmra.mrb[0].mxu0 %v997
        %v1380 = vpop.f32.mrb[0].mxu0
        %v1381 = vadd.f32 0.0, %v1380
        %v1382 = vpop.f32.mrb[0].mxu0
        %v1383 = vpop.f32.mrb[0].mxu0
        %v1384 = vadd.f32 0.0, %v1383
        %v1385 = vpop.f32.mrb[0].mxu0
        %1386 = vmatprep.mubr.bf16.mxu0 0
        %1387 = vmatmul.mubr.bf16.gmra.mrb[0].mxu0 %v1000
        %v1388 = vpop.f32.mrb[0].mxu0
        %v1389 = vadd.f32 0.0, %v1388
        %v1390 = vpop.f32.mrb[0].mxu0
        %v1391 = vpop.f32.mrb[0].mxu0
        %v1392 = vadd.f32 0.0, %v1391
        %v1393 = vpop.f32.mrb[0].mxu0
        %1394 = vmatprep.mubr.bf16.mxu0 0
        %1395 = vmatmul.mubr.bf16.gmra.mrb[0].mxu0 %v1003
        %v1396 = vpop.f32.mrb[0].mxu0
        %v1397 = vadd.f32 0.0, %v1396
        %v1398 = vpop.f32.mrb[0].mxu0
        %v1399 = vpop.f32.mrb[0].mxu0
        %v1400 = vadd.f32 0.0, %v1399
        %v1401 = vpop.f32.mrb[0].mxu0
        %1402 = vmatprep.mubr.bf16.mxu0 0
        %1403 = vmatmul.mubr.bf16.gmra.mrb[0].mxu0 %v1006
        %v1404 = vpop.f32.mrb[0].mxu0
        %v1405 = vadd.f32 0.0, %v1404
        %v1406 = vpop.f32.mrb[0].mxu0
        %v1407 = vpop.f32.mrb[0].mxu0
        %v1408 = vadd.f32 0.0, %v1407
        %v1409 = vpop.f32.mrb[0].mxu0
        %1410 = vmatprep.mubr.bf16.mxu0 0
        %1411 = vmatmul.mubr.bf16.gmra.mrb[0].mxu0 %v1009
        %v1412 = vpop.f32.mrb[0].mxu0
        %v1413 = vadd.f32 0.0, %v1412
        %v1414 = vpop.f32.mrb[0].mxu0
        %v1415 = vpop.f32.mrb[0].mxu0
        %v1416 = vadd.f32 0.0, %v1415
        %v1417 = vpop.f32.mrb[0].mxu0
        %1418 = vmatprep.mubr.bf16.mxu0 0
        %1419 = vmatmul.mubr.bf16.gmra.mrb[0].mxu0 %v1012
        %v1420 = vpop.f32.mrb[0].mxu0
        %v1421 = vadd.f32 0.0, %v1420
        %v1422 = vpop.f32.mrb[0].mxu0
        %v1423 = vpop.f32.mrb[0].mxu0
        %v1424 = vadd.f32 0.0, %v1423
        %v1425 = vpop.f32.mrb[0].mxu0
        %1426 = vmatprep.mubr.bf16.mxu0 0
        %1427 = vmatmul.mubr.bf16.gmra.mrb[0].mxu0 %v1015
        %v1428 = vpop.f32.mrb[0].mxu0
        %v1429 = vadd.f32 0.0, %v1428
        %v1430 = vpop.f32.mrb[0].mxu0
        %v1431 = vpop.f32.mrb[0].mxu0
        %v1432 = vadd.f32 0.0, %v1431
        %v1433 = vpop.f32.mrb[0].mxu0
        %1434 = vmatprep.mubr.bf16.mxu0 0
        %1435 = vmatmul.mubr.bf16.gmra.mrb[0].mxu0 %v1018
        %v1436 = vpop.f32.mrb[0].mxu0
        %v1437 = vadd.f32 0.0, %v1436
        %v1438 = vpop.f32.mrb[0].mxu0
        %v1439 = vpop.f32.mrb[0].mxu0
        %v1440 = vadd.f32 0.0, %v1439
        %v1441 = vpop.f32.mrb[0].mxu0
        %1442 = vmatprep.mubr.bf16.mxu0 0
        %1443 = vmatmul.mubr.bf16.gmra.mrb[0].mxu0 %v1021
        %v1444 = vpop.f32.mrb[0].mxu0
        %v1445 = vadd.f32 0.0, %v1444
        %v1446 = vpop.f32.mrb[0].mxu0
        %v1447 = vpop.f32.mrb[0].mxu0
        %v1448 = vadd.f32 0.0, %v1447
        %v1449 = vpop.f32.mrb[0].mxu0
        %1450 = vmatprep.mubr.bf16.mxu0 0
        %1451 = vmatmul.mubr.bf16.gmra.mrb[0].mxu0 %v1024
        %v1452 = vpop.f32.mrb[0].mxu0
        %v1453 = vadd.f32 0.0, %v1452
        %v1454 = vpop.f32.mrb[0].mxu0
        %v1455 = vpop.f32.mrb[0].mxu0
        %v1456 = vadd.f32 0.0, %v1455
        %v1457 = vpop.f32.mrb[0].mxu0
        %1458 = vmatprep.mubr.bf16.mxu0 0
        %1459 = vmatmul.mubr.bf16.gmra.mrb[0].mxu0 %v1027
        %v1460 = vpop.f32.mrb[0].mxu0
        %v1461 = vadd.f32 0.0, %v1460
        %v1462 = vpop.f32.mrb[0].mxu0
        %v1463 = vpop.f32.mrb[0].mxu0
        %v1464 = vadd.f32 0.0, %v1463
        %v1465 = vpop.f32.mrb[0].mxu0
        %1466 = vmatprep.mubr.bf16.mxu0 0
        %1467 = vmatmul.mubr.bf16.gmra.mrb[0].mxu0 %v1030
        %v1468 = vpop.f32.mrb[0].mxu0
        %v1469 = vadd.f32 0.0, %v1468
        %v1470 = vpop.f32.mrb[0].mxu0
        %v1471 = vpop.f32.mrb[0].mxu0
        %v1472 = vadd.f32 0.0, %v1471
        %v1473 = vpop.f32.mrb[0].mxu0
        %1474 = vmatprep.mubr.bf16.mxu0 0
        %1475 = vmatmul.mubr.bf16.gmra.mrb[0].mxu0 %v1033
        %v1476 = vpop.f32.mrb[0].mxu0
        %v1477 = vadd.f32 0.0, %v1476
        %v1478 = vpop.f32.mrb[0].mxu0
        %v1479 = vpop.f32.mrb[0].mxu0
        %v1480 = vadd.f32 0.0, %v1479
        %v1481 = vpop.f32.mrb[0].mxu0
        %1482 = vmatprep.mubr.bf16.mxu0 0
        %1483 = vmatmul.mubr.bf16.gmra.mrb[0].mxu0 %v1036
        %v1484 = vpop.f32.mrb[0].mxu0
        %v1485 = vadd.f32 0.0, %v1484
        %v1486 = vpop.f32.mrb[0].mxu0
        %v1487 = vpop.f32.mrb[0].mxu0
        %v1488 = vadd.f32 0.0, %v1487
        %v1489 = vpop.f32.mrb[0].mxu0
        %1490 = vmatprep.mubr.bf16.mxu0 0
        %1491 = vmatmul.mubr.bf16.gmra.mrb[0].mxu0 %v1039
        %v1492 = vpop.f32.mrb[0].mxu0
        %v1493 = vadd.f32 0.0, %v1492
        %v1494 = vpop.f32.mrb[0].mxu0
        %v1495 = vpop.f32.mrb[0].mxu0
        %v1496 = vadd.f32 0.0, %v1495
        %v1497 = vpop.f32.mrb[0].mxu0
        %1498 = vmatprep.mubr.bf16.mxu0 0
        %1499 = vmatmul.mubr.bf16.gmra.mrb[0].mxu0 %v1042
        %v1500 = vpop.f32.mrb[0].mxu0
        %v1501 = vadd.f32 0.0, %v1500
        %v1502 = vpop.f32.mrb[0].mxu0
        %v1503 = vpop.f32.mrb[0].mxu0
        %v1504 = vadd.f32 0.0, %v1503
        %v1505 = vpop.f32.mrb[0].mxu0
        %1506 = vmatprep.mubr.bf16.mxu0 0
        %1507 = vmatmul.mubr.bf16.gmra.mrb[0].mxu0 %v1045
        %v1508 = vpop.f32.mrb[0].mxu0
        %v1509 = vadd.f32 0.0, %v1508
        %v1510 = vpop.f32.mrb[0].mxu0
        %v1511 = vpop.f32.mrb[0].mxu0
        %v1512 = vadd.f32 0.0, %v1511
        %v1513 = vpop.f32.mrb[0].mxu0
        %1514 = vmatprep.mubr.bf16.mxu0 0
        %1515 = vmatmul.mubr.bf16.gmra.mrb[0].mxu0 %v1048
        %v1516 = vpop.f32.mrb[0].mxu0
        %v1517 = vadd.f32 0.0, %v1516
        %v1518 = vpop.f32.mrb[0].mxu0
        %v1519 = vpop.f32.mrb[0].mxu0
        %v1520 = vadd.f32 0.0, %v1519
        %v1521 = vpop.f32.mrb[0].mxu0
        %1522 = vmatprep.mubr.bf16.mxu0 0
        %1523 = vmatmul.mubr.bf16.gmra.mrb[0].mxu0 %v1051
        %v1524 = vpop.f32.mrb[0].mxu0
        %v1525 = vadd.f32 0.0, %v1524
        %v1526 = vpop.f32.mrb[0].mxu0
        %v1527 = vpop.f32.mrb[0].mxu0
        %v1528 = vadd.f32 0.0, %v1527
        %v1529 = vpop.f32.mrb[0].mxu0
        %1530 = vmatprep.mubr.bf16.mxu0 0
        %1531 = vmatmul.mubr.bf16.gmra.mrb[0].mxu0 %v1054
        %v1532 = vpop.f32.mrb[0].mxu0
        %v1533 = vadd.f32 0.0, %v1532
        %v1534 = vpop.f32.mrb[0].mxu0
        %v1535 = vpop.f32.mrb[0].mxu0
        %v1536 = vadd.f32 0.0, %v1535
        %v1537 = vpop.f32.mrb[0].mxu0
        %1538 = vmatprep.mubr.bf16.mxu0 0
        %1539 = vmatmul.mubr.bf16.gmra.mrb[0].mxu0 %v1057
        %v1540 = vpop.f32.mrb[0].mxu0
        %v1541 = vadd.f32 0.0, %v1540
        %v1542 = vpop.f32.mrb[0].mxu0
        %v1543 = vpop.f32.mrb[0].mxu0
        %v1544 = vadd.f32 0.0, %v1543
        %v1545 = vpop.f32.mrb[0].mxu0
        %1546 = vmatprep.mubr.bf16.mxu0 0
        %1547 = vmatmul.mubr.bf16.gmra.mrb[0].mxu0 %v1060
        %v1548 = vpop.f32.mrb[0].mxu0
        %v1549 = vadd.f32 0.0, %v1548
        %v1550 = vpop.f32.mrb[0].mxu0
        %v1551 = vpop.f32.mrb[0].mxu0
        %v1552 = vadd.f32 0.0, %v1551
        %v1553 = vpop.f32.mrb[0].mxu0
        %1554 = vmatprep.mubr.bf16.mxu0 0
        %1555 = vmatmul.mubr.bf16.gmra.mrb[0].mxu0 %v1063
        %v1556 = vpop.f32.mrb[0].mxu0
        %v1557 = vadd.f32 0.0, %v1556
        %v1558 = vpop.f32.mrb[0].mxu0
        %v1559 = vpop.f32.mrb[0].mxu0
        %v1560 = vadd.f32 0.0, %v1559
        %v1561 = vpop.f32.mrb[0].mxu0
        %1562 = vmatprep.mubr.bf16.mxu0 0
        %1563 = vmatmul.mubr.bf16.gmra.mrb[0].mxu0 %v1066
        %v1564 = vpop.f32.mrb[0].mxu0
        %v1565 = vadd.f32 0.0, %v1564
        %v1566 = vpop.f32.mrb[0].mxu0
        %v1567 = vpop.f32.mrb[0].mxu0
        %v1568 = vadd.f32 0.0, %v1567
        %v1569 = vpop.f32.mrb[0].mxu0
        %1570 = vmatprep.mubr.bf16.mxu0 0
        %1571 = vmatmul.mubr.bf16.gmra.mrb[0].mxu0 %v1069
        %v1572 = vpop.f32.mrb[0].mxu0
        %v1573 = vadd.f32 0.0, %v1572
        %v1574 = vpop.f32.mrb[0].mxu0
        %v1575 = vpop.f32.mrb[0].mxu0
        %v1576 = vadd.f32 0.0, %v1575
        %v1577 = vpop.f32.mrb[0].mxu0
        %1578 = vmatprep.mubr.bf16.mxu0 0
        %1579 = vmatmul.mubr.bf16.gmra.mrb[0].mxu0 %v1072
        %v1580 = vpop.f32.mrb[0].mxu0
        %v1581 = vpop.f32.mrb[0].mxu0
        %v1582 = vpop.f32.mrb[0].mxu0
        %v1583 = vpop.f32.mrb[0].mxu0
        %1584 = vmatprep.mubr.bf16.mxu0 0
        %1585 = vmatmul.mubr.bf16.gmra.mrb[0].mxu0 %v1075
        %v1586 = vpop.f32.mrb[0].mxu0
        %v1587 = vadd.f32 0.0, %v1586
        %v1588 = vpop.f32.mrb[0].mxu0
        %v1589 = vpop.f32.mrb[0].mxu0
        %v1590 = vadd.f32 0.0, %v1589
        %v1591 = vpop.f32.mrb[0].mxu0
        %1592 = vmatprep.mubr.bf16.mxu0 0
        %1593 = vmatmul.mubr.bf16.gmra.mrb[0].mxu0 %v1078
        %v1594 = vpop.f32.mrb[0].mxu0
        %v1595 = vadd.f32 0.0, %v1594
        %v1596 = vpop.f32.mrb[0].mxu0
        %v1597 = vpop.f32.mrb[0].mxu0
        %v1598 = vadd.f32 0.0, %v1597
        %v1599 = vpop.f32.mrb[0].mxu0
        %1600 = vmatprep.mubr.bf16.mxu0 0
        %1601 = vmatmul.mubr.bf16.gmra.mrb[0].mxu0 %v1081
        %v1602 = vpop.f32.mrb[0].mxu0
        %v1603 = vadd.f32 0.0, %v1602
        %v1604 = vpop.f32.mrb[0].mxu0
        %v1605 = vpop.f32.mrb[0].mxu0
        %v1606 = vadd.f32 0.0, %v1605
        %v1607 = vpop.f32.mrb[0].mxu0
        %1608 = vmatprep.mubr.bf16.mxu0 0
        %1609 = vmatmul.mubr.bf16.gmra.mrb[0].mxu0 %v1084
        %v1610 = vpop.f32.mrb[0].mxu0
        %v1611 = vadd.f32 0.0, %v1610
        %v1612 = vpop.f32.mrb[0].mxu0
        %v1613 = vpop.f32.mrb[0].mxu0
        %v1614 = vadd.f32 0.0, %v1613
        %v1615 = vpop.f32.mrb[0].mxu0
        %1616 = vmatprep.mubr.bf16.mxu0 0
        %1617 = vmatmul.mubr.bf16.gmra.mrb[0].mxu0 %v1087
        %v1618 = vpop.f32.mrb[0].mxu0
        %v1619 = vadd.f32 0.0, %v1618
        %v1620 = vpop.f32.mrb[0].mxu0
        %v1621 = vpop.f32.mrb[0].mxu0
        %v1622 = vadd.f32 0.0, %v1621
        %v1623 = vpop.f32.mrb[0].mxu0
        %1624 = vmatprep.mubr.bf16.mxu0 0
        %1625 = vmatmul.mubr.bf16.gmra.mrb[0].mxu0 %v1090
        %v1626 = vpop.f32.mrb[0].mxu0
        %v1627 = vadd.f32 0.0, %v1626
        %v1628 = vpop.f32.mrb[0].mxu0
        %v1629 = vpop.f32.mrb[0].mxu0
        %v1630 = vadd.f32 0.0, %v1629
        %v1631 = vpop.f32.mrb[0].mxu0
        %1632 = vmatprep.mubr.bf16.mxu0 0
        %1633 = vmatmul.mubr.bf16.gmra.mrb[0].mxu0 %v1093
        %v1634 = vpop.f32.mrb[0].mxu0
        %v1635 = vadd.f32 0.0, %v1634
        %v1636 = vpop.f32.mrb[0].mxu0
        %v1637 = vpop.f32.mrb[0].mxu0
        %v1638 = vadd.f32 0.0, %v1637
        %v1639 = vpop.f32.mrb[0].mxu0
        %1640 = vmatprep.mubr.bf16.mxu0 0
        %1641 = vmatmul.mubr.bf16.gmra.mrb[0].mxu0 %v1096
        %v1642 = vpop.f32.mrb[0].mxu0
        %v1643 = vadd.f32 0.0, %v1642
        %v1644 = vpop.f32.mrb[0].mxu0
        %v1645 = vpop.f32.mrb[0].mxu0
        %v1646 = vadd.f32 0.0, %v1645
        %v1647 = vpop.f32.mrb[0].mxu0
        %1648 = vmatprep.mubr.bf16.mxu0 0
        %1649 = vmatmul.mubr.bf16.gmra.mrb[0].mxu0 %v1099
        %v1650 = vpop.f32.mrb[0].mxu0
        %v1651 = vadd.f32 0.0, %v1650
        %v1652 = vpop.f32.mrb[0].mxu0
        %v1653 = vpop.f32.mrb[0].mxu0
        %v1654 = vadd.f32 0.0, %v1653
        %v1655 = vpop.f32.mrb[0].mxu0
        %1656 = vmatprep.mubr.bf16.mxu0 0
        %1657 = vmatmul.mubr.bf16.gmra.mrb[0].mxu0 %v1102
        %v1658 = vpop.f32.mrb[0].mxu0
        %v1659 = vadd.f32 0.0, %v1658
        %v1660 = vpop.f32.mrb[0].mxu0
        %v1661 = vpop.f32.mrb[0].mxu0
        %v1662 = vadd.f32 0.0, %v1661
        %v1663 = vpop.f32.mrb[0].mxu0
        %1664 = vmatprep.mubr.bf16.mxu0 0
        %1665 = vmatmul.mubr.bf16.gmra.mrb[0].mxu0 %v1105
        %v1666 = vpop.f32.mrb[0].mxu0
        %v1667 = vadd.f32 0.0, %v1666
        %v1668 = vpop.f32.mrb[0].mxu0
        %v1669 = vpop.f32.mrb[0].mxu0
        %v1670 = vadd.f32 0.0, %v1669
        %v1671 = vpop.f32.mrb[0].mxu0
        %1672 = vmatprep.mubr.bf16.mxu0 0
        %1673 = vmatmul.mubr.bf16.gmra.mrb[0].mxu0 %v1108
        %v1674 = vpop.f32.mrb[0].mxu0
        %v1675 = vadd.f32 0.0, %v1674
        %v1676 = vpop.f32.mrb[0].mxu0
        %v1677 = vpop.f32.mrb[0].mxu0
        %v1678 = vadd.f32 0.0, %v1677
        %v1679 = vpop.f32.mrb[0].mxu0
        %1680 = vmatprep.mubr.bf16.mxu0 0
        %1681 = vmatmul.mubr.bf16.gmra.mrb[0].mxu0 %v1111
        %v1682 = vpop.f32.mrb[0].mxu0
        %v1683 = vadd.f32 0.0, %v1682
        %v1684 = vpop.f32.mrb[0].mxu0
        %v1685 = vpop.f32.mrb[0].mxu0
        %v1686 = vadd.f32 0.0, %v1685
        %v1687 = vpop.f32.mrb[0].mxu0
        %1688 = vmatprep.mubr.bf16.mxu0 0
        %1689 = vmatmul.mubr.bf16.gmra.mrb[0].mxu0 %v1114
        %v1690 = vpop.f32.mrb[0].mxu0
        %v1691 = vadd.f32 0.0, %v1690
        %v1692 = vpop.f32.mrb[0].mxu0
        %v1693 = vpop.f32.mrb[0].mxu0
        %v1694 = vadd.f32 0.0, %v1693
        %v1695 = vpop.f32.mrb[0].mxu0
        %1696 = vmatprep.mubr.bf16.mxu0 0
        %1697 = vmatmul.mubr.bf16.gmra.mrb[0].mxu0 %v1117
        %v1698 = vpop.f32.mrb[0].mxu0
        %v1699 = vadd.f32 0.0, %v1698
        %v1700 = vpop.f32.mrb[0].mxu0
        %v1701 = vpop.f32.mrb[0].mxu0
        %v1702 = vadd.f32 0.0, %v1701
        %v1703 = vpop.f32.mrb[0].mxu0
        %1704 = vmatprep.mubr.bf16.mxu0 0
        %1705 = vmatmul.mubr.bf16.gmra.mrb[0].mxu0 %v1120
        %v1706 = vpop.f32.mrb[0].mxu0
        %v1707 = vadd.f32 0.0, %v1706
        %v1708 = vpop.f32.mrb[0].mxu0
        %v1709 = vpop.f32.mrb[0].mxu0
        %v1710 = vadd.f32 0.0, %v1709
        %v1711 = vpop.f32.mrb[0].mxu0
        %1712 = vmatprep.mubr.bf16.mxu0 0
        %1713 = vmatmul.mubr.bf16.gmra.mrb[0].mxu0 %v1123
        %v1714 = vpop.f32.mrb[0].mxu0
        %v1715 = vadd.f32 0.0, %v1714
        %v1716 = vpop.f32.mrb[0].mxu0
        %v1717 = vpop.f32.mrb[0].mxu0
        %v1718 = vadd.f32 0.0, %v1717
        %v1719 = vpop.f32.mrb[0].mxu0
        %1720 = vmatprep.mubr.bf16.mxu0 0
        %1721 = vmatmul.mubr.bf16.gmra.mrb[0].mxu0 %v1126
        %v1722 = vpop.f32.mrb[0].mxu0
        %v1723 = vadd.f32 0.0, %v1722
        %v1724 = vpop.f32.mrb[0].mxu0
        %v1725 = vpop.f32.mrb[0].mxu0
        %v1726 = vadd.f32 0.0, %v1725
        %v1727 = vpop.f32.mrb[0].mxu0
        %1728 = vmatprep.mubr.bf16.mxu0 0
        %1729 = vmatmul.mubr.bf16.gmra.mrb[0].mxu0 %v1129
        %v1730 = vpop.f32.mrb[0].mxu0
        %v1731 = vadd.f32 0.0, %v1730
        %v1732 = vpop.f32.mrb[0].mxu0
        %v1733 = vpop.f32.mrb[0].mxu0
        %v1734 = vadd.f32 0.0, %v1733
        %v1735 = vpop.f32.mrb[0].mxu0
        %1736 = vmatprep.mubr.bf16.mxu0 0
        %1737 = vmatmul.mubr.bf16.gmra.mrb[0].mxu0 %v1132
        %v1738 = vpop.f32.mrb[0].mxu0
        %v1739 = vadd.f32 0.0, %v1738
        %v1740 = vpop.f32.mrb[0].mxu0
        %v1741 = vpop.f32.mrb[0].mxu0
        %v1742 = vadd.f32 0.0, %v1741
        %v1743 = vpop.f32.mrb[0].mxu0
        %1744 = vmatprep.mubr.bf16.mxu0 0
        %1745 = vmatmul.mubr.bf16.gmra.mrb[0].mxu0 %v1135
        %v1746 = vpop.f32.mrb[0].mxu0
        %v1747 = vadd.f32 0.0, %v1746
        %v1748 = vpop.f32.mrb[0].mxu0
        %v1749 = vpop.f32.mrb[0].mxu0
        %v1750 = vadd.f32 0.0, %v1749
        %v1751 = vpop.f32.mrb[0].mxu0
        %1752 = vmatprep.mubr.bf16.mxu0 0
        %1753 = vmatmul.mubr.bf16.gmra.mrb[0].mxu0 %v1138
        %v1754 = vpop.f32.mrb[0].mxu0
        %v1755 = vadd.f32 0.0, %v1754
        %v1756 = vpop.f32.mrb[0].mxu0
        %v1757 = vpop.f32.mrb[0].mxu0
        %v1758 = vadd.f32 0.0, %v1757
        %v1759 = vpop.f32.mrb[0].mxu0
        %1760 = vmatprep.mubr.bf16.mxu0 0
        %1761 = vmatmul.mubr.bf16.gmra.mrb[0].mxu0 %v1141
        %v1762 = vpop.f32.mrb[0].mxu0
        %v1763 = vadd.f32 0.0, %v1762
        %v1764 = vpop.f32.mrb[0].mxu0
        %v1765 = vpop.f32.mrb[0].mxu0
        %v1766 = vadd.f32 0.0, %v1765
        %v1767 = vpop.f32.mrb[0].mxu0
        %1768 = vmatprep.mubr.bf16.mxu0 0
        %1769 = vmatmul.mubr.bf16.gmra.mrb[0].mxu0 %v1144
        %v1770 = vpop.f32.mrb[0].mxu0
        %v1771 = vadd.f32 0.0, %v1770
        %v1772 = vpop.f32.mrb[0].mxu0
        %v1773 = vpop.f32.mrb[0].mxu0
        %v1774 = vadd.f32 0.0, %v1773
        %v1775 = vpop.f32.mrb[0].mxu0
        %1776 = vmatprep.mubr.bf16.mxu0 0
        %1777 = vmatmul.mubr.bf16.gmra.mrb[0].mxu0 %v1147
        %v1778 = vpop.f32.mrb[0].mxu0
        %v1779 = vadd.f32 0.0, %v1778
        %v1780 = vpop.f32.mrb[0].mxu0
        %v1781 = vpop.f32.mrb[0].mxu0
        %v1782 = vadd.f32 0.0, %v1781
        %v1783 = vpop.f32.mrb[0].mxu0
        %1784 = vmatprep.mubr.bf16.mxu0 0
        %1785 = vmatmul.mubr.bf16.gmra.mrb[0].mxu0 %v1150
        %v1786 = vpop.f32.mrb[0].mxu0
        %v1787 = vadd.f32 0.0, %v1786
        %v1788 = vpop.f32.mrb[0].mxu0
        %v1789 = vpop.f32.mrb[0].mxu0
        %v1790 = vadd.f32 0.0, %v1789
        %v1791 = vpop.f32.mrb[0].mxu0
        %1792 = vmatprep.mubr.bf16.mxu0 0
        %1793 = vmatmul.mubr.bf16.gmra.mrb[0].mxu0 %v1153
        %v1794 = vpop.f32.mrb[0].mxu0
        %v1795 = vadd.f32 0.0, %v1794
        %v1796 = vpop.f32.mrb[0].mxu0
        %v1797 = vpop.f32.mrb[0].mxu0
        %v1798 = vadd.f32 0.0, %v1797
        %v1799 = vpop.f32.mrb[0].mxu0
        %1800 = vmatprep.mubr.bf16.mxu0 0
        %1801 = vmatmul.mubr.bf16.gmra.mrb[0].mxu0 %v1156
        %v1802 = vpop.f32.mrb[0].mxu0
        %v1803 = vadd.f32 0.0, %v1802
        %v1804 = vpop.f32.mrb[0].mxu0
        %v1805 = vpop.f32.mrb[0].mxu0
        %v1806 = vadd.f32 0.0, %v1805
        %v1807 = vpop.f32.mrb[0].mxu0
        %1808 = vmatprep.mubr.bf16.mxu0 0
        %1809 = vmatmul.mubr.bf16.gmra.mrb[0].mxu0 %v1159
        %v1810 = vpop.f32.mrb[0].mxu0
        %v1811 = vadd.f32 0.0, %v1810
        %v1812 = vpop.f32.mrb[0].mxu0
        %v1813 = vpop.f32.mrb[0].mxu0
        %v1814 = vadd.f32 0.0, %v1813
        %v1815 = vpop.f32.mrb[0].mxu0
        %1816 = vmatprep.mubr.bf16.mxu0 0
        %1817 = vmatmul.mubr.bf16.gmra.mrb[0].mxu0 %v1162
        %v1818 = vpop.f32.mrb[0].mxu0
        %v1819 = vadd.f32 0.0, %v1818
        %v1820 = vpop.f32.mrb[0].mxu0
        %v1821 = vpop.f32.mrb[0].mxu0
        %v1822 = vadd.f32 0.0, %v1821
        %v1823 = vpop.f32.mrb[0].mxu0
        %1824 = vmatprep.mubr.bf16.mxu0 0
        %1825 = vmatmul.mubr.bf16.gmra.mrb[0].mxu0 %v1165
        %v1826 = vpop.f32.mrb[0].mxu0
        %v1827 = vadd.f32 0.0, %v1826
        %v1828 = vpop.f32.mrb[0].mxu0
        %v1829 = vpop.f32.mrb[0].mxu0
        %v1830 = vadd.f32 0.0, %v1829
        %v1831 = vpop.f32.mrb[0].mxu0
        %1832 = vmatprep.mubr.bf16.mxu0 0
        %1833 = vmatmul.mubr.bf16.gmra.mrb[0].mxu0 %v1168
        %v1834 = vpop.f32.mrb[0].mxu0
        %v1835 = vadd.f32 0.0, %v1834
        %v1836 = vpop.f32.mrb[0].mxu0
        %v1837 = vpop.f32.mrb[0].mxu0
        %v1838 = vadd.f32 0.0, %v1837
        %v1839 = vpop.f32.mrb[0].mxu0
        %1840 = vmatprep.mubr.bf16.mxu0 0
        %1841 = vmatmul.mubr.bf16.gmra.mrb[0].mxu0 %v1171
        %v1842 = vpop.f32.mrb[0].mxu0
        %v1843 = vadd.f32 0.0, %v1842
        %v1844 = vpop.f32.mrb[0].mxu0
        %v1845 = vpop.f32.mrb[0].mxu0
        %v1846 = vadd.f32 0.0, %v1845
        %v1847 = vpop.f32.mrb[0].mxu0
        %1848 = vmatprep.mubr.bf16.mxu0 0
        %1849 = vmatmul.mubr.bf16.gmra.mrb[0].mxu0 %v1174
        %v1850 = vpop.f32.mrb[0].mxu0
        %v1851 = vpop.f32.mrb[0].mxu0
        %v1852 = vpop.f32.mrb[0].mxu0
        %v1853 = vpop.f32.mrb[0].mxu0
        %1854 = vmatprep.mubr.bf16.mxu0 0
        %1855 = vmatmul.mubr.bf16.gmra.mrb[0].mxu0 %v1177
        %v1856 = vpop.f32.mrb[0].mxu0
        %v1857 = vadd.f32 0.0, %v1856
        %v1858 = vpop.f32.mrb[0].mxu0
        %v1859 = vpop.f32.mrb[0].mxu0
        %v1860 = vadd.f32 0.0, %v1859
        %v1861 = vpop.f32.mrb[0].mxu0
        %1862 = vmatprep.mubr.bf16.mxu0 0
        %1863 = vmatmul.mubr.bf16.gmra.mrb[0].mxu0 %v1180
        %v1864 = vpop.f32.mrb[0].mxu0
        %v1865 = vadd.f32 0.0, %v1864
        %v1866 = vpop.f32.mrb[0].mxu0
        %v1867 = vpop.f32.mrb[0].mxu0
        %v1868 = vadd.f32 0.0, %v1867
        %v1869 = vpop.f32.mrb[0].mxu0
        %1870 = vmatprep.mubr.bf16.mxu0 0
        %1871 = vmatmul.mubr.bf16.gmra.mrb[0].mxu0 %v1183
        %v1872 = vpop.f32.mrb[0].mxu0
        %v1873 = vadd.f32 0.0, %v1872
        %v1874 = vpop.f32.mrb[0].mxu0
        %v1875 = vpop.f32.mrb[0].mxu0
        %v1876 = vadd.f32 0.0, %v1875
        %v1877 = vpop.f32.mrb[0].mxu0
        %1878 = vmatprep.mubr.bf16.mxu0 0
        %1879 = vmatmul.mubr.bf16.gmra.mrb[0].mxu0 %v1186
        %v1880 = vpop.f32.mrb[0].mxu0
        %v1881 = vadd.f32 0.0, %v1880
        %v1882 = vpop.f32.mrb[0].mxu0
        %v1883 = vpop.f32.mrb[0].mxu0
        %v1884 = vadd.f32 0.0, %v1883
        %v1885 = vpop.f32.mrb[0].mxu0
        %1886 = vmatprep.mubr.bf16.mxu0 0
        %1887 = vmatmul.mubr.bf16.gmra.mrb[0].mxu0 %v1189
        %v1888 = vpop.f32.mrb[0].mxu0
        %v1889 = vadd.f32 0.0, %v1888
        %v1890 = vpop.f32.mrb[0].mxu0
        %v1891 = vpop.f32.mrb[0].mxu0
        %v1892 = vadd.f32 0.0, %v1891
        %v1893 = vpop.f32.mrb[0].mxu0
        %1894 = vmatprep.mubr.bf16.mxu0 0
        %1895 = vmatmul.mubr.bf16.gmra.mrb[0].mxu0 %v1192
        %v1896 = vpop.f32.mrb[0].mxu0
        %v1897 = vadd.f32 0.0, %v1896
        %v1898 = vpop.f32.mrb[0].mxu0
        %v1899 = vpop.f32.mrb[0].mxu0
        %v1900 = vadd.f32 0.0, %v1899
        %v1901 = vpop.f32.mrb[0].mxu0
        %1902 = vmatprep.mubr.bf16.mxu0 0
        %1903 = vmatmul.mubr.bf16.gmra.mrb[0].mxu0 %v1195
        %v1904 = vpop.f32.mrb[0].mxu0
        %v1905 = vadd.f32 0.0, %v1904
        %v1906 = vpop.f32.mrb[0].mxu0
        %v1907 = vpop.f32.mrb[0].mxu0
        %v1908 = vadd.f32 0.0, %v1907
        %v1909 = vpop.f32.mrb[0].mxu0
        %1910 = vmatprep.mubr.bf16.mxu0 0
        %1911 = vmatmul.mubr.bf16.gmra.mrb[0].mxu0 %v1198
        %v1912 = vpop.f32.mrb[0].mxu0
        %v1913 = vadd.f32 0.0, %v1912
        %v1914 = vpop.f32.mrb[0].mxu0
        %v1915 = vpop.f32.mrb[0].mxu0
        %v1916 = vadd.f32 0.0, %v1915
        %v1917 = vpop.f32.mrb[0].mxu0
        %1918 = vmatprep.mubr.bf16.mxu0 0
        %1919 = vmatmul.mubr.bf16.gmra.mrb[0].mxu0 %v1201
        %v1920 = vpop.f32.mrb[0].mxu0
        %v1921 = vadd.f32 0.0, %v1920
        %v1922 = vpop.f32.mrb[0].mxu0
        %v1923 = vpop.f32.mrb[0].mxu0
        %v1924 = vadd.f32 0.0, %v1923
        %v1925 = vpop.f32.mrb[0].mxu0
        %1926 = vmatprep.mubr.bf16.mxu0 0
        %1927 = vmatmul.mubr.bf16.gmra.mrb[0].mxu0 %v1204
        %v1928 = vpop.f32.mrb[0].mxu0
        %v1929 = vadd.f32 0.0, %v1928
        %v1930 = vpop.f32.mrb[0].mxu0
        %v1931 = vpop.f32.mrb[0].mxu0
        %v1932 = vadd.f32 0.0, %v1931
        %v1933 = vpop.f32.mrb[0].mxu0
        %1934 = vmatprep.mubr.bf16.mxu0 0
        %1935 = vmatmul.mubr.bf16.gmra.mrb[0].mxu0 %v1207
        %v1936 = vpop.f32.mrb[0].mxu0
        %v1937 = vadd.f32 0.0, %v1936
        %v1938 = vpop.f32.mrb[0].mxu0
        %v1939 = vpop.f32.mrb[0].mxu0
        %v1940 = vadd.f32 0.0, %v1939
        %v1941 = vpop.f32.mrb[0].mxu0
        %1942 = vmatprep.mubr.bf16.mxu0 0
        %1943 = vmatmul.mubr.bf16.gmra.mrb[0].mxu0 %v1210
        %v1944 = vpop.f32.mrb[0].mxu0
        %v1945 = vadd.f32 0.0, %v1944
        %v1946 = vpop.f32.mrb[0].mxu0
        %v1947 = vpop.f32.mrb[0].mxu0
        %v1948 = vadd.f32 0.0, %v1947
        %v1949 = vpop.f32.mrb[0].mxu0
        %1950 = vmatprep.mubr.bf16.mxu0 0
        %1951 = vmatmul.mubr.bf16.gmra.mrb[0].mxu0 %v1213
        %v1952 = vpop.f32.mrb[0].mxu0
        %v1953 = vadd.f32 0.0, %v1952
        %v1954 = vpop.f32.mrb[0].mxu0
        %v1955 = vpop.f32.mrb[0].mxu0
        %v1956 = vadd.f32 0.0, %v1955
        %v1957 = vpop.f32.mrb[0].mxu0
        %1958 = vmatprep.mubr.bf16.mxu0 0
        %1959 = vmatmul.mubr.bf16.gmra.mrb[0].mxu0 %v1216
        %v1960 = vpop.f32.mrb[0].mxu0
        %v1961 = vadd.f32 0.0, %v1960
        %v1962 = vpop.f32.mrb[0].mxu0
        %v1963 = vpop.f32.mrb[0].mxu0
        %v1964 = vadd.f32 0.0, %v1963
        %v1965 = vpop.f32.mrb[0].mxu0
        %1966 = vmatprep.mubr.bf16.mxu0 0
        %1967 = vmatmul.mubr.bf16.gmra.mrb[0].mxu0 %v1219
        %v1968 = vpop.f32.mrb[0].mxu0
        %v1969 = vadd.f32 0.0, %v1968
        %v1970 = vpop.f32.mrb[0].mxu0
        %v1971 = vpop.f32.mrb[0].mxu0
        %v1972 = vadd.f32 0.0, %v1971
        %v1973 = vpop.f32.mrb[0].mxu0
        %1974 = vmatprep.mubr.bf16.mxu0 0
        %1975 = vmatmul.mubr.bf16.gmra.mrb[0].mxu0 %v1222
        %v1976 = vpop.f32.mrb[0].mxu0
        %v1977 = vadd.f32 0.0, %v1976
        %v1978 = vpop.f32.mrb[0].mxu0
        %v1979 = vpop.f32.mrb[0].mxu0
        %v1980 = vadd.f32 0.0, %v1979
        %v1981 = vpop.f32.mrb[0].mxu0
        %1982 = vmatprep.mubr.bf16.mxu0 0
        %1983 = vmatmul.mubr.bf16.gmra.mrb[0].mxu0 %v1225
        %v1984 = vpop.f32.mrb[0].mxu0
        %v1985 = vadd.f32 0.0, %v1984
        %v1986 = vpop.f32.mrb[0].mxu0
        %v1987 = vpop.f32.mrb[0].mxu0
        %v1988 = vadd.f32 0.0, %v1987
        %v1989 = vpop.f32.mrb[0].mxu0
        %1990 = vmatprep.mubr.bf16.mxu0 0
        %1991 = vmatmul.mubr.bf16.gmra.mrb[0].mxu0 %v1228
        %v1992 = vpop.f32.mrb[0].mxu0
        %v1993 = vadd.f32 0.0, %v1992
        %v1994 = vpop.f32.mrb[0].mxu0
        %v1995 = vpop.f32.mrb[0].mxu0
        %v1996 = vadd.f32 0.0, %v1995
        %v1997 = vpop.f32.mrb[0].mxu0
        %1998 = vmatprep.mubr.bf16.mxu0 0
        %1999 = vmatmul.mubr.bf16.gmra.mrb[0].mxu0 %v1231
        %v2000 = vpop.f32.mrb[0].mxu0
        %v2001 = vadd.f32 0.0, %v2000
        %v2002 = vpop.f32.mrb[0].mxu0
        %v2003 = vpop.f32.mrb[0].mxu0
        %v2004 = vadd.f32 0.0, %v2003
        %v2005 = vpop.f32.mrb[0].mxu0
        %2006 = vmatprep.mubr.bf16.mxu0 0
        %2007 = vmatmul.mubr.bf16.gmra.mrb[0].mxu0 %v1234
        %v2008 = vpop.f32.mrb[0].mxu0
        %v2009 = vadd.f32 0.0, %v2008
        %v2010 = vpop.f32.mrb[0].mxu0
        %v2011 = vpop.f32.mrb[0].mxu0
        %v2012 = vadd.f32 0.0, %v2011
        %v2013 = vpop.f32.mrb[0].mxu0
        %2014 = vmatprep.mubr.bf16.mxu0 0
        %2015 = vmatmul.mubr.bf16.gmra.mrb[0].mxu0 %v1237
        %v2016 = vpop.f32.mrb[0].mxu0
        %v2017 = vadd.f32 0.0, %v2016
        %v2018 = vpop.f32.mrb[0].mxu0
        %v2019 = vpop.f32.mrb[0].mxu0
        %v2020 = vadd.f32 0.0, %v2019
        %v2021 = vpop.f32.mrb[0].mxu0
        %2022 = vmatprep.mubr.bf16.mxu0 0
        %2023 = vmatmul.mubr.bf16.gmra.mrb[0].mxu0 %v1240
        %v2024 = vpop.f32.mrb[0].mxu0
        %v2025 = vadd.f32 0.0, %v2024
        %v2026 = vpop.f32.mrb[0].mxu0
        %v2027 = vpop.f32.mrb[0].mxu0
        %v2028 = vadd.f32 0.0, %v2027
        %v2029 = vpop.f32.mrb[0].mxu0
        %2030 = vmatprep.mubr.bf16.mxu0 0
        %2031 = vmatmul.mubr.bf16.gmra.mrb[0].mxu0 %v1243
        %v2032 = vpop.f32.mrb[0].mxu0
        %v2033 = vadd.f32 0.0, %v2032
        %v2034 = vpop.f32.mrb[0].mxu0
        %v2035 = vpop.f32.mrb[0].mxu0
        %v2036 = vadd.f32 0.0, %v2035
        %v2037 = vpop.f32.mrb[0].mxu0
        %2038 = vmatprep.mubr.bf16.mxu0 0
        %2039 = vmatmul.mubr.bf16.gmra.mrb[0].mxu0 %v1246
        %v2040 = vpop.f32.mrb[0].mxu0
        %v2041 = vadd.f32 0.0, %v2040
        %v2042 = vpop.f32.mrb[0].mxu0
        %v2043 = vpop.f32.mrb[0].mxu0
        %v2044 = vadd.f32 0.0, %v2043
        %v2045 = vpop.f32.mrb[0].mxu0
        %2046 = vmatprep.mubr.bf16.mxu0 0
        %2047 = vmatmul.mubr.bf16.gmra.mrb[0].mxu0 %v1249
        %v2048 = vpop.f32.mrb[0].mxu0
        %v2049 = vadd.f32 0.0, %v2048
        %v2050 = vpop.f32.mrb[0].mxu0
        %v2051 = vpop.f32.mrb[0].mxu0
        %v2052 = vadd.f32 0.0, %v2051
        %v2053 = vpop.f32.mrb[0].mxu0
        %2054 = vmatprep.mubr.bf16.mxu0 0
        %2055 = vmatmul.mubr.bf16.gmra.mrb[0].mxu0 %v1252
        %v2056 = vpop.f32.mrb[0].mxu0
        %v2057 = vadd.f32 0.0, %v2056
        %v2058 = vpop.f32.mrb[0].mxu0
        %v2059 = vpop.f32.mrb[0].mxu0
        %v2060 = vadd.f32 0.0, %v2059
        %v2061 = vpop.f32.mrb[0].mxu0
        %2062 = vmatprep.mubr.bf16.mxu0 0
        %2063 = vmatmul.mubr.bf16.gmra.mrb[0].mxu0 %v1255
        %v2064 = vpop.f32.mrb[0].mxu0
        %v2065 = vadd.f32 0.0, %v2064
        %v2066 = vpop.f32.mrb[0].mxu0
        %v2067 = vpop.f32.mrb[0].mxu0
        %v2068 = vadd.f32 0.0, %v2067
        %v2069 = vpop.f32.mrb[0].mxu0
        %2070 = vmatprep.mubr.bf16.mxu0 0
        %2071 = vmatmul.mubr.bf16.gmra.mrb[0].mxu0 %v1258
        %v2072 = vpop.f32.mrb[0].mxu0
        %v2073 = vadd.f32 0.0, %v2072
        %v2074 = vpop.f32.mrb[0].mxu0
        %v2075 = vpop.f32.mrb[0].mxu0
        %v2076 = vadd.f32 0.0, %v2075
        %v2077 = vpop.f32.mrb[0].mxu0
        %2078 = vmatprep.mubr.bf16.mxu0 0
        %2079 = vmatmul.mubr.bf16.gmra.mrb[0].mxu0 %v1261
        %v2080 = vpop.f32.mrb[0].mxu0
        %v2081 = vadd.f32 0.0, %v2080
        %v2082 = vpop.f32.mrb[0].mxu0
        %v2083 = vpop.f32.mrb[0].mxu0
        %v2084 = vadd.f32 0.0, %v2083
        %v2085 = vpop.f32.mrb[0].mxu0
        %2086 = vmatprep.mubr.bf16.mxu0 0
        %2087 = vmatmul.mubr.bf16.gmra.mrb[0].mxu0 %v1264
        %v2088 = vpop.f32.mrb[0].mxu0
        %v2089 = vadd.f32 0.0, %v2088
        %v2090 = vpop.f32.mrb[0].mxu0
        %v2091 = vpop.f32.mrb[0].mxu0
        %v2092 = vadd.f32 0.0, %v2091
        %v2093 = vpop.f32.mrb[0].mxu0
        %2094 = vmatprep.mubr.bf16.mxu0 0
        %2095 = vmatmul.mubr.bf16.gmra.mrb[0].mxu0 %v1267
        %v2096 = vpop.f32.mrb[0].mxu0
        %v2097 = vadd.f32 0.0, %v2096
        %v2098 = vpop.f32.mrb[0].mxu0
        %v2099 = vpop.f32.mrb[0].mxu0
        %v2100 = vadd.f32 0.0, %v2099
        %v2101 = vpop.f32.mrb[0].mxu0
        %2102 = vmatprep.mubr.bf16.mxu0 0
        %2103 = vmatmul.mubr.bf16.gmra.mrb[0].mxu0 %v1270
        %v2104 = vpop.f32.mrb[0].mxu0
        %v2105 = vadd.f32 0.0, %v2104
        %v2106 = vpop.f32.mrb[0].mxu0
        %v2107 = vpop.f32.mrb[0].mxu0
        %v2108 = vadd.f32 0.0, %v2107
        %v2109 = vpop.f32.mrb[0].mxu0
        %2110 = vmatprep.mubr.bf16.mxu0 0
        %2111 = vmatmul.mubr.bf16.gmra.mrb[0].mxu0 %v1273
        %v2112 = vpop.f32.mrb[0].mxu0
        %v2113 = vadd.f32 0.0, %v2112
        %v2114 = vpop.f32.mrb[0].mxu0
        %v2115 = vpop.f32.mrb[0].mxu0
        %v2116 = vadd.f32 0.0, %v2115
        %v2117 = vpop.f32.mrb[0].mxu0
        %2118 = vmatprep.mubr.bf16.mxu0 0
        %2119 = vmatmul.mubr.bf16.gmra.mrb[0].mxu0 %v1276
        %v2120 = vpop.f32.mrb[0].mxu0
        %v2121 = vpop.f32.mrb[0].mxu0
        %v2122 = vpop.f32.mrb[0].mxu0
        %v2123 = vpop.f32.mrb[0].mxu0
        %2124 = vdwg.mxu0
        %v2125 = vmax.f32 %v1317, 0.0
        %v2126 = vmax.f32 %v1320, 0.0
        %v2127 = vmax.f32 %v1325, 0.0
        %v2128 = vmax.f32 %v1328, 0.0
        %v2129 = vmax.f32 %v1333, 0.0
        %v2130 = vmax.f32 %v1336, 0.0
        %v2131 = vmax.f32 %v1341, 0.0
        %v2132 = vmax.f32 %v1344, 0.0
        %v2133 = vmax.f32 %v1349, 0.0
        %v2134 = vmax.f32 %v1352, 0.0
        %v2135 = vmax.f32 %v1357, 0.0
        %v2136 = vmax.f32 %v1360, 0.0
        %v2137 = vmax.f32 %v1365, 0.0
        %v2138 = vmax.f32 %v1368, 0.0
        %v2139 = vmax.f32 %v1373, 0.0
        %v2140 = vmax.f32 %v1376, 0.0
        %v2141 = vmax.f32 %v1381, 0.0
        %v2142 = vmax.f32 %v1384, 0.0
        %v2143 = vmax.f32 %v1389, 0.0
        %v2144 = vmax.f32 %v1392, 0.0
        %v2145 = vmax.f32 %v1397, 0.0
        %v2146 = vmax.f32 %v1400, 0.0
        %v2147 = vmax.f32 %v1405, 0.0
        %v2148 = vmax.f32 %v1408, 0.0
        %v2149 = vmax.f32 %v1413, 0.0
        %v2150 = vmax.f32 %v1416, 0.0
        %v2151 = vmax.f32 %v1421, 0.0
        %v2152 = vmax.f32 %v1424, 0.0
        %v2153 = vmax.f32 %v1429, 0.0
        %v2154 = vmax.f32 %v1432, 0.0
        %v2155 = vmax.f32 %v1437, 0.0
        %v2156 = vmax.f32 %v1440, 0.0
        %v2157 = vmax.f32 %v1445, 0.0
        %v2158 = vmax.f32 %v1448, 0.0
        %v2159 = vmax.f32 %v1453, 0.0
        %v2160 = vmax.f32 %v1456, 0.0
        %v2161 = vmax.f32 %v1461, 0.0
        %v2162 = vmax.f32 %v1464, 0.0
        %v2163 = vmax.f32 %v1469, 0.0
        %v2164 = vmax.f32 %v1472, 0.0
        %v2165 = vmax.f32 %v1477, 0.0
        %v2166 = vmax.f32 %v1480, 0.0
        %v2167 = vmax.f32 %v1485, 0.0
        %v2168 = vmax.f32 %v1488, 0.0
        %v2169 = vmax.f32 %v1493, 0.0
        %v2170 = vmax.f32 %v1496, 0.0
        %v2171 = vmax.f32 %v1501, 0.0
        %v2172 = vmax.f32 %v1504, 0.0
        %v2173 = vmax.f32 %v1509, 0.0
        %v2174 = vmax.f32 %v1512, 0.0
        %v2175 = vmax.f32 %v1517, 0.0
        %v2176 = vmax.f32 %v1520, 0.0
        %v2177 = vmax.f32 %v1525, 0.0
        %v2178 = vmax.f32 %v1528, 0.0
        %v2179 = vmax.f32 %v1533, 0.0
        %v2180 = vmax.f32 %v1536, 0.0
        %v2181 = vmax.f32 %v1541, 0.0
        %v2182 = vmax.f32 %v1544, 0.0
        %v2183 = vmax.f32 %v1549, 0.0
        %v2184 = vmax.f32 %v1552, 0.0
        %v2185 = vmax.f32 %v1557, 0.0
        %v2186 = vmax.f32 %v1560, 0.0
        %v2187 = vmax.f32 %v1565, 0.0
        %v2188 = vmax.f32 %v1568, 0.0
        %v2189 = vmax.f32 %v1573, 0.0
        %v2190 = vmax.f32 %v1576, 0.0
        %v2191 = vmax.f32 %v1587, 0.0
        %v2192 = vmax.f32 %v1590, 0.0
        %v2193 = vmax.f32 %v1595, 0.0
        %v2194 = vmax.f32 %v1598, 0.0
        %v2195 = vmax.f32 %v1603, 0.0
        %v2196 = vmax.f32 %v1606, 0.0
        %v2197 = vmax.f32 %v1611, 0.0
        %v2198 = vmax.f32 %v1614, 0.0
        %v2199 = vmax.f32 %v1619, 0.0
        %v2200 = vmax.f32 %v1622, 0.0
        %v2201 = vmax.f32 %v1627, 0.0
        %v2202 = vmax.f32 %v1630, 0.0
        %v2203 = vmax.f32 %v1635, 0.0
        %v2204 = vmax.f32 %v1638, 0.0
        %v2205 = vmax.f32 %v1643, 0.0
        %v2206 = vmax.f32 %v1646, 0.0
        %v2207 = vmax.f32 %v1651, 0.0
        %v2208 = vmax.f32 %v1654, 0.0
        %v2209 = vmax.f32 %v1659, 0.0
        %v2210 = vmax.f32 %v1662, 0.0
        %v2211 = vmax.f32 %v1667, 0.0
        %v2212 = vmax.f32 %v1670, 0.0
        %v2213 = vmax.f32 %v1675, 0.0
        %v2214 = vmax.f32 %v1678, 0.0
        %v2215 = vmax.f32 %v1683, 0.0
        %v2216 = vmax.f32 %v1686, 0.0
        %v2217 = vmax.f32 %v1691, 0.0
        %v2218 = vmax.f32 %v1694, 0.0
        %v2219 = vmax.f32 %v1699, 0.0
        %v2220 = vmax.f32 %v1702, 0.0
        %v2221 = vmax.f32 %v1707, 0.0
        %v2222 = vmax.f32 %v1710, 0.0
        %v2223 = vmax.f32 %v1715, 0.0
        %v2224 = vmax.f32 %v1718, 0.0
        %v2225 = vmax.f32 %v1723, 0.0
        %v2226 = vmax.f32 %v1726, 0.0
        %v2227 = vmax.f32 %v1731, 0.0
        %v2228 = vmax.f32 %v1734, 0.0
        %v2229 = vmax.f32 %v1739, 0.0
        %v2230 = vmax.f32 %v1742, 0.0
        %v2231 = vmax.f32 %v1747, 0.0
        %v2232 = vmax.f32 %v1750, 0.0
        %v2233 = vmax.f32 %v1755, 0.0
        %v2234 = vmax.f32 %v1758, 0.0
        %v2235 = vmax.f32 %v1763, 0.0
        %v2236 = vmax.f32 %v1766, 0.0
        %v2237 = vmax.f32 %v1771, 0.0
        %v2238 = vmax.f32 %v1774, 0.0
        %v2239 = vmax.f32 %v1779, 0.0
        %v2240 = vmax.f32 %v1782, 0.0
        %v2241 = vmax.f32 %v1787, 0.0
        %v2242 = vmax.f32 %v1790, 0.0
        %v2243 = vmax.f32 %v1795, 0.0
        %v2244 = vmax.f32 %v1798, 0.0
        %v2245 = vmax.f32 %v1803, 0.0
        %v2246 = vmax.f32 %v1806, 0.0
        %v2247 = vmax.f32 %v1811, 0.0
        %v2248 = vmax.f32 %v1814, 0.0
        %v2249 = vmax.f32 %v1819, 0.0
        %v2250 = vmax.f32 %v1822, 0.0
        %v2251 = vmax.f32 %v1827, 0.0
        %v2252 = vmax.f32 %v1830, 0.0
        %v2253 = vmax.f32 %v1835, 0.0
        %v2254 = vmax.f32 %v1838, 0.0
        %v2255 = vmax.f32 %v1843, 0.0
        %v2256 = vmax.f32 %v1846, 0.0
        %v2257 = vmax.f32 %v1857, 0.0
        %v2258 = vmax.f32 %v1860, 0.0
        %v2259 = vmax.f32 %v1865, 0.0
        %v2260 = vmax.f32 %v1868, 0.0
        %v2261 = vmax.f32 %v1873, 0.0
        %v2262 = vmax.f32 %v1876, 0.0
        %v2263 = vmax.f32 %v1881, 0.0
        %v2264 = vmax.f32 %v1884, 0.0
        %v2265 = vmax.f32 %v1889, 0.0
        %v2266 = vmax.f32 %v1892, 0.0
        %v2267 = vmax.f32 %v1897, 0.0
        %v2268 = vmax.f32 %v1900, 0.0
        %v2269 = vmax.f32 %v1905, 0.0
        %v2270 = vmax.f32 %v1908, 0.0
        %v2271 = vmax.f32 %v1913, 0.0
        %v2272 = vmax.f32 %v1916, 0.0
        %v2273 = vmax.f32 %v1921, 0.0
        %v2274 = vmax.f32 %v1924, 0.0
        %v2275 = vmax.f32 %v1929, 0.0
        %v2276 = vmax.f32 %v1932, 0.0
        %v2277 = vmax.f32 %v1937, 0.0
        %v2278 = vmax.f32 %v1940, 0.0
        %v2279 = vmax.f32 %v1945, 0.0
        %v2280 = vmax.f32 %v1948, 0.0
        %v2281 = vmax.f32 %v1953, 0.0
        %v2282 = vmax.f32 %v1956, 0.0
        %v2283 = vmax.f32 %v1961, 0.0
        %v2284 = vmax.f32 %v1964, 0.0
        %v2285 = vmax.f32 %v1969, 0.0
        %v2286 = vmax.f32 %v1972, 0.0
        %v2287 = vmax.f32 %v1977, 0.0
        %v2288 = vmax.f32 %v1980, 0.0
        %v2289 = vmax.f32 %v1985, 0.0
        %v2290 = vmax.f32 %v1988, 0.0
        %v2291 = vmax.f32 %v1993, 0.0
        %v2292 = vmax.f32 %v1996, 0.0
        %v2293 = vmax.f32 %v2001, 0.0
        %v2294 = vmax.f32 %v2004, 0.0
        %v2295 = vmax.f32 %v2009, 0.0
        %v2296 = vmax.f32 %v2012, 0.0
        %v2297 = vmax.f32 %v2017, 0.0
        %v2298 = vmax.f32 %v2020, 0.0
        %v2299 = vmax.f32 %v2025, 0.0
        %v2300 = vmax.f32 %v2028, 0.0
        %v2301 = vmax.f32 %v2033, 0.0
        %v2302 = vmax.f32 %v2036, 0.0
        %v2303 = vmax.f32 %v2041, 0.0
        %v2304 = vmax.f32 %v2044, 0.0
        %v2305 = vmax.f32 %v2049, 0.0
        %v2306 = vmax.f32 %v2052, 0.0
        %v2307 = vmax.f32 %v2057, 0.0
        %v2308 = vmax.f32 %v2060, 0.0
        %v2309 = vmax.f32 %v2065, 0.0
        %v2310 = vmax.f32 %v2068, 0.0
        %v2311 = vmax.f32 %v2073, 0.0
        %v2312 = vmax.f32 %v2076, 0.0
        %v2313 = vmax.f32 %v2081, 0.0
        %v2314 = vmax.f32 %v2084, 0.0
        %v2315 = vmax.f32 %v2089, 0.0
        %v2316 = vmax.f32 %v2092, 0.0
        %v2317 = vmax.f32 %v2097, 0.0
        %v2318 = vmax.f32 %v2100, 0.0
        %v2319 = vmax.f32 %v2105, 0.0
        %v2320 = vmax.f32 %v2108, 0.0
        %v2321 = vmax.f32 %v2113, 0.0
        %v2322 = vmax.f32 %v2116, 0.0
        %v2323 = vpack.c.bf16 %v2126, %v2125
        %v2324 = vpack.c.bf16 %v2128, %v2127
        %v2325 = vpack.c.bf16 %v2130, %v2129
        %v2326 = vpack.c.bf16 %v2132, %v2131
        %v2327 = vpack.c.bf16 %v2134, %v2133
        %v2328 = vpack.c.bf16 %v2136, %v2135
        %v2329 = vpack.c.bf16 %v2138, %v2137
        %v2330 = vpack.c.bf16 %v2140, %v2139
        %v2331 = vpack.c.bf16 %v2142, %v2141
        %v2332 = vpack.c.bf16 %v2144, %v2143
        %v2333 = vpack.c.bf16 %v2146, %v2145
        %v2334 = vpack.c.bf16 %v2148, %v2147
        %v2335 = vpack.c.bf16 %v2150, %v2149
        %v2336 = vpack.c.bf16 %v2152, %v2151
        %v2337 = vpack.c.bf16 %v2154, %v2153
        %v2338 = vpack.c.bf16 %v2156, %v2155
        %v2339 = vpack.c.bf16 %v2158, %v2157
        %v2340 = vpack.c.bf16 %v2160, %v2159
        %v2341 = vpack.c.bf16 %v2162, %v2161
        %v2342 = vpack.c.bf16 %v2164, %v2163
        %v2343 = vpack.c.bf16 %v2166, %v2165
        %v2344 = vpack.c.bf16 %v2168, %v2167
        %v2345 = vpack.c.bf16 %v2170, %v2169
        %v2346 = vpack.c.bf16 %v2172, %v2171
        %v2347 = vpack.c.bf16 %v2174, %v2173
        %v2348 = vpack.c.bf16 %v2176, %v2175
        %v2349 = vpack.c.bf16 %v2178, %v2177
        %v2350 = vpack.c.bf16 %v2180, %v2179
        %v2351 = vpack.c.bf16 %v2182, %v2181
        %v2352 = vpack.c.bf16 %v2184, %v2183
        %v2353 = vpack.c.bf16 %v2186, %v2185
        %v2354 = vpack.c.bf16 %v2188, %v2187
        %v2355 = vpack.c.bf16 %v2190, %v2189
        %v2356 = vpack.c.bf16 %v2192, %v2191
        %v2357 = vpack.c.bf16 %v2194, %v2193
        %v2358 = vpack.c.bf16 %v2196, %v2195
        %v2359 = vpack.c.bf16 %v2198, %v2197
        %v2360 = vpack.c.bf16 %v2200, %v2199
        %v2361 = vpack.c.bf16 %v2202, %v2201
        %v2362 = vpack.c.bf16 %v2204, %v2203
        %v2363 = vpack.c.bf16 %v2206, %v2205
        %v2364 = vpack.c.bf16 %v2208, %v2207
        %v2365 = vpack.c.bf16 %v2210, %v2209
        %v2366 = vpack.c.bf16 %v2212, %v2211
        %v2367 = vpack.c.bf16 %v2214, %v2213
        %v2368 = vpack.c.bf16 %v2216, %v2215
        %v2369 = vpack.c.bf16 %v2218, %v2217
        %v2370 = vpack.c.bf16 %v2220, %v2219
        %v2371 = vpack.c.bf16 %v2222, %v2221
        %v2372 = vpack.c.bf16 %v2224, %v2223
        %v2373 = vpack.c.bf16 %v2226, %v2225
        %v2374 = vpack.c.bf16 %v2228, %v2227
        %v2375 = vpack.c.bf16 %v2230, %v2229
        %v2376 = vpack.c.bf16 %v2232, %v2231
        %v2377 = vpack.c.bf16 %v2234, %v2233
        %v2378 = vpack.c.bf16 %v2236, %v2235
        %v2379 = vpack.c.bf16 %v2238, %v2237
        %v2380 = vpack.c.bf16 %v2240, %v2239
        %v2381 = vpack.c.bf16 %v2242, %v2241
        %v2382 = vpack.c.bf16 %v2244, %v2243
        %v2383 = vpack.c.bf16 %v2246, %v2245
        %v2384 = vpack.c.bf16 %v2248, %v2247
        %v2385 = vpack.c.bf16 %v2250, %v2249
        %v2386 = vpack.c.bf16 %v2252, %v2251
        %v2387 = vpack.c.bf16 %v2254, %v2253
        %v2388 = vpack.c.bf16 %v2256, %v2255
        %v2389 = vpack.c.bf16 %v2258, %v2257
        %v2390 = vpack.c.bf16 %v2260, %v2259
        %v2391 = vpack.c.bf16 %v2262, %v2261
        %v2392 = vpack.c.bf16 %v2264, %v2263
        %v2393 = vpack.c.bf16 %v2266, %v2265
        %v2394 = vpack.c.bf16 %v2268, %v2267
        %v2395 = vpack.c.bf16 %v2270, %v2269
        %v2396 = vpack.c.bf16 %v2272, %v2271
        %v2397 = vpack.c.bf16 %v2274, %v2273
        %v2398 = vpack.c.bf16 %v2276, %v2275
        %v2399 = vpack.c.bf16 %v2278, %v2277
        %v2400 = vpack.c.bf16 %v2280, %v2279
        %v2401 = vpack.c.bf16 %v2282, %v2281
        %v2402 = vpack.c.bf16 %v2284, %v2283
        %v2403 = vpack.c.bf16 %v2286, %v2285
        %v2404 = vpack.c.bf16 %v2288, %v2287
        %v2405 = vpack.c.bf16 %v2290, %v2289
        %v2406 = vpack.c.bf16 %v2292, %v2291
        %v2407 = vpack.c.bf16 %v2294, %v2293
        %v2408 = vpack.c.bf16 %v2296, %v2295
        %v2409 = vpack.c.bf16 %v2298, %v2297
        %v2410 = vpack.c.bf16 %v2300, %v2299
        %v2411 = vpack.c.bf16 %v2302, %v2301
        %v2412 = vpack.c.bf16 %v2304, %v2303
        %v2413 = vpack.c.bf16 %v2306, %v2305
        %v2414 = vpack.c.bf16 %v2308, %v2307
        %v2415 = vpack.c.bf16 %v2310, %v2309
        %v2416 = vpack.c.bf16 %v2312, %v2311
        %v2417 = vpack.c.bf16 %v2314, %v2313
        %v2418 = vpack.c.bf16 %v2316, %v2315
        %v2419 = vpack.c.bf16 %v2318, %v2317
        %v2420 = vpack.c.bf16 %v2320, %v2319
        %v2421 = vpack.c.bf16 %v2322, %v2321
        %2422 = vst [vmem:[#allocation2] sm:$0xff] %v2323
        %2423 = vst [vmem:[#allocation2 + $0x48] sm:$0xff] %v2324
        %2424 = vst [vmem:[#allocation2 + $0x90] sm:$0xff] %v2325
        %2425 = vst [vmem:[#allocation2 + $0xd8] sm:$0xff] %v2326
        %2426 = vst [vmem:[#allocation2 + $0x120] sm:$0xff] %v2327
        %2427 = vst [vmem:[#allocation2 + $0x168] sm:$0xff] %v2328
        %2428 = vst [vmem:[#allocation2 + $0x1b0] sm:$0xff] %v2329
        %2429 = vst [vmem:[#allocation2 + $0x1f8] sm:$0xff] %v2330
        %2430 = vst [vmem:[#allocation2 + $0x240] sm:$0xff] %v2331
        %2431 = vst [vmem:[#allocation2 + $0x288] sm:$0xff] %v2332
        %2432 = vst [vmem:[#allocation2 + $0x2d0] sm:$0xff] %v2333
        %2433 = vst [vmem:[#allocation2 + $0x318] sm:$0xff] %v2334
        %2434 = vst [vmem:[#allocation2 + $0x360] sm:$0xff] %v2335
        %2435 = vst [vmem:[#allocation2 + $0x3a8] sm:$0xff] %v2336
        %2436 = vst [vmem:[#allocation2 + $0x3f0] sm:$0xff] %v2337
        %2437 = vst [vmem:[#allocation2 + $0x438] sm:$0xff] %v2338
        %2438 = vst [vmem:[#allocation2 + $0x8] sm:$0xff] %v2340
        %2439 = vst [vmem:[#allocation2 + $0x50] sm:$0xff] %v2341
        %2440 = vst [vmem:[#allocation2 + $0x98] sm:$0xff] %v2342
        %2441 = vst [vmem:[#allocation2 + $0xe0] sm:$0xff] %v2343
        %2442 = vst [vmem:[#allocation2 + $0x128] sm:$0xff] %v2344
        %2443 = vst [vmem:[#allocation2 + $0x170] sm:$0xff] %v2345
        %2444 = vst [vmem:[#allocation2 + $0x1b8] sm:$0xff] %v2346
        %2445 = vst [vmem:[#allocation2 + $0x200] sm:$0xff] %v2347
        %2446 = vst [vmem:[#allocation2 + $0x248] sm:$0xff] %v2348
        %2447 = vst [vmem:[#allocation2 + $0x290] sm:$0xff] %v2349
        %2448 = vst [vmem:[#allocation2 + $0x2d8] sm:$0xff] %v2350
        %2449 = vst [vmem:[#allocation2 + $0x320] sm:$0xff] %v2351
        %2450 = vst [vmem:[#allocation2 + $0x368] sm:$0xff] %v2352
        %2451 = vst [vmem:[#allocation2 + $0x3b0] sm:$0xff] %v2353
        %2452 = vst [vmem:[#allocation2 + $0x3f8] sm:$0xff] %v2354
        %2453 = vst [vmem:[#allocation2 + $0x440] sm:$0xff] %v2355
        %2454 = vst [vmem:[#allocation2 + $0x10] sm:$0xff] %v2324
        %2455 = vst [vmem:[#allocation2 + $0x58] sm:$0xff] %v2325
        %2456 = vst [vmem:[#allocation2 + $0xa0] sm:$0xff] %v2326
        %2457 = vst [vmem:[#allocation2 + $0xe8] sm:$0xff] %v2327
        %2458 = vst [vmem:[#allocation2 + $0x130] sm:$0xff] %v2328
        %2459 = vst [vmem:[#allocation2 + $0x178] sm:$0xff] %v2329
        %2460 = vst [vmem:[#allocation2 + $0x1c0] sm:$0xff] %v2330
        %2461 = vst [vmem:[#allocation2 + $0x208] sm:$0xff] %v2331
        %2462 = vst [vmem:[#allocation2 + $0x250] sm:$0xff] %v2332
        %2463 = vst [vmem:[#allocation2 + $0x298] sm:$0xff] %v2333
        %2464 = vst [vmem:[#allocation2 + $0x2e0] sm:$0xff] %v2334
        %2465 = vst [vmem:[#allocation2 + $0x328] sm:$0xff] %v2335
        %2466 = vst [vmem:[#allocation2 + $0x370] sm:$0xff] %v2336
        %2467 = vst [vmem:[#allocation2 + $0x3b8] sm:$0xff] %v2337
        %2468 = vst [vmem:[#allocation2 + $0x400] sm:$0xff] %v2338
        %2469 = vst [vmem:[#allocation2 + $0x448] sm:$0xff] %v2339
        %2470 = vst [vmem:[#allocation2 + $0x18] sm:$0xff] %v2356
        %2471 = vst [vmem:[#allocation2 + $0x60] sm:$0xff] %v2357
        %2472 = vst [vmem:[#allocation2 + $0xa8] sm:$0xff] %v2358
        %2473 = vst [vmem:[#allocation2 + $0xf0] sm:$0xff] %v2359
        %2474 = vst [vmem:[#allocation2 + $0x138] sm:$0xff] %v2360
        %2475 = vst [vmem:[#allocation2 + $0x180] sm:$0xff] %v2361
        %2476 = vst [vmem:[#allocation2 + $0x1c8] sm:$0xff] %v2362
        %2477 = vst [vmem:[#allocation2 + $0x210] sm:$0xff] %v2363
        %2478 = vst [vmem:[#allocation2 + $0x258] sm:$0xff] %v2364
        %2479 = vst [vmem:[#allocation2 + $0x2a0] sm:$0xff] %v2365
        %2480 = vst [vmem:[#allocation2 + $0x2e8] sm:$0xff] %v2366
        %2481 = vst [vmem:[#allocation2 + $0x330] sm:$0xff] %v2367
        %2482 = vst [vmem:[#allocation2 + $0x378] sm:$0xff] %v2368
        %2483 = vst [vmem:[#allocation2 + $0x3c0] sm:$0xff] %v2369
        %2484 = vst [vmem:[#allocation2 + $0x408] sm:$0xff] %v2370
        %2485 = vst [vmem:[#allocation2 + $0x450] sm:$0xff] %v2371
        %2486 = vst [vmem:[#allocation2 + $0x20] sm:$0xff] %v2373
        %2487 = vst [vmem:[#allocation2 + $0x68] sm:$0xff] %v2374
        %2488 = vst [vmem:[#allocation2 + $0xb0] sm:$0xff] %v2375
        %2489 = vst [vmem:[#allocation2 + $0xf8] sm:$0xff] %v2376
        %2490 = vst [vmem:[#allocation2 + $0x140] sm:$0xff] %v2377
        %2491 = vst [vmem:[#allocation2 + $0x188] sm:$0xff] %v2378
        %2492 = vst [vmem:[#allocation2 + $0x1d0] sm:$0xff] %v2379
        %2493 = vst [vmem:[#allocation2 + $0x218] sm:$0xff] %v2380
        %2494 = vst [vmem:[#allocation2 + $0x260] sm:$0xff] %v2381
        %2495 = vst [vmem:[#allocation2 + $0x2a8] sm:$0xff] %v2382
        %2496 = vst [vmem:[#allocation2 + $0x2f0] sm:$0xff] %v2383
        %2497 = vst [vmem:[#allocation2 + $0x338] sm:$0xff] %v2384
        %2498 = vst [vmem:[#allocation2 + $0x380] sm:$0xff] %v2385
        %2499 = vst [vmem:[#allocation2 + $0x3c8] sm:$0xff] %v2386
        %2500 = vst [vmem:[#allocation2 + $0x410] sm:$0xff] %v2387
        %2501 = vst [vmem:[#allocation2 + $0x458] sm:$0xff] %v2388
        %2502 = vst [vmem:[#allocation2 + $0x28] sm:$0xff] %v2357
        %2503 = vst [vmem:[#allocation2 + $0x70] sm:$0xff] %v2358
        %2504 = vst [vmem:[#allocation2 + $0xb8] sm:$0xff] %v2359
        %2505 = vst [vmem:[#allocation2 + $0x100] sm:$0xff] %v2360
        %2506 = vst [vmem:[#allocation2 + $0x148] sm:$0xff] %v2361
        %2507 = vst [vmem:[#allocation2 + $0x190] sm:$0xff] %v2362
        %2508 = vst [vmem:[#allocation2 + $0x1d8] sm:$0xff] %v2363
        %2509 = vst [vmem:[#allocation2 + $0x220] sm:$0xff] %v2364
        %2510 = vst [vmem:[#allocation2 + $0x268] sm:$0xff] %v2365
        %2511 = vst [vmem:[#allocation2 + $0x2b0] sm:$0xff] %v2366
        %2512 = vst [vmem:[#allocation2 + $0x2f8] sm:$0xff] %v2367
        %2513 = vst [vmem:[#allocation2 + $0x340] sm:$0xff] %v2368
        %2514 = vst [vmem:[#allocation2 + $0x388] sm:$0xff] %v2369
        %2515 = vst [vmem:[#allocation2 + $0x3d0] sm:$0xff] %v2370
        %2516 = vst [vmem:[#allocation2 + $0x418] sm:$0xff] %v2371
        %2517 = vst [vmem:[#allocation2 + $0x460] sm:$0xff] %v2372
        %2518 = vst [vmem:[#allocation2 + $0x30] sm:$0xff] %v2389
        %2519 = vst [vmem:[#allocation2 + $0x78] sm:$0xff] %v2390
        %2520 = vst [vmem:[#allocation2 + $0xc0] sm:$0xff] %v2391
        %2521 = vst [vmem:[#allocation2 + $0x108] sm:$0xff] %v2392
        %2522 = vst [vmem:[#allocation2 + $0x150] sm:$0xff] %v2393
        %2523 = vst [vmem:[#allocation2 + $0x198] sm:$0xff] %v2394
        %2524 = vst [vmem:[#allocation2 + $0x1e0] sm:$0xff] %v2395
        %2525 = vst [vmem:[#allocation2 + $0x228] sm:$0xff] %v2396
        %2526 = vst [vmem:[#allocation2 + $0x270] sm:$0xff] %v2397
        %2527 = vst [vmem:[#allocation2 + $0x2b8] sm:$0xff] %v2398
        %2528 = vst [vmem:[#allocation2 + $0x300] sm:$0xff] %v2399
        %2529 = vst [vmem:[#allocation2 + $0x348] sm:$0xff] %v2400
        %2530 = vst [vmem:[#allocation2 + $0x390] sm:$0xff] %v2401
        %2531 = vst [vmem:[#allocation2 + $0x3d8] sm:$0xff] %v2402
        %2532 = vst [vmem:[#allocation2 + $0x420] sm:$0xff] %v2403
        %2533 = vst [vmem:[#allocation2 + $0x468] sm:$0xff] %v2404
        %2534 = vst [vmem:[#allocation2 + $0x38] sm:$0xff] %v2406
        %2535 = vst [vmem:[#allocation2 + $0x80] sm:$0xff] %v2407
        %2536 = vst [vmem:[#allocation2 + $0xc8] sm:$0xff] %v2408
        %2537 = vst [vmem:[#allocation2 + $0x110] sm:$0xff] %v2409
        %2538 = vst [vmem:[#allocation2 + $0x158] sm:$0xff] %v2410
        %2539 = vst [vmem:[#allocation2 + $0x1a0] sm:$0xff] %v2411
        %2540 = vst [vmem:[#allocation2 + $0x1e8] sm:$0xff] %v2412
        %2541 = vst [vmem:[#allocation2 + $0x230] sm:$0xff] %v2413
        %2542 = vst [vmem:[#allocation2 + $0x278] sm:$0xff] %v2414
        %2543 = vst [vmem:[#allocation2 + $0x2c0] sm:$0xff] %v2415
        %2544 = vst [vmem:[#allocation2 + $0x308] sm:$0xff] %v2416
        %2545 = vst [vmem:[#allocation2 + $0x350] sm:$0xff] %v2417
        %2546 = vst [vmem:[#allocation2 + $0x398] sm:$0xff] %v2418
        %2547 = vst [vmem:[#allocation2 + $0x3e0] sm:$0xff] %v2419
        %2548 = vst [vmem:[#allocation2 + $0x428] sm:$0xff] %v2420
        %2549 = vst [vmem:[#allocation2 + $0x470] sm:$0xff] %v2421
        %2550 = vst [vmem:[#allocation2 + $0x40] sm:$0xff] %v2390
        %2551 = vst [vmem:[#allocation2 + $0x88] sm:$0xff] %v2391
        %2552 = vst [vmem:[#allocation2 + $0xd0] sm:$0xff] %v2392
        %2553 = vst [vmem:[#allocation2 + $0x118] sm:$0xff] %v2393
        %2554 = vst [vmem:[#allocation2 + $0x160] sm:$0xff] %v2394
        %2555 = vst [vmem:[#allocation2 + $0x1a8] sm:$0xff] %v2395
        %2556 = vst [vmem:[#allocation2 + $0x1f0] sm:$0xff] %v2396
        %2557 = vst [vmem:[#allocation2 + $0x238] sm:$0xff] %v2397
        %2558 = vst [vmem:[#allocation2 + $0x280] sm:$0xff] %v2398
        %2559 = vst [vmem:[#allocation2 + $0x2c8] sm:$0xff] %v2399
        %2560 = vst [vmem:[#allocation2 + $0x310] sm:$0xff] %v2400
        %2561 = vst [vmem:[#allocation2 + $0x358] sm:$0xff] %v2401
        %2562 = vst [vmem:[#allocation2 + $0x3a0] sm:$0xff] %v2402
        %2563 = vst [vmem:[#allocation2 + $0x3e8] sm:$0xff] %v2403
        %2564 = vst [vmem:[#allocation2 + $0x430] sm:$0xff] %v2404
        %2565 = vst [vmem:[#allocation2 + $0x478] sm:$0xff] %v2405
        %v2566 = vld [vmem:[#allocation2] sm:$0xff]
        %v2567 = vld [vmem:[#allocation2 + $0x8] sm:$0xff]
        %v2568 = vld [vmem:[#allocation2 + $0x10] sm:$0xff]
        %v2569 = vld [vmem:[#allocation2 + $0x18] sm:$0xff]
        %v2570 = vld [vmem:[#allocation2 + $0x20] sm:$0xff]
        %v2571 = vld [vmem:[#allocation2 + $0x28] sm:$0xff]
        %v2572 = vld [vmem:[#allocation2 + $0x30] sm:$0xff]
        %v2573 = vld [vmem:[#allocation2 + $0x38] sm:$0xff]
        %v2574 = vld [vmem:[#allocation2 + $0x40] sm:$0xff]
        %v2575 = vld [vmem:[#allocation2 + $0x48] sm:$0xff]
        %v2576 = vld [vmem:[#allocation2 + $0x50] sm:$0xff]
        %v2577 = vld [vmem:[#allocation2 + $0x58] sm:$0xff]
        %v2578 = vld [vmem:[#allocation2 + $0x60] sm:$0xff]
        %v2579 = vld [vmem:[#allocation2 + $0x68] sm:$0xff]
        %v2580 = vld [vmem:[#allocation2 + $0x70] sm:$0xff]
        %v2581 = vld [vmem:[#allocation2 + $0x78] sm:$0xff]
        %v2582 = vld [vmem:[#allocation2 + $0x80] sm:$0xff]
        %v2583 = vld [vmem:[#allocation2 + $0x88] sm:$0xff]
        %v2584 = vld [vmem:[#allocation2 + $0x90] sm:$0xff]
        %v2585 = vld [vmem:[#allocation2 + $0x98] sm:$0xff]
        %v2586 = vld [vmem:[#allocation2 + $0xa0] sm:$0xff]
        %v2587 = vld [vmem:[#allocation2 + $0xa8] sm:$0xff]
        %v2588 = vld [vmem:[#allocation2 + $0xb0] sm:$0xff]
        %v2589 = vld [vmem:[#allocation2 + $0xb8] sm:$0xff]
        %v2590 = vld [vmem:[#allocation2 + $0xc0] sm:$0xff]
        %v2591 = vld [vmem:[#allocation2 + $0xc8] sm:$0xff]
        %v2592 = vld [vmem:[#allocation2 + $0xd0] sm:$0xff]
        %v2593 = vld [vmem:[#allocation2 + $0xd8] sm:$0xff]
        %v2594 = vld [vmem:[#allocation2 + $0xe0] sm:$0xff]
        %v2595 = vld [vmem:[#allocation2 + $0xe8] sm:$0xff]
        %v2596 = vld [vmem:[#allocation2 + $0xf0] sm:$0xff]
        %v2597 = vld [vmem:[#allocation2 + $0xf8] sm:$0xff]
        %v2598 = vld [vmem:[#allocation2 + $0x100] sm:$0xff]
        %v2599 = vld [vmem:[#allocation2 + $0x108] sm:$0xff]
        %v2600 = vld [vmem:[#allocation2 + $0x110] sm:$0xff]
        %v2601 = vld [vmem:[#allocation2 + $0x118] sm:$0xff]
        %v2602 = vld [vmem:[#allocation2 + $0x120] sm:$0xff]
        %v2603 = vld [vmem:[#allocation2 + $0x128] sm:$0xff]
        %v2604 = vld [vmem:[#allocation2 + $0x130] sm:$0xff]
        %v2605 = vld [vmem:[#allocation2 + $0x138] sm:$0xff]
        %v2606 = vld [vmem:[#allocation2 + $0x140] sm:$0xff]
        %v2607 = vld [vmem:[#allocation2 + $0x148] sm:$0xff]
        %v2608 = vld [vmem:[#allocation2 + $0x150] sm:$0xff]
        %v2609 = vld [vmem:[#allocation2 + $0x158] sm:$0xff]
        %v2610 = vld [vmem:[#allocation2 + $0x160] sm:$0xff]
        %v2611 = vld [vmem:[#allocation2 + $0x168] sm:$0xff]
        %v2612 = vld [vmem:[#allocation2 + $0x170] sm:$0xff]
        %v2613 = vld [vmem:[#allocation2 + $0x178] sm:$0xff]
        %v2614 = vld [vmem:[#allocation2 + $0x180] sm:$0xff]
        %v2615 = vld [vmem:[#allocation2 + $0x188] sm:$0xff]
        %v2616 = vld [vmem:[#allocation2 + $0x190] sm:$0xff]
        %v2617 = vld [vmem:[#allocation2 + $0x198] sm:$0xff]
        %v2618 = vld [vmem:[#allocation2 + $0x1a0] sm:$0xff]
        %v2619 = vld [vmem:[#allocation2 + $0x1a8] sm:$0xff]
        %v2620 = vld [vmem:[#allocation2 + $0x1b0] sm:$0xff]
        %v2621 = vld [vmem:[#allocation2 + $0x1b8] sm:$0xff]
        %v2622 = vld [vmem:[#allocation2 + $0x1c0] sm:$0xff]
        %v2623 = vld [vmem:[#allocation2 + $0x1c8] sm:$0xff]
        %v2624 = vld [vmem:[#allocation2 + $0x1d0] sm:$0xff]
        %v2625 = vld [vmem:[#allocation2 + $0x1d8] sm:$0xff]
        %v2626 = vld [vmem:[#allocation2 + $0x1e0] sm:$0xff]
        %v2627 = vld [vmem:[#allocation2 + $0x1e8] sm:$0xff]
        %v2628 = vld [vmem:[#allocation2 + $0x1f0] sm:$0xff]
        %v2629 = vld [vmem:[#allocation2 + $0x1f8] sm:$0xff]
        %v2630 = vld [vmem:[#allocation2 + $0x200] sm:$0xff]
        %v2631 = vld [vmem:[#allocation2 + $0x208] sm:$0xff]
        %v2632 = vld [vmem:[#allocation2 + $0x210] sm:$0xff]
        %v2633 = vld [vmem:[#allocation2 + $0x218] sm:$0xff]
        %v2634 = vld [vmem:[#allocation2 + $0x220] sm:$0xff]
        %v2635 = vld [vmem:[#allocation2 + $0x228] sm:$0xff]
        %v2636 = vld [vmem:[#allocation2 + $0x230] sm:$0xff]
        %v2637 = vld [vmem:[#allocation2 + $0x238] sm:$0xff]
        %v2638 = vld [vmem:[#allocation2 + $0x240] sm:$0xff]
        %v2639 = vld [vmem:[#allocation2 + $0x248] sm:$0xff]
        %v2640 = vld [vmem:[#allocation2 + $0x250] sm:$0xff]
        %v2641 = vld [vmem:[#allocation2 + $0x258] sm:$0xff]
        %v2642 = vld [vmem:[#allocation2 + $0x260] sm:$0xff]
        %v2643 = vld [vmem:[#allocation2 + $0x268] sm:$0xff]
        %v2644 = vld [vmem:[#allocation2 + $0x270] sm:$0xff]
        %v2645 = vld [vmem:[#allocation2 + $0x278] sm:$0xff]
        %v2646 = vld [vmem:[#allocation2 + $0x280] sm:$0xff]
        %v2647 = vld [vmem:[#allocation2 + $0x288] sm:$0xff]
        %v2648 = vld [vmem:[#allocation2 + $0x290] sm:$0xff]
        %v2649 = vld [vmem:[#allocation2 + $0x298] sm:$0xff]
        %v2650 = vld [vmem:[#allocation2 + $0x2a0] sm:$0xff]
        %v2651 = vld [vmem:[#allocation2 + $0x2a8] sm:$0xff]
        %v2652 = vld [vmem:[#allocation2 + $0x2b0] sm:$0xff]
        %v2653 = vld [vmem:[#allocation2 + $0x2b8] sm:$0xff]
        %v2654 = vld [vmem:[#allocation2 + $0x2c0] sm:$0xff]
        %v2655 = vld [vmem:[#allocation2 + $0x2c8] sm:$0xff]
        %v2656 = vld [vmem:[#allocation2 + $0x2d0] sm:$0xff]
        %v2657 = vld [vmem:[#allocation2 + $0x2d8] sm:$0xff]
        %v2658 = vld [vmem:[#allocation2 + $0x2e0] sm:$0xff]
        %v2659 = vld [vmem:[#allocation2 + $0x2e8] sm:$0xff]
        %v2660 = vld [vmem:[#allocation2 + $0x2f0] sm:$0xff]
        %v2661 = vld [vmem:[#allocation2 + $0x2f8] sm:$0xff]
        %v2662 = vld [vmem:[#allocation2 + $0x300] sm:$0xff]
        %v2663 = vld [vmem:[#allocation2 + $0x308] sm:$0xff]
        %v2664 = vld [vmem:[#allocation2 + $0x310] sm:$0xff]
        %v2665 = vld [vmem:[#allocation2 + $0x318] sm:$0xff]
        %v2666 = vld [vmem:[#allocation2 + $0x320] sm:$0xff]
        %v2667 = vld [vmem:[#allocation2 + $0x328] sm:$0xff]
        %v2668 = vld [vmem:[#allocation2 + $0x330] sm:$0xff]
        %v2669 = vld [vmem:[#allocation2 + $0x338] sm:$0xff]
        %v2670 = vld [vmem:[#allocation2 + $0x340] sm:$0xff]
        %v2671 = vld [vmem:[#allocation2 + $0x348] sm:$0xff]
        %v2672 = vld [vmem:[#allocation2 + $0x350] sm:$0xff]
        %v2673 = vld [vmem:[#allocation2 + $0x358] sm:$0xff]
        %v2674 = vld [vmem:[#allocation2 + $0x360] sm:$0xff]
        %v2675 = vld [vmem:[#allocation2 + $0x368] sm:$0xff]
        %v2676 = vld [vmem:[#allocation2 + $0x370] sm:$0xff]
        %v2677 = vld [vmem:[#allocation2 + $0x378] sm:$0xff]
        %v2678 = vld [vmem:[#allocation2 + $0x380] sm:$0xff]
        %v2679 = vld [vmem:[#allocation2 + $0x388] sm:$0xff]
        %v2680 = vld [vmem:[#allocation2 + $0x390] sm:$0xff]
        %v2681 = vld [vmem:[#allocation2 + $0x398] sm:$0xff]
        %v2682 = vld [vmem:[#allocation2 + $0x3a0] sm:$0xff]
        %v2683 = vld [vmem:[#allocation2 + $0x3a8] sm:$0xff]
        %v2684 = vld [vmem:[#allocation2 + $0x3b0] sm:$0xff]
        %v2685 = vld [vmem:[#allocation2 + $0x3b8] sm:$0xff]
        %v2686 = vld [vmem:[#allocation2 + $0x3c0] sm:$0xff]
        %v2687 = vld [vmem:[#allocation2 + $0x3c8] sm:$0xff]
        %v2688 = vld [vmem:[#allocation2 + $0x3d0] sm:$0xff]
        %v2689 = vld [vmem:[#allocation2 + $0x3d8] sm:$0xff]
        %v2690 = vld [vmem:[#allocation2 + $0x3e0] sm:$0xff]
        %v2691 = vld [vmem:[#allocation2 + $0x3e8] sm:$0xff]
        %v2692 = vld [vmem:[#allocation2 + $0x3f0] sm:$0xff]
        %v2693 = vld [vmem:[#allocation2 + $0x3f8] sm:$0xff]
        %v2694 = vld [vmem:[#allocation2 + $0x400] sm:$0xff]
        %v2695 = vld [vmem:[#allocation2 + $0x408] sm:$0xff]
        %v2696 = vld [vmem:[#allocation2 + $0x410] sm:$0xff]
        %v2697 = vld [vmem:[#allocation2 + $0x418] sm:$0xff]
        %v2698 = vld [vmem:[#allocation2 + $0x420] sm:$0xff]
        %v2699 = vld [vmem:[#allocation2 + $0x428] sm:$0xff]
        %v2700 = vld [vmem:[#allocation2 + $0x430] sm:$0xff]
        %v2701 = vld [vmem:[#allocation2 + $0x438] sm:$0xff]
        %v2702 = vld [vmem:[#allocation2 + $0x440] sm:$0xff]
        %v2703 = vld [vmem:[#allocation2 + $0x448] sm:$0xff]
        %v2704 = vld [vmem:[#allocation2 + $0x450] sm:$0xff]
        %v2705 = vld [vmem:[#allocation2 + $0x458] sm:$0xff]
        %v2706 = vld [vmem:[#allocation2 + $0x460] sm:$0xff]
        %v2707 = vld [vmem:[#allocation2 + $0x468] sm:$0xff]
        %v2708 = vld [vmem:[#allocation2 + $0x470] sm:$0xff]
        %v2709 = vld [vmem:[#allocation2 + $0x478] sm:$0xff]
        %v2710 = vld [vmem:[%s2] sm:$0xf]
        %v2711 = vld [vmem:[%s2 + $0x4] sm:$0xf]
        %v2712 = vld [vmem:[%s2 + $0x8] sm:$0xf]
        %v2713 = vld [vmem:[%s2 + $0xc] sm:$0xf]
        %v2714 = vld [vmem:[%s2 + $0x10] sm:$0xf]
        %v2715 = vld [vmem:[%s2 + $0x14] sm:$0xf]
        %v2716 = vld [vmem:[%s2 + $0x18] sm:$0xf]
        %v2717 = vld [vmem:[%s2 + $0x1c] sm:$0xf]
        %v2718 = vld [vmem:[%s2 + $0x20] sm:$0xf]
        %v2719 = vld [vmem:[%s2 + $0x24] sm:$0xf]
        %v2720 = vld [vmem:[%s2 + $0x28] sm:$0xf]
        %v2721 = vld [vmem:[%s2 + $0x2c] sm:$0xf]
        %v2722 = vld [vmem:[%s2 + $0x30] sm:$0xf]
        %v2723 = vld [vmem:[%s2 + $0x34] sm:$0xf]
        %v2724 = vld [vmem:[%s2 + $0x38] sm:$0xf]
        %v2725 = vld [vmem:[%s2 + $0x3c] sm:$0xf]
        %v2726 = vld [vmem:[%s2 + $0x40] sm:$0xf]
        %v2727 = vld [vmem:[%s2 + $0x44] sm:$0xf]
        %v2728 = vld [vmem:[%s2 + $0x48] sm:$0xf]
        %v2729 = vld [vmem:[%s2 + $0x4c] sm:$0xf]
        %v2730 = vld [vmem:[%s2 + $0x50] sm:$0xf]
        %v2731 = vld [vmem:[%s2 + $0x54] sm:$0xf]
        %v2732 = vld [vmem:[%s2 + $0x58] sm:$0xf]
        %v2733 = vld [vmem:[%s2 + $0x5c] sm:$0xf]
        %v2734 = vld [vmem:[%s2 + $0x60] sm:$0xf]
        %v2735 = vld [vmem:[%s2 + $0x64] sm:$0xf]
        %v2736 = vld [vmem:[%s2 + $0x68] sm:$0xf]
        %v2737 = vld [vmem:[%s2 + $0x6c] sm:$0xf]
        %v2738 = vld [vmem:[%s2 + $0x70] sm:$0xf]
        %v2739 = vld [vmem:[%s2 + $0x74] sm:$0xf]
        %v2740 = vld [vmem:[%s2 + $0x78] sm:$0xf]
        %v2741 = vld [vmem:[%s2 + $0x7c] sm:$0xf]
        %v2742 = vld [vmem:[%s2 + $0x80] sm:$0xf]
        %v2743 = vld [vmem:[%s2 + $0x84] sm:$0xf]
        %v2744 = vld [vmem:[%s2 + $0x88] sm:$0xf]
        %v2745 = vld [vmem:[%s2 + $0x8c] sm:$0xf]
        %v2746 = vld [vmem:[%s2 + $0x90] sm:$0xf]
        %v2747 = vld [vmem:[%s2 + $0x94] sm:$0xf]
        %v2748 = vld [vmem:[%s2 + $0x98] sm:$0xf]
        %v2749 = vld [vmem:[%s2 + $0x9c] sm:$0xf]
        %v2750 = vld [vmem:[%s2 + $0xa0] sm:$0xf]
        %v2751 = vld [vmem:[%s2 + $0xa4] sm:$0xf]
        %v2752 = vld [vmem:[%s2 + $0xa8] sm:$0xf]
        %v2753 = vld [vmem:[%s2 + $0xac] sm:$0xf]
        %v2754 = vld [vmem:[%s2 + $0xb0] sm:$0xf]
        %v2755 = vld [vmem:[%s2 + $0xb4] sm:$0xf]
        %v2756 = vld [vmem:[%s2 + $0xb8] sm:$0xf]
        %v2757 = vld [vmem:[%s2 + $0xbc] sm:$0xf]
        %v2758 = vld [vmem:[%s2 + $0xc0] sm:$0xf]
        %v2759 = vld [vmem:[%s2 + $0xc4] sm:$0xf]
        %v2760 = vld [vmem:[%s2 + $0xc8] sm:$0xf]
        %v2761 = vld [vmem:[%s2 + $0xcc] sm:$0xf]
        %v2762 = vld [vmem:[%s2 + $0xd0] sm:$0xf]
        %v2763 = vld [vmem:[%s2 + $0xd4] sm:$0xf]
        %v2764 = vld [vmem:[%s2 + $0xd8] sm:$0xf]
        %v2765 = vld [vmem:[%s2 + $0xdc] sm:$0xf]
        %v2766 = vld [vmem:[%s2 + $0xe0] sm:$0xf]
        %v2767 = vld [vmem:[%s2 + $0xe4] sm:$0xf]
        %v2768 = vld [vmem:[%s2 + $0xe8] sm:$0xf]
        %v2769 = vld [vmem:[%s2 + $0xec] sm:$0xf]
        %v2770 = vld [vmem:[%s2 + $0xf0] sm:$0xf]
        %v2771 = vld [vmem:[%s2 + $0xf4] sm:$0xf]
        %v2772 = vld [vmem:[%s2 + $0xf8] sm:$0xf]
        %v2773 = vld [vmem:[%s2 + $0xfc] sm:$0xf]
        %v2774 = vld [vmem:[%s2 + $0x100] sm:$0xf]
        %v2775 = vld [vmem:[%s2 + $0x104] sm:$0xf]
        %v2776 = vld [vmem:[%s2 + $0x108] sm:$0xf]
        %v2777 = vld [vmem:[%s2 + $0x10c] sm:$0xf]
        %v2778 = vld [vmem:[%s2 + $0x110] sm:$0xf]
        %v2779 = vld [vmem:[%s2 + $0x114] sm:$0xf]
        %v2780 = vld [vmem:[%s2 + $0x118] sm:$0xf]
        %v2781 = vld [vmem:[%s2 + $0x11c] sm:$0xf]
        %v2782 = vld [vmem:[%s2 + $0x120] sm:$0xf]
        %v2783 = vld [vmem:[%s2 + $0x124] sm:$0xf]
        %v2784 = vld [vmem:[%s2 + $0x128] sm:$0xf]
        %v2785 = vld [vmem:[%s2 + $0x12c] sm:$0xf]
        %v2786 = vld [vmem:[%s2 + $0x130] sm:$0xf]
        %v2787 = vld [vmem:[%s2 + $0x134] sm:$0xf]
        %v2788 = vld [vmem:[%s2 + $0x138] sm:$0xf]
        %v2789 = vld [vmem:[%s2 + $0x13c] sm:$0xf]
        %v2790 = vld [vmem:[%s2 + $0x140] sm:$0xf]
        %v2791 = vld [vmem:[%s2 + $0x144] sm:$0xf]
        %v2792 = vld [vmem:[%s2 + $0x148] sm:$0xf]
        %v2793 = vld [vmem:[%s2 + $0x14c] sm:$0xf]
        %v2794 = vld [vmem:[%s2 + $0x150] sm:$0xf]
        %v2795 = vld [vmem:[%s2 + $0x154] sm:$0xf]
        %v2796 = vld [vmem:[%s2 + $0x158] sm:$0xf]
        %v2797 = vld [vmem:[%s2 + $0x15c] sm:$0xf]
        %v2798 = vld [vmem:[%s2 + $0x160] sm:$0xf]
        %v2799 = vld [vmem:[%s2 + $0x164] sm:$0xf]
        %v2800 = vld [vmem:[%s2 + $0x168] sm:$0xf]
        %v2801 = vld [vmem:[%s2 + $0x16c] sm:$0xf]
        %v2802 = vld [vmem:[%s2 + $0x170] sm:$0xf]
        %v2803 = vld [vmem:[%s2 + $0x174] sm:$0xf]
        %v2804 = vld [vmem:[%s2 + $0x178] sm:$0xf]
        %v2805 = vld [vmem:[%s2 + $0x17c] sm:$0xf]
        %v2806 = vld [vmem:[%s2 + $0x180] sm:$0xf]
        %v2807 = vld [vmem:[%s2 + $0x184] sm:$0xf]
        %v2808 = vld [vmem:[%s2 + $0x188] sm:$0xf]
        %v2809 = vld [vmem:[%s2 + $0x18c] sm:$0xf]
        %v2810 = vld [vmem:[%s2 + $0x190] sm:$0xf]
        %v2811 = vld [vmem:[%s2 + $0x194] sm:$0xf]
        %v2812 = vld [vmem:[%s2 + $0x198] sm:$0xf]
        %v2813 = vld [vmem:[%s2 + $0x19c] sm:$0xf]
        %v2814 = vld [vmem:[%s2 + $0x1a0] sm:$0xf]
        %v2815 = vld [vmem:[%s2 + $0x1a4] sm:$0xf]
        %v2816 = vld [vmem:[%s2 + $0x1a8] sm:$0xf]
        %v2817 = vld [vmem:[%s2 + $0x1ac] sm:$0xf]
        %v2818 = vld [vmem:[%s2 + $0x1b0] sm:$0xf]
        %v2819 = vld [vmem:[%s2 + $0x1b4] sm:$0xf]
        %v2820 = vld [vmem:[%s2 + $0x1b8] sm:$0xf]
        %v2821 = vld [vmem:[%s2 + $0x1bc] sm:$0xf]
        %v2822 = vld [vmem:[%s2 + $0x1c0] sm:$0xf]
        %v2823 = vld [vmem:[%s2 + $0x1c4] sm:$0xf]
        %v2824 = vld [vmem:[%s2 + $0x1c8] sm:$0xf]
        %v2825 = vld [vmem:[%s2 + $0x1cc] sm:$0xf]
        %v2826 = vld [vmem:[%s2 + $0x1d0] sm:$0xf]
        %v2827 = vld [vmem:[%s2 + $0x1d4] sm:$0xf]
        %v2828 = vld [vmem:[%s2 + $0x1d8] sm:$0xf]
        %v2829 = vld [vmem:[%s2 + $0x1dc] sm:$0xf]
        %v2830 = vld [vmem:[%s2 + $0x1e0] sm:$0xf]
        %v2831 = vld [vmem:[%s2 + $0x1e4] sm:$0xf]
        %v2832 = vld [vmem:[%s2 + $0x1e8] sm:$0xf]
        %v2833 = vld [vmem:[%s2 + $0x1ec] sm:$0xf]
        %v2834 = vld [vmem:[%s2 + $0x1f0] sm:$0xf]
        %v2835 = vld [vmem:[%s2 + $0x1f4] sm:$0xf]
        %v2836 = vld [vmem:[%s2 + $0x1f8] sm:$0xf]
        %v2837 = vld [vmem:[%s2 + $0x1fc] sm:$0xf]
        %v2838 = vld [vmem:[%s2 + $0x200] sm:$0xf]
        %v2839 = vld [vmem:[%s2 + $0x204] sm:$0xf]
        %v2840 = vld [vmem:[%s2 + $0x208] sm:$0xf]
        %v2841 = vld [vmem:[%s2 + $0x20c] sm:$0xf]
        %v2842 = vld [vmem:[%s2 + $0x210] sm:$0xf]
        %v2843 = vld [vmem:[%s2 + $0x214] sm:$0xf]
        %v2844 = vld [vmem:[%s2 + $0x218] sm:$0xf]
        %v2845 = vld [vmem:[%s2 + $0x21c] sm:$0xf]
        %v2846 = vld [vmem:[%s2 + $0x220] sm:$0xf]
        %v2847 = vld [vmem:[%s2 + $0x224] sm:$0xf]
        %v2848 = vld [vmem:[%s2 + $0x228] sm:$0xf]
        %v2849 = vld [vmem:[%s2 + $0x22c] sm:$0xf]
        %v2850 = vld [vmem:[%s2 + $0x230] sm:$0xf]
        %v2851 = vld [vmem:[%s2 + $0x234] sm:$0xf]
        %v2852 = vld [vmem:[%s2 + $0x238] sm:$0xf]
        %v2853 = vld [vmem:[%s2 + $0x23c] sm:$0xf]
        %v2854 = vld [vmem:[%s3] sm:$0x1]
        %v2856 = vlaneseq
        %v2857 = vshrl.u32 %v2856, 7
        %v2858 = vsub.s32 0, %v2857
        %v2859 = vrot.slane %v2854, %v2858
        %v3005 = vunpack.c.l.b16 %v2710
        %v3006 = vunpack.c.l.b16 %v2711
        %v3007 = vunpack.c.l.b16 %v2712
        %v3008 = vunpack.c.l.b16 %v2713
        %v3009 = vunpack.c.l.b16 %v2714
        %v3010 = vunpack.c.l.b16 %v2715
        %v3011 = vunpack.c.l.b16 %v2716
        %v3012 = vunpack.c.l.b16 %v2717
        %v3013 = vunpack.c.l.b16 %v2718
        %v3014 = vunpack.c.l.b16 %v2719
        %v3015 = vunpack.c.l.b16 %v2720
        %v3016 = vunpack.c.l.b16 %v2721
        %v3017 = vunpack.c.l.b16 %v2722
        %v3018 = vunpack.c.l.b16 %v2723
        %v3019 = vunpack.c.l.b16 %v2724
        %v3020 = vunpack.c.l.b16 %v2725
        %v3021 = vunpack.c.l.b16 %v2726
        %v3022 = vunpack.c.l.b16 %v2727
        %v3023 = vunpack.c.l.b16 %v2728
        %v3024 = vunpack.c.l.b16 %v2729
        %v3025 = vunpack.c.l.b16 %v2730
        %v3026 = vunpack.c.l.b16 %v2731
        %v3027 = vunpack.c.l.b16 %v2732
        %v3028 = vunpack.c.l.b16 %v2733
        %v3029 = vunpack.c.l.b16 %v2734
        %v3030 = vunpack.c.l.b16 %v2735
        %v3031 = vunpack.c.l.b16 %v2736
        %v3032 = vunpack.c.l.b16 %v2737
        %v3033 = vunpack.c.l.b16 %v2738
        %v3034 = vunpack.c.l.b16 %v2739
        %v3035 = vunpack.c.l.b16 %v2740
        %v3036 = vunpack.c.l.b16 %v2741
        %v3037 = vunpack.c.l.b16 %v2742
        %v3038 = vunpack.c.l.b16 %v2743
        %v3039 = vunpack.c.l.b16 %v2744
        %v3040 = vunpack.c.l.b16 %v2745
        %v3041 = vunpack.c.l.b16 %v2746
        %v3042 = vunpack.c.l.b16 %v2747
        %v3043 = vunpack.c.l.b16 %v2748
        %v3044 = vunpack.c.l.b16 %v2749
        %v3045 = vunpack.c.l.b16 %v2750
        %v3046 = vunpack.c.l.b16 %v2751
        %v3047 = vunpack.c.l.b16 %v2752
        %v3048 = vunpack.c.l.b16 %v2753
        %v3049 = vunpack.c.l.b16 %v2754
        %v3050 = vunpack.c.l.b16 %v2755
        %v3051 = vunpack.c.l.b16 %v2756
        %v3052 = vunpack.c.l.b16 %v2757
        %v3053 = vunpack.c.l.b16 %v2758
        %v3054 = vunpack.c.l.b16 %v2759
        %v3055 = vunpack.c.l.b16 %v2760
        %v3056 = vunpack.c.l.b16 %v2761
        %v3057 = vunpack.c.l.b16 %v2762
        %v3058 = vunpack.c.l.b16 %v2763
        %v3059 = vunpack.c.l.b16 %v2764
        %v3060 = vunpack.c.l.b16 %v2765
        %v3061 = vunpack.c.l.b16 %v2766
        %v3062 = vunpack.c.l.b16 %v2767
        %v3063 = vunpack.c.l.b16 %v2768
        %v3064 = vunpack.c.l.b16 %v2769
        %v3065 = vunpack.c.l.b16 %v2770
        %v3066 = vunpack.c.l.b16 %v2771
        %v3067 = vunpack.c.l.b16 %v2772
        %v3068 = vunpack.c.l.b16 %v2773
        %v3069 = vunpack.c.l.b16 %v2774
        %v3070 = vunpack.c.l.b16 %v2775
        %v3071 = vunpack.c.l.b16 %v2776
        %v3072 = vunpack.c.l.b16 %v2777
        %v3073 = vunpack.c.l.b16 %v2778
        %v3074 = vunpack.c.l.b16 %v2779
        %v3075 = vunpack.c.l.b16 %v2780
        %v3076 = vunpack.c.l.b16 %v2781
        %v3077 = vunpack.c.l.b16 %v2782
        %v3078 = vunpack.c.l.b16 %v2783
        %v3079 = vunpack.c.l.b16 %v2784
        %v3080 = vunpack.c.l.b16 %v2785
        %v3081 = vunpack.c.l.b16 %v2786
        %v3082 = vunpack.c.l.b16 %v2787
        %v3083 = vunpack.c.l.b16 %v2788
        %v3084 = vunpack.c.l.b16 %v2789
        %v3085 = vunpack.c.l.b16 %v2790
        %v3086 = vunpack.c.l.b16 %v2791
        %v3087 = vunpack.c.l.b16 %v2792
        %v3088 = vunpack.c.l.b16 %v2793
        %v3089 = vunpack.c.l.b16 %v2794
        %v3090 = vunpack.c.l.b16 %v2795
        %v3091 = vunpack.c.l.b16 %v2796
        %v3092 = vunpack.c.l.b16 %v2797
        %v3093 = vunpack.c.l.b16 %v2798
        %v3094 = vunpack.c.l.b16 %v2799
        %v3095 = vunpack.c.l.b16 %v2800
        %v3096 = vunpack.c.l.b16 %v2801
        %v3097 = vunpack.c.l.b16 %v2802
        %v3098 = vunpack.c.l.b16 %v2803
        %v3099 = vunpack.c.l.b16 %v2804
        %v3100 = vunpack.c.l.b16 %v2805
        %v3101 = vunpack.c.l.b16 %v2806
        %v3102 = vunpack.c.l.b16 %v2807
        %v3103 = vunpack.c.l.b16 %v2808
        %v3104 = vunpack.c.l.b16 %v2809
        %v3105 = vunpack.c.l.b16 %v2810
        %v3106 = vunpack.c.l.b16 %v2811
        %v3107 = vunpack.c.l.b16 %v2812
        %v3108 = vunpack.c.l.b16 %v2813
        %v3109 = vunpack.c.l.b16 %v2814
        %v3110 = vunpack.c.l.b16 %v2815
        %v3111 = vunpack.c.l.b16 %v2816
        %v3112 = vunpack.c.l.b16 %v2817
        %v3113 = vunpack.c.l.b16 %v2818
        %v3114 = vunpack.c.l.b16 %v2819
        %v3115 = vunpack.c.l.b16 %v2820
        %v3116 = vunpack.c.l.b16 %v2821
        %v3117 = vunpack.c.l.b16 %v2822
        %v3118 = vunpack.c.l.b16 %v2823
        %v3119 = vunpack.c.l.b16 %v2824
        %v3120 = vunpack.c.l.b16 %v2825
        %v3121 = vunpack.c.l.b16 %v2826
        %v3122 = vunpack.c.l.b16 %v2827
        %v3123 = vunpack.c.l.b16 %v2828
        %v3124 = vunpack.c.l.b16 %v2829
        %v3125 = vunpack.c.l.b16 %v2830
        %v3126 = vunpack.c.l.b16 %v2831
        %v3127 = vunpack.c.l.b16 %v2832
        %v3128 = vunpack.c.l.b16 %v2833
        %v3129 = vunpack.c.l.b16 %v2834
        %v3130 = vunpack.c.l.b16 %v2835
        %v3131 = vunpack.c.l.b16 %v2836
        %v3132 = vunpack.c.l.b16 %v2837
        %v3133 = vunpack.c.l.b16 %v2838
        %v3134 = vunpack.c.l.b16 %v2839
        %v3135 = vunpack.c.l.b16 %v2840
        %v3136 = vunpack.c.l.b16 %v2841
        %v3137 = vunpack.c.l.b16 %v2842
        %v3138 = vunpack.c.l.b16 %v2843
        %v3139 = vunpack.c.l.b16 %v2844
        %v3140 = vunpack.c.l.b16 %v2845
        %v3141 = vunpack.c.l.b16 %v2846
        %v3142 = vunpack.c.l.b16 %v2847
        %v3143 = vunpack.c.l.b16 %v2848
        %v3144 = vunpack.c.l.b16 %v2849
        %v3145 = vunpack.c.l.b16 %v2850
        %v3146 = vunpack.c.l.b16 %v2851
        %v3147 = vunpack.c.l.b16 %v2852
        %v3148 = vunpack.c.l.b16 %v2853
        %v3149 = vpack.c.b16 %v3006, %v3005
        %v3150 = vpack.c.b16 %v3008, %v3007
        %v3151 = vpack.c.b16 %v3010, %v3009
        %v3152 = vpack.c.b16 %v3012, %v3011
        %v3153 = vpack.c.b16 %v3014, %v3013
        %v3154 = vpack.c.b16 %v3016, %v3015
        %v3155 = vpack.c.b16 %v3018, %v3017
        %v3156 = vpack.c.b16 %v3020, %v3019
        %v3157 = vpack.c.b16 %v3022, %v3021
        %v3158 = vpack.c.b16 %v3024, %v3023
        %v3159 = vpack.c.b16 %v3026, %v3025
        %v3160 = vpack.c.b16 %v3028, %v3027
        %v3161 = vpack.c.b16 %v3030, %v3029
        %v3162 = vpack.c.b16 %v3032, %v3031
        %v3163 = vpack.c.b16 %v3034, %v3033
        %v3164 = vpack.c.b16 %v3036, %v3035
        %v3165 = vpack.c.b16 %v3038, %v3037
        %v3166 = vpack.c.b16 %v3040, %v3039
        %v3167 = vpack.c.b16 %v3042, %v3041
        %v3168 = vpack.c.b16 %v3044, %v3043
        %v3169 = vpack.c.b16 %v3046, %v3045
        %v3170 = vpack.c.b16 %v3048, %v3047
        %v3171 = vpack.c.b16 %v3050, %v3049
        %v3172 = vpack.c.b16 %v3052, %v3051
        %v3173 = vpack.c.b16 %v3054, %v3053
        %v3174 = vpack.c.b16 %v3056, %v3055
        %v3175 = vpack.c.b16 %v3058, %v3057
        %v3176 = vpack.c.b16 %v3060, %v3059
        %v3177 = vpack.c.b16 %v3062, %v3061
        %v3178 = vpack.c.b16 %v3064, %v3063
        %v3179 = vpack.c.b16 %v3066, %v3065
        %v3180 = vpack.c.b16 %v3068, %v3067
        %v3181 = vpack.c.b16 %v3070, %v3069
        %v3182 = vpack.c.b16 %v3072, %v3071
        %v3183 = vpack.c.b16 %v3074, %v3073
        %v3184 = vpack.c.b16 %v3076, %v3075
        %v3185 = vpack.c.b16 %v3078, %v3077
        %v3186 = vpack.c.b16 %v3080, %v3079
        %v3187 = vpack.c.b16 %v3082, %v3081
        %v3188 = vpack.c.b16 %v3084, %v3083
        %v3189 = vpack.c.b16 %v3086, %v3085
        %v3190 = vpack.c.b16 %v3088, %v3087
        %v3191 = vpack.c.b16 %v3090, %v3089
        %v3192 = vpack.c.b16 %v3092, %v3091
        %v3193 = vpack.c.b16 %v3094, %v3093
        %v3194 = vpack.c.b16 %v3096, %v3095
        %v3195 = vpack.c.b16 %v3098, %v3097
        %v3196 = vpack.c.b16 %v3100, %v3099
        %v3197 = vpack.c.b16 %v3102, %v3101
        %v3198 = vpack.c.b16 %v3104, %v3103
        %v3199 = vpack.c.b16 %v3106, %v3105
        %v3200 = vpack.c.b16 %v3108, %v3107
        %v3201 = vpack.c.b16 %v3110, %v3109
        %v3202 = vpack.c.b16 %v3112, %v3111
        %v3203 = vpack.c.b16 %v3114, %v3113
        %v3204 = vpack.c.b16 %v3116, %v3115
        %v3205 = vpack.c.b16 %v3118, %v3117
        %v3206 = vpack.c.b16 %v3120, %v3119
        %v3207 = vpack.c.b16 %v3122, %v3121
        %v3208 = vpack.c.b16 %v3124, %v3123
        %v3209 = vpack.c.b16 %v3126, %v3125
        %v3210 = vpack.c.b16 %v3128, %v3127
        %v3211 = vpack.c.b16 %v3130, %v3129
        %v3212 = vpack.c.b16 %v3132, %v3131
        %v3213 = vpack.c.b16 %v3134, %v3133
        %v3214 = vpack.c.b16 %v3136, %v3135
        %v3215 = vpack.c.b16 %v3138, %v3137
        %v3216 = vpack.c.b16 %v3140, %v3139
        %v3217 = vpack.c.b16 %v3142, %v3141
        %v3218 = vpack.c.b16 %v3144, %v3143
        %v3219 = vpack.c.b16 %v3146, %v3145
        %v3220 = vpack.c.b16 %v3148, %v3147
        %3293 = vmatprep.subr.bf16.mxu0 0
        %3294 = vmatpush1.bf16.msra.mxu0 %v3149
        %3295 = vmatprep.subr.bf16.mxu0 0
        %3296 = vmatpush1.bf16.msra.mxu0 %v3150
        %3297 = vmatprep.subr.bf16.mxu0 0
        %3298 = vmatpush1.bf16.msra.mxu0 %v3151
        %3299 = vmatprep.subr.bf16.mxu0 0
        %3300 = vmatpush1.bf16.msra.mxu0 %v3152
        %3301 = vmatprep.subr.bf16.mxu0 0
        %3302 = vmatpush1.bf16.msra.mxu0 %v3153
        %3303 = vmatprep.subr.bf16.mxu0 0
        %3304 = vmatpush1.bf16.msra.mxu0 %v3154
        %3305 = vmatprep.subr.bf16.mxu0 0
        %3306 = vmatpush1.bf16.msra.mxu0 %v3155
        %3307 = vmatprep.subr.bf16.mxu0 0
        %3308 = vmatpush1.bf16.msra.mxu0 %v3156
        %3309 = vmatprep.subr.bf16.mxu0 0
        %3310 = vmatpush1.bf16.msra.mxu0 %v3157
        %3311 = vmatprep.subr.bf16.mxu0 0
        %3312 = vmatpush1.bf16.msra.mxu0 %v3158
        %3313 = vmatprep.subr.bf16.mxu0 0
        %3314 = vmatpush1.bf16.msra.mxu0 %v3159
        %3315 = vmatprep.subr.bf16.mxu0 0
        %3316 = vmatpush1.bf16.msra.mxu0 %v3160
        %3317 = vmatprep.subr.bf16.mxu0 0
        %3318 = vmatpush1.bf16.msra.mxu0 %v3161
        %3319 = vmatprep.subr.bf16.mxu0 0
        %3320 = vmatpush1.bf16.msra.mxu0 %v3162
        %3321 = vmatprep.subr.bf16.mxu0 0
        %3322 = vmatpush1.bf16.msra.mxu0 %v3163
        %3323 = vmatprep.subr.bf16.mxu0 0
        %3324 = vmatpush1.bf16.msra.mxu0 %v3164
        %3325 = vmatprep.mubr.bf16.mxu0 %v2567
        %3326 = vmatmul.mubr.bf16.gmra.mrb[0].mxu0 %v2566
        %v3327 = vpop.f32.mrb[0].mxu0
        %v3328 = vadd.f32 %v2859, %v3327
        %v3329 = vpop.f32.mrb[0].mxu0
        %v3330 = vpop.f32.mrb[0].mxu0
        %v3331 = vadd.f32 %v2859, %v3330
        %v3332 = vpop.f32.mrb[0].mxu0
        %3333 = vmatprep.mubr.bf16.mxu0 %v2576
        %3334 = vmatmul.mubr.bf16.gmra.mrb[0].mxu0 %v2575
        %v3335 = vpop.f32.mrb[0].mxu0
        %v3336 = vadd.f32 %v2859, %v3335
        %v3337 = vpop.f32.mrb[0].mxu0
        %v3338 = vpop.f32.mrb[0].mxu0
        %v3339 = vadd.f32 %v2859, %v3338
        %v3340 = vpop.f32.mrb[0].mxu0
        %3341 = vmatprep.mubr.bf16.mxu0 %v2585
        %3342 = vmatmul.mubr.bf16.gmra.mrb[0].mxu0 %v2584
        %v3343 = vpop.f32.mrb[0].mxu0
        %v3344 = vadd.f32 %v2859, %v3343
        %v3345 = vpop.f32.mrb[0].mxu0
        %v3346 = vpop.f32.mrb[0].mxu0
        %v3347 = vadd.f32 %v2859, %v3346
        %v3348 = vpop.f32.mrb[0].mxu0
        %3349 = vmatprep.mubr.bf16.mxu0 %v2594
        %3350 = vmatmul.mubr.bf16.gmra.mrb[0].mxu0 %v2593
        %v3351 = vpop.f32.mrb[0].mxu0
        %v3352 = vadd.f32 %v2859, %v3351
        %v3353 = vpop.f32.mrb[0].mxu0
        %v3354 = vpop.f32.mrb[0].mxu0
        %v3355 = vadd.f32 %v2859, %v3354
        %v3356 = vpop.f32.mrb[0].mxu0
        %3357 = vmatprep.mubr.bf16.mxu0 %v2603
        %3358 = vmatmul.mubr.bf16.gmra.mrb[0].mxu0 %v2602
        %v3359 = vpop.f32.mrb[0].mxu0
        %v3360 = vadd.f32 %v2859, %v3359
        %v3361 = vpop.f32.mrb[0].mxu0
        %v3362 = vpop.f32.mrb[0].mxu0
        %v3363 = vadd.f32 %v2859, %v3362
        %v3364 = vpop.f32.mrb[0].mxu0
        %3365 = vmatprep.mubr.bf16.mxu0 %v2612
        %3366 = vmatmul.mubr.bf16.gmra.mrb[0].mxu0 %v2611
        %v3367 = vpop.f32.mrb[0].mxu0
        %v3368 = vadd.f32 %v2859, %v3367
        %v3369 = vpop.f32.mrb[0].mxu0
        %v3370 = vpop.f32.mrb[0].mxu0
        %v3371 = vadd.f32 %v2859, %v3370
        %v3372 = vpop.f32.mrb[0].mxu0
        %3373 = vmatprep.mubr.bf16.mxu0 %v2621
        %3374 = vmatmul.mubr.bf16.gmra.mrb[0].mxu0 %v2620
        %v3375 = vpop.f32.mrb[0].mxu0
        %v3376 = vadd.f32 %v2859, %v3375
        %v3377 = vpop.f32.mrb[0].mxu0
        %v3378 = vpop.f32.mrb[0].mxu0
        %v3379 = vadd.f32 %v2859, %v3378
        %v3380 = vpop.f32.mrb[0].mxu0
        %3381 = vmatprep.mubr.bf16.mxu0 %v2630
        %3382 = vmatmul.mubr.bf16.gmra.mrb[0].mxu0 %v2629
        %v3383 = vpop.f32.mrb[0].mxu0
        %v3384 = vadd.f32 %v2859, %v3383
        %v3385 = vpop.f32.mrb[0].mxu0
        %v3386 = vpop.f32.mrb[0].mxu0
        %v3387 = vadd.f32 %v2859, %v3386
        %v3388 = vpop.f32.mrb[0].mxu0
        %3389 = vmatprep.mubr.bf16.mxu0 %v2639
        %3390 = vmatmul.mubr.bf16.gmra.mrb[0].mxu0 %v2638
        %v3391 = vpop.f32.mrb[0].mxu0
        %v3392 = vadd.f32 %v2859, %v3391
        %v3393 = vpop.f32.mrb[0].mxu0
        %v3394 = vpop.f32.mrb[0].mxu0
        %v3395 = vadd.f32 %v2859, %v3394
        %v3396 = vpop.f32.mrb[0].mxu0
        %3397 = vmatprep.mubr.bf16.mxu0 %v2648
        %3398 = vmatmul.mubr.bf16.gmra.mrb[0].mxu0 %v2647
        %v3399 = vpop.f32.mrb[0].mxu0
        %v3400 = vadd.f32 %v2859, %v3399
        %v3401 = vpop.f32.mrb[0].mxu0
        %v3402 = vpop.f32.mrb[0].mxu0
        %v3403 = vadd.f32 %v2859, %v3402
        %v3404 = vpop.f32.mrb[0].mxu0
        %3405 = vmatprep.mubr.bf16.mxu0 %v2657
        %3406 = vmatmul.mubr.bf16.gmra.mrb[0].mxu0 %v2656
        %v3407 = vpop.f32.mrb[0].mxu0
        %v3408 = vadd.f32 %v2859, %v3407
        %v3409 = vpop.f32.mrb[0].mxu0
        %v3410 = vpop.f32.mrb[0].mxu0
        %v3411 = vadd.f32 %v2859, %v3410
        %v3412 = vpop.f32.mrb[0].mxu0
        %3413 = vmatprep.mubr.bf16.mxu0 %v2666
        %3414 = vmatmul.mubr.bf16.gmra.mrb[0].mxu0 %v2665
        %v3415 = vpop.f32.mrb[0].mxu0
        %v3416 = vadd.f32 %v2859, %v3415
        %v3417 = vpop.f32.mrb[0].mxu0
        %v3418 = vpop.f32.mrb[0].mxu0
        %v3419 = vadd.f32 %v2859, %v3418
        %v3420 = vpop.f32.mrb[0].mxu0
        %3421 = vmatprep.mubr.bf16.mxu0 %v2675
        %3422 = vmatmul.mubr.bf16.gmra.mrb[0].mxu0 %v2674
        %v3423 = vpop.f32.mrb[0].mxu0
        %v3424 = vadd.f32 %v2859, %v3423
        %v3425 = vpop.f32.mrb[0].mxu0
        %v3426 = vpop.f32.mrb[0].mxu0
        %v3427 = vadd.f32 %v2859, %v3426
        %v3428 = vpop.f32.mrb[0].mxu0
        %3429 = vmatprep.mubr.bf16.mxu0 %v2684
        %3430 = vmatmul.mubr.bf16.gmra.mrb[0].mxu0 %v2683
        %v3431 = vpop.f32.mrb[0].mxu0
        %v3432 = vadd.f32 %v2859, %v3431
        %v3433 = vpop.f32.mrb[0].mxu0
        %v3434 = vpop.f32.mrb[0].mxu0
        %v3435 = vadd.f32 %v2859, %v3434
        %v3436 = vpop.f32.mrb[0].mxu0
        %3437 = vmatprep.mubr.bf16.mxu0 %v2693
        %3438 = vmatmul.mubr.bf16.gmra.mrb[0].mxu0 %v2692
        %v3439 = vpop.f32.mrb[0].mxu0
        %v3440 = vadd.f32 %v2859, %v3439
        %v3441 = vpop.f32.mrb[0].mxu0
        %v3442 = vpop.f32.mrb[0].mxu0
        %v3443 = vadd.f32 %v2859, %v3442
        %v3444 = vpop.f32.mrb[0].mxu0
        %3445 = vmatprep.mubr.bf16.mxu0 %v2702
        %3446 = vmatmul.mubr.bf16.gmra.mrb[0].mxu0 %v2701
        %v3447 = vpop.f32.mrb[0].mxu0
        %v3448 = vadd.f32 %v2859, %v3447
        %v3449 = vpop.f32.mrb[0].mxu0
        %v3450 = vpop.f32.mrb[0].mxu0
        %v3451 = vadd.f32 %v2859, %v3450
        %v3452 = vpop.f32.mrb[0].mxu0
        %3453 = vdwg.mxu0
        %3454 = vmatprep.subr.bf16.mxu0 0
        %3455 = vmatpush1.bf16.msra.mxu0 %v3165
        %3456 = vmatprep.subr.bf16.mxu0 0
        %3457 = vmatpush1.bf16.msra.mxu0 %v3166
        %3458 = vmatprep.subr.bf16.mxu0 0
        %3459 = vmatpush1.bf16.msra.mxu0 %v3167
        %3460 = vmatprep.subr.bf16.mxu0 0
        %3461 = vmatpush1.bf16.msra.mxu0 %v3168
        %3462 = vmatprep.subr.bf16.mxu0 0
        %3463 = vmatpush1.bf16.msra.mxu0 %v3169
        %3464 = vmatprep.subr.bf16.mxu0 0
        %3465 = vmatpush1.bf16.msra.mxu0 %v3170
        %3466 = vmatprep.subr.bf16.mxu0 0
        %3467 = vmatpush1.bf16.msra.mxu0 %v3171
        %3468 = vmatprep.subr.bf16.mxu0 0
        %3469 = vmatpush1.bf16.msra.mxu0 %v3172
        %3470 = vmatprep.subr.bf16.mxu0 0
        %3471 = vmatpush1.bf16.msra.mxu0 %v3173
        %3472 = vmatprep.subr.bf16.mxu0 0
        %3473 = vmatpush1.bf16.msra.mxu0 %v3174
        %3474 = vmatprep.subr.bf16.mxu0 0
        %3475 = vmatpush1.bf16.msra.mxu0 %v3175
        %3476 = vmatprep.subr.bf16.mxu0 0
        %3477 = vmatpush1.bf16.msra.mxu0 %v3176
        %3478 = vmatprep.subr.bf16.mxu0 0
        %3479 = vmatpush1.bf16.msra.mxu0 %v3177
        %3480 = vmatprep.subr.bf16.mxu0 0
        %3481 = vmatpush1.bf16.msra.mxu0 %v3178
        %3482 = vmatprep.subr.bf16.mxu0 0
        %3483 = vmatpush1.bf16.msra.mxu0 %v3179
        %3484 = vmatprep.subr.bf16.mxu0 0
        %3485 = vmatpush1.bf16.msra.mxu0 %v3180
        %3486 = vmatprep.mubr.bf16.mxu0 %v2569
        %3487 = vmatmul.mubr.bf16.gmra.mrb[0].mxu0 %v2568
        %v3488 = vpop.f32.mrb[0].mxu0
        %v3489 = vadd.f32 %v3328, %v3488
        %v3490 = vpop.f32.mrb[0].mxu0
        %v3491 = vpop.f32.mrb[0].mxu0
        %v3492 = vadd.f32 %v3331, %v3491
        %v3493 = vpop.f32.mrb[0].mxu0
        %3494 = vmatprep.mubr.bf16.mxu0 %v2578
        %3495 = vmatmul.mubr.bf16.gmra.mrb[0].mxu0 %v2577
        %v3496 = vpop.f32.mrb[0].mxu0
        %v3497 = vadd.f32 %v3336, %v3496
        %v3498 = vpop.f32.mrb[0].mxu0
        %v3499 = vpop.f32.mrb[0].mxu0
        %v3500 = vadd.f32 %v3339, %v3499
        %v3501 = vpop.f32.mrb[0].mxu0
        %3502 = vmatprep.mubr.bf16.mxu0 %v2587
        %3503 = vmatmul.mubr.bf16.gmra.mrb[0].mxu0 %v2586
        %v3504 = vpop.f32.mrb[0].mxu0
        %v3505 = vadd.f32 %v3344, %v3504
        %v3506 = vpop.f32.mrb[0].mxu0
        %v3507 = vpop.f32.mrb[0].mxu0
        %v3508 = vadd.f32 %v3347, %v3507
        %v3509 = vpop.f32.mrb[0].mxu0
        %3510 = vmatprep.mubr.bf16.mxu0 %v2596
        %3511 = vmatmul.mubr.bf16.gmra.mrb[0].mxu0 %v2595
        %v3512 = vpop.f32.mrb[0].mxu0
        %v3513 = vadd.f32 %v3352, %v3512
        %v3514 = vpop.f32.mrb[0].mxu0
        %v3515 = vpop.f32.mrb[0].mxu0
        %v3516 = vadd.f32 %v3355, %v3515
        %v3517 = vpop.f32.mrb[0].mxu0
        %3518 = vmatprep.mubr.bf16.mxu0 %v2605
        %3519 = vmatmul.mubr.bf16.gmra.mrb[0].mxu0 %v2604
        %v3520 = vpop.f32.mrb[0].mxu0
        %v3521 = vadd.f32 %v3360, %v3520
        %v3522 = vpop.f32.mrb[0].mxu0
        %v3523 = vpop.f32.mrb[0].mxu0
        %v3524 = vadd.f32 %v3363, %v3523
        %v3525 = vpop.f32.mrb[0].mxu0
        %3526 = vmatprep.mubr.bf16.mxu0 %v2614
        %3527 = vmatmul.mubr.bf16.gmra.mrb[0].mxu0 %v2613
        %v3528 = vpop.f32.mrb[0].mxu0
        %v3529 = vadd.f32 %v3368, %v3528
        %v3530 = vpop.f32.mrb[0].mxu0
        %v3531 = vpop.f32.mrb[0].mxu0
        %v3532 = vadd.f32 %v3371, %v3531
        %v3533 = vpop.f32.mrb[0].mxu0
        %3534 = vmatprep.mubr.bf16.mxu0 %v2623
        %3535 = vmatmul.mubr.bf16.gmra.mrb[0].mxu0 %v2622
        %v3536 = vpop.f32.mrb[0].mxu0
        %v3537 = vadd.f32 %v3376, %v3536
        %v3538 = vpop.f32.mrb[0].mxu0
        %v3539 = vpop.f32.mrb[0].mxu0
        %v3540 = vadd.f32 %v3379, %v3539
        %v3541 = vpop.f32.mrb[0].mxu0
        %3542 = vmatprep.mubr.bf16.mxu0 %v2632
        %3543 = vmatmul.mubr.bf16.gmra.mrb[0].mxu0 %v2631
        %v3544 = vpop.f32.mrb[0].mxu0
        %v3545 = vadd.f32 %v3384, %v3544
        %v3546 = vpop.f32.mrb[0].mxu0
        %v3547 = vpop.f32.mrb[0].mxu0
        %v3548 = vadd.f32 %v3387, %v3547
        %v3549 = vpop.f32.mrb[0].mxu0
        %3550 = vmatprep.mubr.bf16.mxu0 %v2641
        %3551 = vmatmul.mubr.bf16.gmra.mrb[0].mxu0 %v2640
        %v3552 = vpop.f32.mrb[0].mxu0
        %v3553 = vadd.f32 %v3392, %v3552
        %v3554 = vpop.f32.mrb[0].mxu0
        %v3555 = vpop.f32.mrb[0].mxu0
        %v3556 = vadd.f32 %v3395, %v3555
        %v3557 = vpop.f32.mrb[0].mxu0
        %3558 = vmatprep.mubr.bf16.mxu0 %v2650
        %3559 = vmatmul.mubr.bf16.gmra.mrb[0].mxu0 %v2649
        %v3560 = vpop.f32.mrb[0].mxu0
        %v3561 = vadd.f32 %v3400, %v3560
        %v3562 = vpop.f32.mrb[0].mxu0
        %v3563 = vpop.f32.mrb[0].mxu0
        %v3564 = vadd.f32 %v3403, %v3563
        %v3565 = vpop.f32.mrb[0].mxu0
        %3566 = vmatprep.mubr.bf16.mxu0 %v2659
        %3567 = vmatmul.mubr.bf16.gmra.mrb[0].mxu0 %v2658
        %v3568 = vpop.f32.mrb[0].mxu0
        %v3569 = vadd.f32 %v3408, %v3568
        %v3570 = vpop.f32.mrb[0].mxu0
        %v3571 = vpop.f32.mrb[0].mxu0
        %v3572 = vadd.f32 %v3411, %v3571
        %v3573 = vpop.f32.mrb[0].mxu0
        %3574 = vmatprep.mubr.bf16.mxu0 %v2668
        %3575 = vmatmul.mubr.bf16.gmra.mrb[0].mxu0 %v2667
        %v3576 = vpop.f32.mrb[0].mxu0
        %v3577 = vadd.f32 %v3416, %v3576
        %v3578 = vpop.f32.mrb[0].mxu0
        %v3579 = vpop.f32.mrb[0].mxu0
        %v3580 = vadd.f32 %v3419, %v3579
        %v3581 = vpop.f32.mrb[0].mxu0
        %3582 = vmatprep.mubr.bf16.mxu0 %v2677
        %3583 = vmatmul.mubr.bf16.gmra.mrb[0].mxu0 %v2676
        %v3584 = vpop.f32.mrb[0].mxu0
        %v3585 = vadd.f32 %v3424, %v3584
        %v3586 = vpop.f32.mrb[0].mxu0
        %v3587 = vpop.f32.mrb[0].mxu0
        %v3588 = vadd.f32 %v3427, %v3587
        %v3589 = vpop.f32.mrb[0].mxu0
        %3590 = vmatprep.mubr.bf16.mxu0 %v2686
        %3591 = vmatmul.mubr.bf16.gmra.mrb[0].mxu0 %v2685
        %v3592 = vpop.f32.mrb[0].mxu0
        %v3593 = vadd.f32 %v3432, %v3592
        %v3594 = vpop.f32.mrb[0].mxu0
        %v3595 = vpop.f32.mrb[0].mxu0
        %v3596 = vadd.f32 %v3435, %v3595
        %v3597 = vpop.f32.mrb[0].mxu0
        %3598 = vmatprep.mubr.bf16.mxu0 %v2695
        %3599 = vmatmul.mubr.bf16.gmra.mrb[0].mxu0 %v2694
        %v3600 = vpop.f32.mrb[0].mxu0
        %v3601 = vadd.f32 %v3440, %v3600
        %v3602 = vpop.f32.mrb[0].mxu0
        %v3603 = vpop.f32.mrb[0].mxu0
        %v3604 = vadd.f32 %v3443, %v3603
        %v3605 = vpop.f32.mrb[0].mxu0
        %3606 = vmatprep.mubr.bf16.mxu0 %v2704
        %3607 = vmatmul.mubr.bf16.gmra.mrb[0].mxu0 %v2703
        %v3608 = vpop.f32.mrb[0].mxu0
        %v3609 = vadd.f32 %v3448, %v3608
        %v3610 = vpop.f32.mrb[0].mxu0
        %v3611 = vpop.f32.mrb[0].mxu0
        %v3612 = vadd.f32 %v3451, %v3611
        %v3613 = vpop.f32.mrb[0].mxu0
        %3614 = vdwg.mxu0
        %3615 = vmatprep.subr.bf16.mxu0 0
        %3616 = vmatpush1.bf16.msra.mxu0 %v3181
        %3617 = vmatprep.subr.bf16.mxu0 0
        %3618 = vmatpush1.bf16.msra.mxu0 %v3182
        %3619 = vmatprep.subr.bf16.mxu0 0
        %3620 = vmatpush1.bf16.msra.mxu0 %v3183
        %3621 = vmatprep.subr.bf16.mxu0 0
        %3622 = vmatpush1.bf16.msra.mxu0 %v3184
        %3623 = vmatprep.subr.bf16.mxu0 0
        %3624 = vmatpush1.bf16.msra.mxu0 %v3185
        %3625 = vmatprep.subr.bf16.mxu0 0
        %3626 = vmatpush1.bf16.msra.mxu0 %v3186
        %3627 = vmatprep.subr.bf16.mxu0 0
        %3628 = vmatpush1.bf16.msra.mxu0 %v3187
        %3629 = vmatprep.subr.bf16.mxu0 0
        %3630 = vmatpush1.bf16.msra.mxu0 %v3188
        %3631 = vmatprep.subr.bf16.mxu0 0
        %3632 = vmatpush1.bf16.msra.mxu0 %v3189
        %3633 = vmatprep.subr.bf16.mxu0 0
        %3634 = vmatpush1.bf16.msra.mxu0 %v3190
        %3635 = vmatprep.subr.bf16.mxu0 0
        %3636 = vmatpush1.bf16.msra.mxu0 %v3191
        %3637 = vmatprep.subr.bf16.mxu0 0
        %3638 = vmatpush1.bf16.msra.mxu0 %v3192
        %3639 = vmatprep.subr.bf16.mxu0 0
        %3640 = vmatpush1.bf16.msra.mxu0 %v3193
        %3641 = vmatprep.subr.bf16.mxu0 0
        %3642 = vmatpush1.bf16.msra.mxu0 %v3194
        %3643 = vmatprep.subr.bf16.mxu0 0
        %3644 = vmatpush1.bf16.msra.mxu0 %v3195
        %3645 = vmatprep.subr.bf16.mxu0 0
        %3646 = vmatpush1.bf16.msra.mxu0 %v3196
        %3647 = vmatprep.mubr.bf16.mxu0 %v2571
        %3648 = vmatmul.mubr.bf16.gmra.mrb[0].mxu0 %v2570
        %v3649 = vpop.f32.mrb[0].mxu0
        %v3650 = vadd.f32 %v3489, %v3649
        %v3651 = vpop.f32.mrb[0].mxu0
        %v3652 = vpop.f32.mrb[0].mxu0
        %v3653 = vadd.f32 %v3492, %v3652
        %v3654 = vpop.f32.mrb[0].mxu0
        %3655 = vmatprep.mubr.bf16.mxu0 %v2580
        %3656 = vmatmul.mubr.bf16.gmra.mrb[0].mxu0 %v2579
        %v3657 = vpop.f32.mrb[0].mxu0
        %v3658 = vadd.f32 %v3497, %v3657
        %v3659 = vpop.f32.mrb[0].mxu0
        %v3660 = vpop.f32.mrb[0].mxu0
        %v3661 = vadd.f32 %v3500, %v3660
        %v3662 = vpop.f32.mrb[0].mxu0
        %3663 = vmatprep.mubr.bf16.mxu0 %v2589
        %3664 = vmatmul.mubr.bf16.gmra.mrb[0].mxu0 %v2588
        %v3665 = vpop.f32.mrb[0].mxu0
        %v3666 = vadd.f32 %v3505, %v3665
        %v3667 = vpop.f32.mrb[0].mxu0
        %v3668 = vpop.f32.mrb[0].mxu0
        %v3669 = vadd.f32 %v3508, %v3668
        %v3670 = vpop.f32.mrb[0].mxu0
        %3671 = vmatprep.mubr.bf16.mxu0 %v2598
        %3672 = vmatmul.mubr.bf16.gmra.mrb[0].mxu0 %v2597
        %v3673 = vpop.f32.mrb[0].mxu0
        %v3674 = vadd.f32 %v3513, %v3673
        %v3675 = vpop.f32.mrb[0].mxu0
        %v3676 = vpop.f32.mrb[0].mxu0
        %v3677 = vadd.f32 %v3516, %v3676
        %v3678 = vpop.f32.mrb[0].mxu0
        %3679 = vmatprep.mubr.bf16.mxu0 %v2607
        %3680 = vmatmul.mubr.bf16.gmra.mrb[0].mxu0 %v2606
        %v3681 = vpop.f32.mrb[0].mxu0
        %v3682 = vadd.f32 %v3521, %v3681
        %v3683 = vpop.f32.mrb[0].mxu0
        %v3684 = vpop.f32.mrb[0].mxu0
        %v3685 = vadd.f32 %v3524, %v3684
        %v3686 = vpop.f32.mrb[0].mxu0
        %3687 = vmatprep.mubr.bf16.mxu0 %v2616
        %3688 = vmatmul.mubr.bf16.gmra.mrb[0].mxu0 %v2615
        %v3689 = vpop.f32.mrb[0].mxu0
        %v3690 = vadd.f32 %v3529, %v3689
        %v3691 = vpop.f32.mrb[0].mxu0
        %v3692 = vpop.f32.mrb[0].mxu0
        %v3693 = vadd.f32 %v3532, %v3692
        %v3694 = vpop.f32.mrb[0].mxu0
        %3695 = vmatprep.mubr.bf16.mxu0 %v2625
        %3696 = vmatmul.mubr.bf16.gmra.mrb[0].mxu0 %v2624
        %v3697 = vpop.f32.mrb[0].mxu0
        %v3698 = vadd.f32 %v3537, %v3697
        %v3699 = vpop.f32.mrb[0].mxu0
        %v3700 = vpop.f32.mrb[0].mxu0
        %v3701 = vadd.f32 %v3540, %v3700
        %v3702 = vpop.f32.mrb[0].mxu0
        %3703 = vmatprep.mubr.bf16.mxu0 %v2634
        %3704 = vmatmul.mubr.bf16.gmra.mrb[0].mxu0 %v2633
        %v3705 = vpop.f32.mrb[0].mxu0
        %v3706 = vadd.f32 %v3545, %v3705
        %v3707 = vpop.f32.mrb[0].mxu0
        %v3708 = vpop.f32.mrb[0].mxu0
        %v3709 = vadd.f32 %v3548, %v3708
        %v3710 = vpop.f32.mrb[0].mxu0
        %3711 = vmatprep.mubr.bf16.mxu0 %v2643
        %3712 = vmatmul.mubr.bf16.gmra.mrb[0].mxu0 %v2642
        %v3713 = vpop.f32.mrb[0].mxu0
        %v3714 = vadd.f32 %v3553, %v3713
        %v3715 = vpop.f32.mrb[0].mxu0
        %v3716 = vpop.f32.mrb[0].mxu0
        %v3717 = vadd.f32 %v3556, %v3716
        %v3718 = vpop.f32.mrb[0].mxu0
        %3719 = vmatprep.mubr.bf16.mxu0 %v2652
        %3720 = vmatmul.mubr.bf16.gmra.mrb[0].mxu0 %v2651
        %v3721 = vpop.f32.mrb[0].mxu0
        %v3722 = vadd.f32 %v3561, %v3721
        %v3723 = vpop.f32.mrb[0].mxu0
        %v3724 = vpop.f32.mrb[0].mxu0
        %v3725 = vadd.f32 %v3564, %v3724
        %v3726 = vpop.f32.mrb[0].mxu0
        %3727 = vmatprep.mubr.bf16.mxu0 %v2661
        %3728 = vmatmul.mubr.bf16.gmra.mrb[0].mxu0 %v2660
        %v3729 = vpop.f32.mrb[0].mxu0
        %v3730 = vadd.f32 %v3569, %v3729
        %v3731 = vpop.f32.mrb[0].mxu0
        %v3732 = vpop.f32.mrb[0].mxu0
        %v3733 = vadd.f32 %v3572, %v3732
        %v3734 = vpop.f32.mrb[0].mxu0
        %3735 = vmatprep.mubr.bf16.mxu0 %v2670
        %3736 = vmatmul.mubr.bf16.gmra.mrb[0].mxu0 %v2669
        %v3737 = vpop.f32.mrb[0].mxu0
        %v3738 = vadd.f32 %v3577, %v3737
        %v3739 = vpop.f32.mrb[0].mxu0
        %v3740 = vpop.f32.mrb[0].mxu0
        %v3741 = vadd.f32 %v3580, %v3740
        %v3742 = vpop.f32.mrb[0].mxu0
        %3743 = vmatprep.mubr.bf16.mxu0 %v2679
        %3744 = vmatmul.mubr.bf16.gmra.mrb[0].mxu0 %v2678
        %v3745 = vpop.f32.mrb[0].mxu0
        %v3746 = vadd.f32 %v3585, %v3745
        %v3747 = vpop.f32.mrb[0].mxu0
        %v3748 = vpop.f32.mrb[0].mxu0
        %v3749 = vadd.f32 %v3588, %v3748
        %v3750 = vpop.f32.mrb[0].mxu0
        %3751 = vmatprep.mubr.bf16.mxu0 %v2688
        %3752 = vmatmul.mubr.bf16.gmra.mrb[0].mxu0 %v2687
        %v3753 = vpop.f32.mrb[0].mxu0
        %v3754 = vadd.f32 %v3593, %v3753
        %v3755 = vpop.f32.mrb[0].mxu0
        %v3756 = vpop.f32.mrb[0].mxu0
        %v3757 = vadd.f32 %v3596, %v3756
        %v3758 = vpop.f32.mrb[0].mxu0
        %3759 = vmatprep.mubr.bf16.mxu0 %v2697
        %3760 = vmatmul.mubr.bf16.gmra.mrb[0].mxu0 %v2696
        %v3761 = vpop.f32.mrb[0].mxu0
        %v3762 = vadd.f32 %v3601, %v3761
        %v3763 = vpop.f32.mrb[0].mxu0
        %v3764 = vpop.f32.mrb[0].mxu0
        %v3765 = vadd.f32 %v3604, %v3764
        %v3766 = vpop.f32.mrb[0].mxu0
        %3767 = vmatprep.mubr.bf16.mxu0 %v2706
        %3768 = vmatmul.mubr.bf16.gmra.mrb[0].mxu0 %v2705
        %v3769 = vpop.f32.mrb[0].mxu0
        %v3770 = vadd.f32 %v3609, %v3769
        %v3771 = vpop.f32.mrb[0].mxu0
        %v3772 = vpop.f32.mrb[0].mxu0
        %v3773 = vadd.f32 %v3612, %v3772
        %v3774 = vpop.f32.mrb[0].mxu0
        %3775 = vdwg.mxu0
        %3776 = vmatprep.subr.bf16.mxu0 0
        %3777 = vmatpush1.bf16.msra.mxu0 %v3197
        %3778 = vmatprep.subr.bf16.mxu0 0
        %3779 = vmatpush1.bf16.msra.mxu0 %v3198
        %3780 = vmatprep.subr.bf16.mxu0 0
        %3781 = vmatpush1.bf16.msra.mxu0 %v3199
        %3782 = vmatprep.subr.bf16.mxu0 0
        %3783 = vmatpush1.bf16.msra.mxu0 %v3200
        %3784 = vmatprep.subr.bf16.mxu0 0
        %3785 = vmatpush1.bf16.msra.mxu0 %v3201
        %3786 = vmatprep.subr.bf16.mxu0 0
        %3787 = vmatpush1.bf16.msra.mxu0 %v3202
        %3788 = vmatprep.subr.bf16.mxu0 0
        %3789 = vmatpush1.bf16.msra.mxu0 %v3203
        %3790 = vmatprep.subr.bf16.mxu0 0
        %3791 = vmatpush1.bf16.msra.mxu0 %v3204
        %3792 = vmatprep.subr.bf16.mxu0 0
        %3793 = vmatpush1.bf16.msra.mxu0 %v3205
        %3794 = vmatprep.subr.bf16.mxu0 0
        %3795 = vmatpush1.bf16.msra.mxu0 %v3206
        %3796 = vmatprep.subr.bf16.mxu0 0
        %3797 = vmatpush1.bf16.msra.mxu0 %v3207
        %3798 = vmatprep.subr.bf16.mxu0 0
        %3799 = vmatpush1.bf16.msra.mxu0 %v3208
        %3800 = vmatprep.subr.bf16.mxu0 0
        %3801 = vmatpush1.bf16.msra.mxu0 %v3209
        %3802 = vmatprep.subr.bf16.mxu0 0
        %3803 = vmatpush1.bf16.msra.mxu0 %v3210
        %3804 = vmatprep.subr.bf16.mxu0 0
        %3805 = vmatpush1.bf16.msra.mxu0 %v3211
        %3806 = vmatprep.subr.bf16.mxu0 0
        %3807 = vmatpush1.bf16.msra.mxu0 %v3212
        %3808 = vmatprep.mubr.bf16.mxu0 %v2573
        %3809 = vmatmul.mubr.bf16.gmra.mrb[0].mxu0 %v2572
        %v3810 = vpop.f32.mrb[0].mxu0
        %v3811 = vadd.f32 %v3650, %v3810
        %v3812 = vpop.f32.mrb[0].mxu0
        %v3813 = vpop.f32.mrb[0].mxu0
        %v3814 = vadd.f32 %v3653, %v3813
        %v3815 = vpop.f32.mrb[0].mxu0
        %3816 = vmatprep.mubr.bf16.mxu0 %v2582
        %3817 = vmatmul.mubr.bf16.gmra.mrb[0].mxu0 %v2581
        %v3818 = vpop.f32.mrb[0].mxu0
        %v3819 = vadd.f32 %v3658, %v3818
        %v3820 = vpop.f32.mrb[0].mxu0
        %v3821 = vpop.f32.mrb[0].mxu0
        %v3822 = vadd.f32 %v3661, %v3821
        %v3823 = vpop.f32.mrb[0].mxu0
        %3824 = vmatprep.mubr.bf16.mxu0 %v2591
        %3825 = vmatmul.mubr.bf16.gmra.mrb[0].mxu0 %v2590
        %v3826 = vpop.f32.mrb[0].mxu0
        %v3827 = vadd.f32 %v3666, %v3826
        %v3828 = vpop.f32.mrb[0].mxu0
        %v3829 = vpop.f32.mrb[0].mxu0
        %v3830 = vadd.f32 %v3669, %v3829
        %v3831 = vpop.f32.mrb[0].mxu0
        %3832 = vmatprep.mubr.bf16.mxu0 %v2600
        %3833 = vmatmul.mubr.bf16.gmra.mrb[0].mxu0 %v2599
        %v3834 = vpop.f32.mrb[0].mxu0
        %v3835 = vadd.f32 %v3674, %v3834
        %v3836 = vpop.f32.mrb[0].mxu0
        %v3837 = vpop.f32.mrb[0].mxu0
        %v3838 = vadd.f32 %v3677, %v3837
        %v3839 = vpop.f32.mrb[0].mxu0
        %3840 = vmatprep.mubr.bf16.mxu0 %v2609
        %3841 = vmatmul.mubr.bf16.gmra.mrb[0].mxu0 %v2608
        %v3842 = vpop.f32.mrb[0].mxu0
        %v3843 = vadd.f32 %v3682, %v3842
        %v3844 = vpop.f32.mrb[0].mxu0
        %v3845 = vpop.f32.mrb[0].mxu0
        %v3846 = vadd.f32 %v3685, %v3845
        %v3847 = vpop.f32.mrb[0].mxu0
        %3848 = vmatprep.mubr.bf16.mxu0 %v2618
        %3849 = vmatmul.mubr.bf16.gmra.mrb[0].mxu0 %v2617
        %v3850 = vpop.f32.mrb[0].mxu0
        %v3851 = vadd.f32 %v3690, %v3850
        %v3852 = vpop.f32.mrb[0].mxu0
        %v3853 = vpop.f32.mrb[0].mxu0
        %v3854 = vadd.f32 %v3693, %v3853
        %v3855 = vpop.f32.mrb[0].mxu0
        %3856 = vmatprep.mubr.bf16.mxu0 %v2627
        %3857 = vmatmul.mubr.bf16.gmra.mrb[0].mxu0 %v2626
        %v3858 = vpop.f32.mrb[0].mxu0
        %v3859 = vadd.f32 %v3698, %v3858
        %v3860 = vpop.f32.mrb[0].mxu0
        %v3861 = vpop.f32.mrb[0].mxu0
        %v3862 = vadd.f32 %v3701, %v3861
        %v3863 = vpop.f32.mrb[0].mxu0
        %3864 = vmatprep.mubr.bf16.mxu0 %v2636
        %3865 = vmatmul.mubr.bf16.gmra.mrb[0].mxu0 %v2635
        %v3866 = vpop.f32.mrb[0].mxu0
        %v3867 = vadd.f32 %v3706, %v3866
        %v3868 = vpop.f32.mrb[0].mxu0
        %v3869 = vpop.f32.mrb[0].mxu0
        %v3870 = vadd.f32 %v3709, %v3869
        %v3871 = vpop.f32.mrb[0].mxu0
        %3872 = vmatprep.mubr.bf16.mxu0 %v2645
        %3873 = vmatmul.mubr.bf16.gmra.mrb[0].mxu0 %v2644
        %v3874 = vpop.f32.mrb[0].mxu0
        %v3875 = vadd.f32 %v3714, %v3874
        %v3876 = vpop.f32.mrb[0].mxu0
        %v3877 = vpop.f32.mrb[0].mxu0
        %v3878 = vadd.f32 %v3717, %v3877
        %v3879 = vpop.f32.mrb[0].mxu0
        %3880 = vmatprep.mubr.bf16.mxu0 %v2654
        %3881 = vmatmul.mubr.bf16.gmra.mrb[0].mxu0 %v2653
        %v3882 = vpop.f32.mrb[0].mxu0
        %v3883 = vadd.f32 %v3722, %v3882
        %v3884 = vpop.f32.mrb[0].mxu0
        %v3885 = vpop.f32.mrb[0].mxu0
        %v3886 = vadd.f32 %v3725, %v3885
        %v3887 = vpop.f32.mrb[0].mxu0
        %3888 = vmatprep.mubr.bf16.mxu0 %v2663
        %3889 = vmatmul.mubr.bf16.gmra.mrb[0].mxu0 %v2662
        %v3890 = vpop.f32.mrb[0].mxu0
        %v3891 = vadd.f32 %v3730, %v3890
        %v3892 = vpop.f32.mrb[0].mxu0
        %v3893 = vpop.f32.mrb[0].mxu0
        %v3894 = vadd.f32 %v3733, %v3893
        %v3895 = vpop.f32.mrb[0].mxu0
        %3896 = vmatprep.mubr.bf16.mxu0 %v2672
        %3897 = vmatmul.mubr.bf16.gmra.mrb[0].mxu0 %v2671
        %v3898 = vpop.f32.mrb[0].mxu0
        %v3899 = vadd.f32 %v3738, %v3898
        %v3900 = vpop.f32.mrb[0].mxu0
        %v3901 = vpop.f32.mrb[0].mxu0
        %v3902 = vadd.f32 %v3741, %v3901
        %v3903 = vpop.f32.mrb[0].mxu0
        %3904 = vmatprep.mubr.bf16.mxu0 %v2681
        %3905 = vmatmul.mubr.bf16.gmra.mrb[0].mxu0 %v2680
        %v3906 = vpop.f32.mrb[0].mxu0
        %v3907 = vadd.f32 %v3746, %v3906
        %v3908 = vpop.f32.mrb[0].mxu0
        %v3909 = vpop.f32.mrb[0].mxu0
        %v3910 = vadd.f32 %v3749, %v3909
        %v3911 = vpop.f32.mrb[0].mxu0
        %3912 = vmatprep.mubr.bf16.mxu0 %v2690
        %3913 = vmatmul.mubr.bf16.gmra.mrb[0].mxu0 %v2689
        %v3914 = vpop.f32.mrb[0].mxu0
        %v3915 = vadd.f32 %v3754, %v3914
        %v3916 = vpop.f32.mrb[0].mxu0
        %v3917 = vpop.f32.mrb[0].mxu0
        %v3918 = vadd.f32 %v3757, %v3917
        %v3919 = vpop.f32.mrb[0].mxu0
        %3920 = vmatprep.mubr.bf16.mxu0 %v2699
        %3921 = vmatmul.mubr.bf16.gmra.mrb[0].mxu0 %v2698
        %v3922 = vpop.f32.mrb[0].mxu0
        %v3923 = vadd.f32 %v3762, %v3922
        %v3924 = vpop.f32.mrb[0].mxu0
        %v3925 = vpop.f32.mrb[0].mxu0
        %v3926 = vadd.f32 %v3765, %v3925
        %v3927 = vpop.f32.mrb[0].mxu0
        %3928 = vmatprep.mubr.bf16.mxu0 %v2708
        %3929 = vmatmul.mubr.bf16.gmra.mrb[0].mxu0 %v2707
        %v3930 = vpop.f32.mrb[0].mxu0
        %v3931 = vadd.f32 %v3770, %v3930
        %v3932 = vpop.f32.mrb[0].mxu0
        %v3933 = vpop.f32.mrb[0].mxu0
        %v3934 = vadd.f32 %v3773, %v3933
        %v3935 = vpop.f32.mrb[0].mxu0
        %3936 = vdwg.mxu0
        %3937 = vmatprep.subr.bf16.mxu0 0
        %3938 = vmatpush1.bf16.msra.mxu0 %v3213
        %3939 = vmatprep.subr.bf16.mxu0 0
        %3940 = vmatpush1.bf16.msra.mxu0 %v3214
        %3941 = vmatprep.subr.bf16.mxu0 0
        %3942 = vmatpush1.bf16.msra.mxu0 %v3215
        %3943 = vmatprep.subr.bf16.mxu0 0
        %3944 = vmatpush1.bf16.msra.mxu0 %v3216
        %3945 = vmatprep.subr.bf16.mxu0 0
        %3946 = vmatpush1.bf16.msra.mxu0 %v3217
        %3947 = vmatprep.subr.bf16.mxu0 0
        %3948 = vmatpush1.bf16.msra.mxu0 %v3218
        %3949 = vmatprep.subr.bf16.mxu0 0
        %3950 = vmatpush1.bf16.msra.mxu0 %v3219
        %3951 = vmatprep.subr.bf16.mxu0 0
        %3952 = vmatpush1.bf16.msra.mxu0 %v3220
        %3953 = vmatprep.subr.bf16.mxu0 0
        %3954 = vmatpush1.bf16.msra.mxu0 0
        %3955 = vmatprep.subr.bf16.mxu0 0
        %3956 = vmatpush1.bf16.msra.mxu0 0
        %3957 = vmatprep.subr.bf16.mxu0 0
        %3958 = vmatpush1.bf16.msra.mxu0 0
        %3959 = vmatprep.subr.bf16.mxu0 0
        %3960 = vmatpush1.bf16.msra.mxu0 0
        %3961 = vmatprep.subr.bf16.mxu0 0
        %3962 = vmatpush1.bf16.msra.mxu0 0
        %3963 = vmatprep.subr.bf16.mxu0 0
        %3964 = vmatpush1.bf16.msra.mxu0 0
        %3965 = vmatprep.subr.bf16.mxu0 0
        %3966 = vmatpush1.bf16.msra.mxu0 0
        %3967 = vmatprep.subr.bf16.mxu0 0
        %3968 = vmatpush1.bf16.msra.mxu0 0
        %3969 = vmatprep.mubr.bf16.mxu0 0
        %3970 = vmatmul.mubr.bf16.gmra.mrb[0].mxu0 %v2574
        %v3971 = vpop.f32.mrb[0].mxu0
        %v3972 = vadd.f32 %v3811, %v3971
        %v3973 = vpop.f32.mrb[0].mxu0
        %v3974 = vpop.f32.mrb[0].mxu0
        %v3975 = vadd.f32 %v3814, %v3974
        %v3976 = vpop.f32.mrb[0].mxu0
        %3977 = vmatprep.mubr.bf16.mxu0 0
        %3978 = vmatmul.mubr.bf16.gmra.mrb[0].mxu0 %v2583
        %v3979 = vpop.f32.mrb[0].mxu0
        %v3980 = vadd.f32 %v3819, %v3979
        %v3981 = vpop.f32.mrb[0].mxu0
        %v3982 = vpop.f32.mrb[0].mxu0
        %v3983 = vadd.f32 %v3822, %v3982
        %v3984 = vpop.f32.mrb[0].mxu0
        %3985 = vmatprep.mubr.bf16.mxu0 0
        %3986 = vmatmul.mubr.bf16.gmra.mrb[0].mxu0 %v2592
        %v3987 = vpop.f32.mrb[0].mxu0
        %v3988 = vadd.f32 %v3827, %v3987
        %v3989 = vpop.f32.mrb[0].mxu0
        %v3990 = vpop.f32.mrb[0].mxu0
        %v3991 = vadd.f32 %v3830, %v3990
        %v3992 = vpop.f32.mrb[0].mxu0
        %3993 = vmatprep.mubr.bf16.mxu0 0
        %3994 = vmatmul.mubr.bf16.gmra.mrb[0].mxu0 %v2601
        %v3995 = vpop.f32.mrb[0].mxu0
        %v3996 = vadd.f32 %v3835, %v3995
        %v3997 = vpop.f32.mrb[0].mxu0
        %v3998 = vpop.f32.mrb[0].mxu0
        %v3999 = vadd.f32 %v3838, %v3998
        %v4000 = vpop.f32.mrb[0].mxu0
        %4001 = vmatprep.mubr.bf16.mxu0 0
        %4002 = vmatmul.mubr.bf16.gmra.mrb[0].mxu0 %v2610
        %v4003 = vpop.f32.mrb[0].mxu0
        %v4004 = vadd.f32 %v3843, %v4003
        %v4005 = vpop.f32.mrb[0].mxu0
        %v4006 = vpop.f32.mrb[0].mxu0
        %v4007 = vadd.f32 %v3846, %v4006
        %v4008 = vpop.f32.mrb[0].mxu0
        %4009 = vmatprep.mubr.bf16.mxu0 0
        %4010 = vmatmul.mubr.bf16.gmra.mrb[0].mxu0 %v2619
        %v4011 = vpop.f32.mrb[0].mxu0
        %v4012 = vadd.f32 %v3851, %v4011
        %v4013 = vpop.f32.mrb[0].mxu0
        %v4014 = vpop.f32.mrb[0].mxu0
        %v4015 = vadd.f32 %v3854, %v4014
        %v4016 = vpop.f32.mrb[0].mxu0
        %4017 = vmatprep.mubr.bf16.mxu0 0
        %4018 = vmatmul.mubr.bf16.gmra.mrb[0].mxu0 %v2628
        %v4019 = vpop.f32.mrb[0].mxu0
        %v4020 = vadd.f32 %v3859, %v4019
        %v4021 = vpop.f32.mrb[0].mxu0
        %v4022 = vpop.f32.mrb[0].mxu0
        %v4023 = vadd.f32 %v3862, %v4022
        %v4024 = vpop.f32.mrb[0].mxu0
        %4025 = vmatprep.mubr.bf16.mxu0 0
        %4026 = vmatmul.mubr.bf16.gmra.mrb[0].mxu0 %v2637
        %v4027 = vpop.f32.mrb[0].mxu0
        %v4028 = vadd.f32 %v3867, %v4027
        %v4029 = vpop.f32.mrb[0].mxu0
        %v4030 = vpop.f32.mrb[0].mxu0
        %v4031 = vadd.f32 %v3870, %v4030
        %v4032 = vpop.f32.mrb[0].mxu0
        %4033 = vmatprep.mubr.bf16.mxu0 0
        %4034 = vmatmul.mubr.bf16.gmra.mrb[0].mxu0 %v2646
        %v4035 = vpop.f32.mrb[0].mxu0
        %v4036 = vadd.f32 %v3875, %v4035
        %v4037 = vpop.f32.mrb[0].mxu0
        %v4038 = vpop.f32.mrb[0].mxu0
        %v4039 = vadd.f32 %v3878, %v4038
        %v4040 = vpop.f32.mrb[0].mxu0
        %4041 = vmatprep.mubr.bf16.mxu0 0
        %4042 = vmatmul.mubr.bf16.gmra.mrb[0].mxu0 %v2655
        %v4043 = vpop.f32.mrb[0].mxu0
        %v4044 = vadd.f32 %v3883, %v4043
        %v4045 = vpop.f32.mrb[0].mxu0
        %v4046 = vpop.f32.mrb[0].mxu0
        %v4047 = vadd.f32 %v3886, %v4046
        %v4048 = vpop.f32.mrb[0].mxu0
        %4049 = vmatprep.mubr.bf16.mxu0 0
        %4050 = vmatmul.mubr.bf16.gmra.mrb[0].mxu0 %v2664
        %v4051 = vpop.f32.mrb[0].mxu0
        %v4052 = vadd.f32 %v3891, %v4051
        %v4053 = vpop.f32.mrb[0].mxu0
        %v4054 = vpop.f32.mrb[0].mxu0
        %v4055 = vadd.f32 %v3894, %v4054
        %v4056 = vpop.f32.mrb[0].mxu0
        %4057 = vmatprep.mubr.bf16.mxu0 0
        %4058 = vmatmul.mubr.bf16.gmra.mrb[0].mxu0 %v2673
        %v4059 = vpop.f32.mrb[0].mxu0
        %v4060 = vadd.f32 %v3899, %v4059
        %v4061 = vpop.f32.mrb[0].mxu0
        %v4062 = vpop.f32.mrb[0].mxu0
        %v4063 = vadd.f32 %v3902, %v4062
        %v4064 = vpop.f32.mrb[0].mxu0
        %4065 = vmatprep.mubr.bf16.mxu0 0
        %4066 = vmatmul.mubr.bf16.gmra.mrb[0].mxu0 %v2682
        %v4067 = vpop.f32.mrb[0].mxu0
        %v4068 = vadd.f32 %v3907, %v4067
        %v4069 = vpop.f32.mrb[0].mxu0
        %v4070 = vpop.f32.mrb[0].mxu0
        %v4071 = vadd.f32 %v3910, %v4070
        %v4072 = vpop.f32.mrb[0].mxu0
        %4073 = vmatprep.mubr.bf16.mxu0 0
        %4074 = vmatmul.mubr.bf16.gmra.mrb[0].mxu0 %v2691
        %v4075 = vpop.f32.mrb[0].mxu0
        %v4076 = vadd.f32 %v3915, %v4075
        %v4077 = vpop.f32.mrb[0].mxu0
        %v4078 = vpop.f32.mrb[0].mxu0
        %v4079 = vadd.f32 %v3918, %v4078
        %v4080 = vpop.f32.mrb[0].mxu0
        %4081 = vmatprep.mubr.bf16.mxu0 0
        %4082 = vmatmul.mubr.bf16.gmra.mrb[0].mxu0 %v2700
        %v4083 = vpop.f32.mrb[0].mxu0
        %v4084 = vadd.f32 %v3923, %v4083
        %v4085 = vpop.f32.mrb[0].mxu0
        %v4086 = vpop.f32.mrb[0].mxu0
        %v4087 = vadd.f32 %v3926, %v4086
        %v4088 = vpop.f32.mrb[0].mxu0
        %4089 = vmatprep.mubr.bf16.mxu0 0
        %4090 = vmatmul.mubr.bf16.gmra.mrb[0].mxu0 %v2709
        %v4091 = vpop.f32.mrb[0].mxu0
        %v4092 = vadd.f32 %v3931, %v4091
        %v4093 = vpop.f32.mrb[0].mxu0
        %v4094 = vpop.f32.mrb[0].mxu0
        %v4095 = vadd.f32 %v3934, %v4094
        %v4096 = vpop.f32.mrb[0].mxu0
        %4097 = vdwg.mxu0
        %v4098 = vmax.f32 %v3972, 0.0
        %v4099 = vmax.f32 %v3975, 0.0
        %v4100 = vmax.f32 %v3980, 0.0
        %v4101 = vmax.f32 %v3983, 0.0
        %v4102 = vmax.f32 %v3988, 0.0
        %v4103 = vmax.f32 %v3991, 0.0
        %v4104 = vmax.f32 %v3996, 0.0
        %v4105 = vmax.f32 %v3999, 0.0
        %v4106 = vmax.f32 %v4004, 0.0
        %v4107 = vmax.f32 %v4007, 0.0
        %v4108 = vmax.f32 %v4012, 0.0
        %v4109 = vmax.f32 %v4015, 0.0
        %v4110 = vmax.f32 %v4020, 0.0
        %v4111 = vmax.f32 %v4023, 0.0
        %v4112 = vmax.f32 %v4028, 0.0
        %v4113 = vmax.f32 %v4031, 0.0
        %v4114 = vmax.f32 %v4036, 0.0
        %v4115 = vmax.f32 %v4039, 0.0
        %v4116 = vmax.f32 %v4044, 0.0
        %v4117 = vmax.f32 %v4047, 0.0
        %v4118 = vmax.f32 %v4052, 0.0
        %v4119 = vmax.f32 %v4055, 0.0
        %v4120 = vmax.f32 %v4060, 0.0
        %v4121 = vmax.f32 %v4063, 0.0
        %v4122 = vmax.f32 %v4068, 0.0
        %v4123 = vmax.f32 %v4071, 0.0
        %v4124 = vmax.f32 %v4076, 0.0
        %v4125 = vmax.f32 %v4079, 0.0
        %v4126 = vmax.f32 %v4084, 0.0
        %v4127 = vmax.f32 %v4087, 0.0
        %v4128 = vmax.f32 %v4092, 0.0
        %v4129 = vmax.f32 %v4095, 0.0
        %v4130 = vadd.f32 %v4098, %v4099
        %v4131 = vadd.f32 %v4130, %v4100
        %v4132 = vadd.f32 %v4131, %v4101
        %v4133 = vadd.f32 %v4132, %v4102
        %v4134 = vadd.f32 %v4133, %v4103
        %v4135 = vadd.f32 %v4134, %v4104
        %v4136 = vadd.f32 %v4135, %v4105
        %v4137 = vadd.f32 %v4136, %v4106
        %v4138 = vadd.f32 %v4137, %v4107
        %v4139 = vadd.f32 %v4138, %v4108
        %v4140 = vadd.f32 %v4139, %v4109
        %v4141 = vadd.f32 %v4140, %v4110
        %v4142 = vadd.f32 %v4141, %v4111
        %v4143 = vadd.f32 %v4142, %v4112
        %v4144 = vadd.f32 %v4143, %v4113
        %v4145 = vadd.f32 %v4144, %v4114
        %v4146 = vadd.f32 %v4145, %v4115
        %v4147 = vadd.f32 %v4146, %v4116
        %v4148 = vadd.f32 %v4147, %v4117
        %v4149 = vadd.f32 %v4148, %v4118
        %v4150 = vadd.f32 %v4149, %v4119
        %v4151 = vadd.f32 %v4150, %v4120
        %v4152 = vadd.f32 %v4151, %v4121
        %v4153 = vadd.f32 %v4152, %v4122
        %v4154 = vadd.f32 %v4153, %v4123
        %v4155 = vadd.f32 %v4154, %v4124
        %v4156 = vadd.f32 %v4155, %v4125
        %v4157 = vadd.f32 %v4156, %v4126
        %v4158 = vadd.f32 %v4157, %v4127
        %v4159 = vadd.f32 %v4158, %v4128
        %v4160 = vadd.f32 %v4159, %v4129
        %v4161 = vrot.slane %v4160, 4
        %v4162 = vadd.f32 %v4160, %v4161
        %v4163 = vrot.slane %v4162, 2
        %v4164 = vadd.f32 %v4162, %v4163
        %v4165 = vrot.slane %v4164, 1
        %v4166 = vadd.f32 %v4164, %v4165
        %v4167 = vpack.c.bf16 %v4166, %v4166
        %v4168 = vld [vmem:[%s4] sm:$0xf]
        %v4169 = vld [vmem:[%s4 + $0x4] sm:$0xf]
        %v4170 = vld [vmem:[%s4 + $0x8] sm:$0xf]
        %v4171 = vld [vmem:[%s4 + $0xc] sm:$0xf]
        %v4172 = vld [vmem:[%s4 + $0x10] sm:$0xf]
        %v4173 = vld [vmem:[%s4 + $0x14] sm:$0xf]
        %v4174 = vld [vmem:[%s4 + $0x18] sm:$0xf]
        %v4175 = vld [vmem:[%s4 + $0x1c] sm:$0xf]
        %v4176 = vld [vmem:[%s4 + $0x20] sm:$0xf]
        %v4177 = vld [vmem:[%s4 + $0x24] sm:$0xf]
        %v4178 = vld [vmem:[%s4 + $0x28] sm:$0xf]
        %v4179 = vld [vmem:[%s4 + $0x2c] sm:$0xf]
        %v4180 = vld [vmem:[%s4 + $0x30] sm:$0xf]
        %v4181 = vld [vmem:[%s4 + $0x34] sm:$0xf]
        %v4182 = vld [vmem:[%s4 + $0x38] sm:$0xf]
        %v4183 = vld [vmem:[%s4 + $0x3c] sm:$0xf]
        %v4184 = vld [vmem:[%s5] sm:$0x1]
        %v4201 = vunpack.c.l.b16 %v4168
        %v4202 = vunpack.c.l.b16 %v4169
        %v4203 = vunpack.c.l.b16 %v4170
        %v4204 = vunpack.c.l.b16 %v4171
        %v4205 = vunpack.c.l.b16 %v4172
        %v4206 = vunpack.c.l.b16 %v4173
        %v4207 = vunpack.c.l.b16 %v4174
        %v4208 = vunpack.c.l.b16 %v4175
        %v4209 = vunpack.c.l.b16 %v4176
        %v4210 = vunpack.c.l.b16 %v4177
        %v4211 = vunpack.c.l.b16 %v4178
        %v4212 = vunpack.c.l.b16 %v4179
        %v4213 = vunpack.c.l.b16 %v4180
        %v4214 = vunpack.c.l.b16 %v4181
        %v4215 = vunpack.c.l.b16 %v4182
        %v4216 = vunpack.c.l.b16 %v4183
        %v4217 = vpack.c.b16 %v4202, %v4201
        %v4218 = vpack.c.b16 %v4204, %v4203
        %v4219 = vpack.c.b16 %v4206, %v4205
        %v4220 = vpack.c.b16 %v4208, %v4207
        %v4221 = vpack.c.b16 %v4210, %v4209
        %v4222 = vpack.c.b16 %v4212, %v4211
        %v4223 = vpack.c.b16 %v4214, %v4213
        %v4224 = vpack.c.b16 %v4216, %v4215
        %4233 = vmatprep.subr.bf16.mxu0 0
        %4234 = vmatpush1.bf16.msra.mxu0 %v4217
        %4235 = vmatprep.subr.bf16.mxu0 0
        %4236 = vmatpush1.bf16.msra.mxu0 %v4218
        %4237 = vmatprep.subr.bf16.mxu0 0
        %4238 = vmatpush1.bf16.msra.mxu0 %v4219
        %4239 = vmatprep.subr.bf16.mxu0 0
        %4240 = vmatpush1.bf16.msra.mxu0 %v4220
        %4241 = vmatprep.subr.bf16.mxu0 0
        %4242 = vmatpush1.bf16.msra.mxu0 %v4221
        %4243 = vmatprep.subr.bf16.mxu0 0
        %4244 = vmatpush1.bf16.msra.mxu0 %v4222
        %4245 = vmatprep.subr.bf16.mxu0 0
        %4246 = vmatpush1.bf16.msra.mxu0 %v4223
        %4247 = vmatprep.subr.bf16.mxu0 0
        %4248 = vmatpush1.bf16.msra.mxu0 %v4224
        %4249 = vmatprep.subr.bf16.mxu0 0
        %4250 = vmatpush1.bf16.msra.mxu0 0
        %4251 = vmatprep.subr.bf16.mxu0 0
        %4252 = vmatpush1.bf16.msra.mxu0 0
        %4253 = vmatprep.subr.bf16.mxu0 0
        %4254 = vmatpush1.bf16.msra.mxu0 0
        %4255 = vmatprep.subr.bf16.mxu0 0
        %4256 = vmatpush1.bf16.msra.mxu0 0
        %4257 = vmatprep.subr.bf16.mxu0 0
        %4258 = vmatpush1.bf16.msra.mxu0 0
        %4259 = vmatprep.subr.bf16.mxu0 0
        %4260 = vmatpush1.bf16.msra.mxu0 0
        %4261 = vmatprep.subr.bf16.mxu0 0
        %4262 = vmatpush1.bf16.msra.mxu0 0
        %4263 = vmatprep.subr.bf16.mxu0 0
        %4264 = vmatpush1.bf16.msra.mxu0 0
        %4265 = vmatprep.mubr.bf16.mxu0 0
        %4266 = vmatmul.mubr.bf16.gmra.mrb[0].mxu0 %v4167
        %v4267 = vpop.f32.mrb[0].mxu0
        %v4268 = vadd.f32 %v4184, %v4267
        %v4269 = vpop.f32.mrb[0].mxu0
        %v4270 = vpop.f32.mrb[0].mxu0
        %v4271 = vpop.f32.mrb[0].mxu0
        %4272 = vdwg.mxu0
        %4273 = vst [vmem:[%s243] sm:$0x1] %v4268
        %s4274 = sand.u32 %s159, 1
        %s4275 = scalar_lea.sflag [#allocation4], %s4274
        %s4276 = sand.u32 %s159, 1
        %s4277 = scalar_lea.vmem [#allocation3], %s4276
        // Predicated region
        $region45: #{custom_diff_model_forward.1} parent=43 // pred_check
          %p4278 = pneg %p169
        $region46: #{custom_diff_model_forward.1} parent=43 // pred_check_branch
          %4280 = sbr.rel (%p4278) target = $region48
        $region47: #{custom_diff_model_forward.1} parent=43 // pred_region
          %s4282 = ssub.s32 16, 16
          %4283 = vsyncadd %s4275, %s4282
          %s4284 = smul.addr %s20, 16
          %s4285 = scalar_lea.hbm %s6, %s4284
          %s4287 = sshll.u32 %s4277, 4
          %s4288 = int_to_ptr.vmem [resolvable:$true] %s4287
          %4290 = dma.vmem_to_hbm [thread:$0]  %s4288, 16, %s4285, %s4275
        $region48: #{custom_diff_model_forward.1} parent=43 // pred_fallthru
          _
      $region44: #{custom_diff_model_forward.1} parent=5 // pred_fallthru
        _
      %p4291 = scmp.le.s32.totalorder 2, %s15
      // Predicated region
      $region49: #{custom_diff_model_forward.1} parent=5 // pred_check
        %p4292 = pneg %p4291
      $region50: #{custom_diff_model_forward.1} parent=5 // pred_check_branch
        %4294 = sbr.rel (%p4292) target = $region52
      $region51: #{custom_diff_model_forward.1} parent=5 // pred_region
        %s4295 = ssub.s32 %s15, 2
        // Predicated region
        $region53: #{custom_diff_model_forward.1} parent=51 // pred_check
          %p4296 = pneg %p175
        $region54: #{custom_diff_model_forward.1} parent=51 // pred_check_branch
          %4298 = sbr.rel (%p4296) target = $region56
        $region55: #{custom_diff_model_forward.1} parent=51 // pred_region
          %s4299 = sand.u32 %s160, 1
          %s4300 = scalar_lea.sflag [#allocation4], %s4299
          %s4301 = sand.u32 %s160, 1
          %s4302 = scalar_lea.vmem [#allocation3], %s4301
          %4303 = dma.done %s4300, 16
        $region56: #{custom_diff_model_forward.1} parent=51 // pred_fallthru
          _
      $region52: #{custom_diff_model_forward.1} parent=5 // pred_fallthru
        _
    $region6: #{custom_diff_model_forward.1} parent=1 // loop_footer
      %s19 = sadd.s32 1, %s15
    $region7: #{custom_diff_model_forward.1} parent=1 // loop_footer_branch
      %14 = sbr.rel target = $region3
    $region8: #{custom_diff_model_forward.1} parent=1 // loop_exit
      _
    %4304 = vsyncpa [#allocation4], 1
    %s4305 = scalar_lea.sflag [#allocation4], 1
    %4306 = vsyncpa %s4305, 1

</llo_original>
